<compile_context>
chip_gen: v7x
topology: tpu7x:2x2x1
jax: 0.10.0
libtpu: 0.0.40
codegen_flags: <defaults>
</compile_context>

<pallas_src>
import numpy as np
import jax
import jax.numpy as jnp
from jax import lax
from jax.experimental import pallas as pl
from jax.experimental.pallas import tpu as pltpu

# ----------------------------- module configuration ---------------------------------------
N_HASH_ENCODINGS = 4                      # == dim_conditioning_code for mixing_type='blend'
N_LEVELS = 16                             # TCNNHashEncodingConfig.n_levels
N_FEATURES_PER_LEVEL = 2                  # TCNNHashEncodingConfig.n_features_per_level
BASE_RESOLUTION = 16
PER_LEVEL_SCALE = 1.4472692012786865
LOG2_HASHMAP_SIZE = 10                    # shrunk from 19 so the whole table lives in VMEM (demo)
TABLE_SIZE = 1 << LOG2_HASHMAP_SIZE

N_TOTAL_FEATURES = N_HASH_ENCODINGS * N_FEATURES_PER_LEVEL        # 8
F_ENC = 8 if N_TOTAL_FEATURES >= 8 else N_TOTAL_FEATURES          # features/level of chunked table
assert N_TOTAL_FEATURES <= 8, "demo restricted to a single chunked tcnn table (C == 1)"
P = F_ENC // N_FEATURES_PER_LEVEL                                 # virtual tables per chunk (== 4)
DIM_OUT = N_LEVELS * N_FEATURES_PER_LEVEL                         # 32 (module n_output_dims)

# instant-NGP spatial-hash primes.  int32 multiplies wrap (two's complement) deterministically in
# JAX/XLA/Mosaic and are bit-equal to the uint32 instant-NGP hash; kernel and reference use the
# exact same int32 math so they always agree.
PRIME1 = int(np.int32(np.uint32(2654435761)))
PRIME2 = int(np.int32(np.uint32(805459861)))

# two-level decomposition of the hash index:  idx = hi * N_LO + lo
N_LO = 8
N_HI = TABLE_SIZE // N_LO                                         # 128

TILE_N = 128                              # points per grid step (lane axis); 16 levels per step
                                          # keep ~8us of work, so the ~0.35us step overhead is <5%

# per-level grid scales built by sequential f32 multiplication; the kernel reproduces exactly the
# same f32 product chain in its fori_loop carry, so kernel and reference agree bit-for-bit.
def _level_scales_f32():
    s, v = [], np.float32(BASE_RESOLUTION)
    for _ in range(N_LEVELS):
        s.append(v)
        v = np.float32(v * np.float32(PER_LEVEL_SCALE))
    return s

SCALES_F32 = _level_scales_f32()


# ----------------------------------- Pallas kernel -----------------------------------------
def hash_ensemble_blend_kernel(x_ref, cc_ref, tab_ref, out_ref):
    # x_ref:   (3, TILE_N)                 positions in [0, 1), points on the lane axis
    # cc_ref:  (H, TILE_N)                 conditioning code (blend weights)
    # tab_ref: (L, N_LO*F_ENC, N_HI)       t2t[l, lo*F_ENC + f, hi] = table[l, hi*N_LO + lo, f]
    # out_ref: (L, F, TILE_N)              per-level blended features
    tn = x_ref.shape[1]
    x0 = x_ref[0:1, :]
    x1 = x_ref[1:2, :]
    x2 = x_ref[2:3, :]
    cc = cc_ref[...]                                              # (H, TILE_N)

    # hoisted out of all loops (review: don't rebuild broadcasts per iteration)
    hi_iota = lax.broadcasted_iota(jnp.int32, (N_HI, tn), 0)

    def level_body(l, scale):
        t2t = tab_ref[l]                                          # (N_LO*F_ENC, N_HI) f32

        # --- hoisted per-axis hash terms & interpolation weights (out of the 8-corner loop) ---
        def prep(xc):
            pos = xc * scale
            p0f = jnp.floor(pos)
            return p0f.astype(jnp.int32), pos - p0f               # int corner, frac

        p0x, fx = prep(x0)
        p0y, fy = prep(x1)
        p0z, fz = prep(x2)
        hx = (p0x, p0x + 1)
        hy = (p0y * PRIME1, (p0y + 1) * PRIME1)
        hz = (p0z * PRIME2, (p0z + 1) * PRIME2)
        wx = (1.0 - fx, fx)
        wy = (1.0 - fy, fy)
        wz = (1.0 - fz, fz)
        wyz = [[wy[dy] * wz[dz] for dz in range(2)] for dy in range(2)]

        feats = jnp.zeros((F_ENC, tn), jnp.float32)
        for corner in range(8):
            dx, dy, dz = corner & 1, (corner >> 1) & 1, (corner >> 2) & 1
            h = hx[dx] ^ hy[dy] ^ hz[dz]                          # (1, tn) int32
            idx = jnp.bitwise_and(h, TABLE_SIZE - 1)
            hi = jnp.right_shift(idx, 3)                          # row-group index in [0, N_HI)
            lo = jnp.bitwise_and(idx, N_LO - 1)                   # row inside the group
            w = wx[dx] * wyz[dy][dz]                              # trilinear corner weight

            # Exact {0,1} one-hot over the 128 row groups -> gather the whole 8-row group on the
            # MXU with ONE small matmul (K = 128) at DEFAULT precision.  0/1 and the bf16-exact
            # table values make the result exactly the gathered rows.
            oh = jnp.where(hi_iota == hi, 1.0, 0.0)               # (N_HI, tn) f32
            grp = jnp.dot(t2t, oh, preferred_element_type=jnp.float32)   # (N_LO*F_ENC, tn)

            # Select the row inside the group (exact f32 on the VPU), then weight & accumulate.
            sel = jnp.zeros((F_ENC, tn), jnp.float32)
            for lo_v in range(N_LO):
                sel = sel + jnp.where(lo == lo_v, 1.0, 0.0) * \
                            grp[lo_v * F_ENC:(lo_v + 1) * F_ENC, :]
            feats = feats + w * sel

        # blend (== einsum('bdh,bh->bd') after 'b c (l p f) -> b (l f) (c p)'):
        # out[l, f, b] = sum_p feats[p*F + f, b] * cc[p, b]
        blend = jnp.zeros((N_FEATURES_PER_LEVEL, tn), jnp.float32)
        for p in range(P):
            blend = blend + cc[p:p + 1, :] * \
                            feats[p * N_FEATURES_PER_LEVEL:(p + 1) * N_FEATURES_PER_LEVEL, :]
        out_ref[l] = blend                                        # direct per-level store

        return scale * np.float32(PER_LEVEL_SCALE)                # carry next level's scale (f32)

    lax.fori_loop(0, N_LEVELS, level_body, jnp.float32(BASE_RESOLUTION))


def hash_encoding_ensemble_blend(x, conditioning_code, hash_table):
    n = x.shape[0]
    assert n % TILE_N == 0
    # lane-dense "structure of arrays" layouts for the kernel
    xT = x.T                                                      # (3, N)
    ccT = conditioning_code.T                                     # (H, N)
    # table[l, hi*N_LO + lo, f]  ->  t2t[l, lo*F_ENC + f, hi]
    tabT = hash_table.reshape(N_LEVELS, N_HI, N_LO, F_ENC)
    tabT = tabT.transpose(0, 2, 3, 1).reshape(N_LEVELS, N_LO * F_ENC, N_HI)

    out = pl.pallas_call(
        hash_ensemble_blend_kernel,
        out_shape=jax.ShapeDtypeStruct((N_LEVELS, N_FEATURES_PER_LEVEL, n), jnp.float32),
        grid=(n // TILE_N,),
        in_specs=[
            pl.BlockSpec((3, TILE_N), lambda i: (0, i)),
            pl.BlockSpec((N_HASH_ENCODINGS, TILE_N), lambda i: (0, i)),
            pl.BlockSpec((N_LEVELS, N_LO * F_ENC, N_HI), lambda i: (0, 0, 0)),   # table resident
        ],
        out_specs=pl.BlockSpec((N_LEVELS, N_FEATURES_PER_LEVEL, TILE_N), lambda i: (0, 0, i)),
        compiler_params=pltpu.CompilerParams(dimension_semantics=("parallel",)),
    )(xT, ccT, tabT)

    # (L, F, N) -> (N, L*F) with d = l*F + f  (level-major, matches the torch module's output)
    return out.transpose(2, 0, 1).reshape(n, DIM_OUT)


# --------------------------- pure-JAX reference (mirrors torch forward) --------------------
def _hashgrid_encode_ref(x, table):
    outs = []
    for l in range(N_LEVELS):
        scale = SCALES_F32[l]
        pos = x * scale
        pos0 = jnp.floor(pos)
        frac = pos - pos0
        p0 = pos0.astype(jnp.int32)
        acc = jnp.zeros((x.shape[0], F_ENC), jnp.float32)
        for corner in range(8):
            dx, dy, dz = corner & 1, (corner >> 1) & 1, (corner >> 2) & 1
            cx = p0[:, 0] + dx
            cy = p0[:, 1] + dy
            cz = p0[:, 2] + dz
            h = cx ^ (cy * PRIME1) ^ (cz * PRIME2)
            idx = jnp.bitwise_and(h, TABLE_SIZE - 1)
            wx = frac[:, 0] if dx else (1.0 - frac[:, 0])
            wy = frac[:, 1] if dy else (1.0 - frac[:, 1])
            wz = frac[:, 2] if dz else (1.0 - frac[:, 2])
            w = wx * (wy * wz)
            acc = acc + w[:, None] * table[l][idx]
        outs.append(acc)
    return jnp.concatenate(outs, axis=-1)                         # (N, L*F_ENC), level-major


def forward_ref(x, cc, table):
    B = x.shape[0]
    emb = _hashgrid_encode_ref(x, table)[:, None, :]              # stack dim=1, C = 1
    C = emb.shape[1]
    # einops 'b c (l p f) -> b (l f) (c p)'
    emb = emb.reshape(B, C, N_LEVELS, P, N_FEATURES_PER_LEVEL)
    emb = emb.transpose(0, 2, 4, 1, 3).reshape(B, N_LEVELS * N_FEATURES_PER_LEVEL, C * P)
    # einsum('bdh,bh->bd') done elementwise in f32
    return (emb * cc[:, None, :]).sum(-1)


# --------------------------------------- demo ----------------------------------------------
if __name__ == "__main__":
    key = jax.random.PRNGKey(0)
    kx, kc, kt = jax.random.split(key, 3)

    N = 512                                   # 4 grid steps of TILE_N=128 (>=2 -> v7x megacore)
    x = jax.random.uniform(kx, (N, 3), jnp.float32)                               # points in [0,1)
    conditioning_code = jax.random.normal(kc, (N, N_HASH_ENCODINGS), jnp.float32)
    # hash-table "parameters", quantized to bf16-representable values (tcnn stores fp16 params);
    # this makes the default-precision MXU one-hot gather exact w.r.t. the f32 reference.
    hash_table = jax.random.uniform(kt, (N_LEVELS, TABLE_SIZE, F_ENC), jnp.float32, -0.1, 0.1)
    hash_table = hash_table.astype(jnp.bfloat16).astype(jnp.float32)

    out = hash_encoding_ensemble_blend(x, conditioning_code, hash_table)
    out = jax.block_until_ready(out)
    assert out.shape == (N, DIM_OUT) and out.dtype == jnp.float32

    ref = forward_ref(x, conditioning_code, hash_table)
    np.testing.assert_allclose(np.asarray(out), np.asarray(ref), rtol=1e-4, atol=1e-5)

    print("KERNEL_OK")
</pallas_src>

<mosaic_0001>
module attributes {stable_mosaic.version = 11 : i64} {
  func.func @hash_ensemble_blend_kernel(%arg0: i32, %arg1: memref<3x128xf32, #tpu.memory_space<vmem>>, %arg2: memref<4x128xf32, #tpu.memory_space<vmem>>, %arg3: memref<16x64x128xf32, #tpu.memory_space<vmem>>, %arg4: memref<16x2x128xf32, #tpu.memory_space<vmem>>) attributes {dimension_semantics = [#tpu.dimension_semantics<parallel>], iteration_bounds = array<i64: 4>, scalar_prefetch = 0 : i64, scratch_operands = 0 : i64, tpu.core_type = #tpu.core_type<tc>, window_params = [{transform_indices = @transform_0, window_bounds = array<i64: 3, 128>}, {transform_indices = @transform_1, window_bounds = array<i64: 4, 128>}, {pipeline_mode = #tpu.pipeline_mode<synchronous>, transform_indices = @transform_2, window_bounds = array<i64: 16, 64, 128>}, {transform_indices = @transform_3, window_bounds = array<i64: 16, 2, 128>}]} {
    %c0 = arith.constant 0 : index
    %c0_0 = arith.constant 0 : index
    %0 = vector.load %arg1[%c0, %c0_0] : memref<3x128xf32, #tpu.memory_space<vmem>>, vector<1x128xf32>
    %c1 = arith.constant 1 : index
    %c0_1 = arith.constant 0 : index
    %1 = vector.load %arg1[%c1, %c0_1] : memref<3x128xf32, #tpu.memory_space<vmem>>, vector<1x128xf32>
    %c2 = arith.constant 2 : index
    %c0_2 = arith.constant 0 : index
    %2 = vector.load %arg1[%c2, %c0_2] : memref<3x128xf32, #tpu.memory_space<vmem>>, vector<1x128xf32>
    %c0_3 = arith.constant 0 : index
    %c0_4 = arith.constant 0 : index
    %3 = vector.load %arg2[%c0_3, %c0_4] : memref<4x128xf32, #tpu.memory_space<vmem>>, vector<4x128xf32>
    %4 = tpu.iota {dimensions = array<i32: 0>} : vector<128x128xi32>
    %cst = arith.constant 1.600000e+01 : f32
    %c0_i32 = arith.constant 0 : i32
    %c16_i32 = arith.constant 16 : i32
    %5 = arith.addi %c0_i32, %c16_i32 : i32
    %c1_i32 = arith.constant 1 : i32
    %6 = scf.for %arg5 = %c0_i32 to %5 step %c1_i32 iter_args(%arg6 = %cst) -> (f32)  : i32 {
      %7 = arith.index_cast %arg5 : i32 to index
      %c0_6 = arith.constant 0 : index
      %c0_7 = arith.constant 0 : index
      %8 = vector.load %arg3[%7, %c0_6, %c0_7] : memref<16x64x128xf32, #tpu.memory_space<vmem>>, vector<1x64x128xf32>
      %9 = vector.shape_cast %8 : vector<1x64x128xf32> to vector<64x128xf32>
      %10 = vector.broadcast %arg6 : f32 to vector<1x128xf32>
      %11 = arith.mulf %0, %10 : vector<1x128xf32>
      %12 = math.floor %11 : vector<1x128xf32>
      %13 = arith.fptosi %12 : vector<1x128xf32> to vector<1x128xi32>
      %14 = arith.subf %11, %12 : vector<1x128xf32>
      %15 = vector.broadcast %arg6 : f32 to vector<1x128xf32>
      %16 = arith.mulf %1, %15 : vector<1x128xf32>
      %17 = math.floor %16 : vector<1x128xf32>
      %18 = arith.fptosi %17 : vector<1x128xf32> to vector<1x128xi32>
      %19 = arith.subf %16, %17 : vector<1x128xf32>
      %20 = vector.broadcast %arg6 : f32 to vector<1x128xf32>
      %21 = arith.mulf %2, %20 : vector<1x128xf32>
      %22 = math.floor %21 : vector<1x128xf32>
      %23 = arith.fptosi %22 : vector<1x128xf32> to vector<1x128xi32>
      %24 = arith.subf %21, %22 : vector<1x128xf32>
      %c1_i32_8 = arith.constant 1 : i32
      %25 = vector.broadcast %c1_i32_8 : i32 to vector<1x128xi32>
      %26 = arith.addi %13, %25 : vector<1x128xi32>
      %c-1640531535_i32 = arith.constant -1640531535 : i32
      %27 = vector.broadcast %c-1640531535_i32 : i32 to vector<1x128xi32>
      %28 = arith.muli %18, %27 : vector<1x128xi32>
      %c1_i32_9 = arith.constant 1 : i32
      %29 = vector.broadcast %c1_i32_9 : i32 to vector<1x128xi32>
      %30 = arith.addi %18, %29 : vector<1x128xi32>
      %c-1640531535_i32_10 = arith.constant -1640531535 : i32
      %31 = vector.broadcast %c-1640531535_i32_10 : i32 to vector<1x128xi32>
      %32 = arith.muli %30, %31 : vector<1x128xi32>
      %c805459861_i32 = arith.constant 805459861 : i32
      %33 = vector.broadcast %c805459861_i32 : i32 to vector<1x128xi32>
      %34 = arith.muli %23, %33 : vector<1x128xi32>
      %c1_i32_11 = arith.constant 1 : i32
      %35 = vector.broadcast %c1_i32_11 : i32 to vector<1x128xi32>
      %36 = arith.addi %23, %35 : vector<1x128xi32>
      %c805459861_i32_12 = arith.constant 805459861 : i32
      %37 = vector.broadcast %c805459861_i32_12 : i32 to vector<1x128xi32>
      %38 = arith.muli %36, %37 : vector<1x128xi32>
      %cst_13 = arith.constant 1.000000e+00 : f32
      %39 = vector.broadcast %cst_13 : f32 to vector<1x128xf32>
      %40 = arith.subf %39, %14 : vector<1x128xf32>
      %cst_14 = arith.constant 1.000000e+00 : f32
      %41 = vector.broadcast %cst_14 : f32 to vector<1x128xf32>
      %42 = arith.subf %41, %19 : vector<1x128xf32>
      %cst_15 = arith.constant 1.000000e+00 : f32
      %43 = vector.broadcast %cst_15 : f32 to vector<1x128xf32>
      %44 = arith.subf %43, %24 : vector<1x128xf32>
      %45 = arith.mulf %42, %44 : vector<1x128xf32>
      %46 = arith.mulf %42, %24 : vector<1x128xf32>
      %47 = arith.mulf %19, %44 : vector<1x128xf32>
      %48 = arith.mulf %19, %24 : vector<1x128xf32>
      %cst_16 = arith.constant 0.000000e+00 : f32
      %49 = vector.broadcast %cst_16 : f32 to vector<8x128xf32>
      %50 = arith.xori %13, %28 : vector<1x128xi32>
      %51 = arith.xori %50, %34 : vector<1x128xi32>
      %c1023_i32 = arith.constant 1023 : i32
      %52 = vector.broadcast %c1023_i32 : i32 to vector<1x128xi32>
      %53 = arith.andi %51, %52 : vector<1x128xi32>
      %c3_i32 = arith.constant 3 : i32
      %54 = vector.broadcast %c3_i32 : i32 to vector<1x128xi32>
      %55 = arith.shrsi %53, %54 : vector<1x128xi32>
      %c7_i32 = arith.constant 7 : i32
      %56 = vector.broadcast %c7_i32 : i32 to vector<1x128xi32>
      %57 = arith.andi %53, %56 : vector<1x128xi32>
      %58 = arith.mulf %40, %45 : vector<1x128xf32>
      %59 = vector.broadcast %55 : vector<1x128xi32> to vector<128x128xi32>
      %60 = arith.cmpi eq, %4, %59 : vector<128x128xi32>
      %cst_17 = arith.constant 1.000000e+00 : f32
      %cst_18 = arith.constant 0.000000e+00 : f32
      %61 = vector.broadcast %cst_17 : f32 to vector<128x128xf32>
      %62 = vector.broadcast %cst_18 : f32 to vector<128x128xf32>
      %63 = arith.select %60, %61, %62 : vector<128x128xi1>, vector<128x128xf32>
      %cst_19 = arith.constant dense<0.000000e+00> : vector<64x128xf32>
      %64 = tpu.matmul %9, %63, %cst_19 {dimension_numbers = #tpu.dot_dimension_numbers<[1], [0], [0], [1], [0, 0, 1, 1], [], []>} : vector<64x128xf32>, vector<128x128xf32>, vector<64x128xf32> -> vector<64x128xf32>
      %cst_20 = arith.constant 0.000000e+00 : f32
      %65 = vector.broadcast %cst_20 : f32 to vector<8x128xf32>
      %c0_i32_21 = arith.constant 0 : i32
      %66 = vector.broadcast %c0_i32_21 : i32 to vector<1x128xi32>
      %67 = arith.cmpi eq, %57, %66 : vector<1x128xi32>
      %cst_22 = arith.constant 1.000000e+00 : f32
      %cst_23 = arith.constant 0.000000e+00 : f32
      %68 = vector.broadcast %cst_22 : f32 to vector<1x128xf32>
      %69 = vector.broadcast %cst_23 : f32 to vector<1x128xf32>
      %70 = arith.select %67, %68, %69 : vector<1x128xi1>, vector<1x128xf32>
      %71 = vector.extract_strided_slice %64 {offsets = [0, 0], sizes = [8, 128], strides = [1, 1]} : vector<64x128xf32> to vector<8x128xf32>
      %72 = vector.broadcast %70 : vector<1x128xf32> to vector<8x128xf32>
      %73 = arith.mulf %72, %71 : vector<8x128xf32>
      %74 = arith.addf %65, %73 : vector<8x128xf32>
      %c1_i32_24 = arith.constant 1 : i32
      %75 = vector.broadcast %c1_i32_24 : i32 to vector<1x128xi32>
      %76 = arith.cmpi eq, %57, %75 : vector<1x128xi32>
      %cst_25 = arith.constant 1.000000e+00 : f32
      %cst_26 = arith.constant 0.000000e+00 : f32
      %77 = vector.broadcast %cst_25 : f32 to vector<1x128xf32>
      %78 = vector.broadcast %cst_26 : f32 to vector<1x128xf32>
      %79 = arith.select %76, %77, %78 : vector<1x128xi1>, vector<1x128xf32>
      %80 = vector.extract_strided_slice %64 {offsets = [8, 0], sizes = [8, 128], strides = [1, 1]} : vector<64x128xf32> to vector<8x128xf32>
      %81 = vector.broadcast %79 : vector<1x128xf32> to vector<8x128xf32>
      %82 = arith.mulf %81, %80 : vector<8x128xf32>
      %83 = arith.addf %74, %82 : vector<8x128xf32>
      %c2_i32 = arith.constant 2 : i32
      %84 = vector.broadcast %c2_i32 : i32 to vector<1x128xi32>
      %85 = arith.cmpi eq, %57, %84 : vector<1x128xi32>
      %cst_27 = arith.constant 1.000000e+00 : f32
      %cst_28 = arith.constant 0.000000e+00 : f32
      %86 = vector.broadcast %cst_27 : f32 to vector<1x128xf32>
      %87 = vector.broadcast %cst_28 : f32 to vector<1x128xf32>
      %88 = arith.select %85, %86, %87 : vector<1x128xi1>, vector<1x128xf32>
      %89 = vector.extract_strided_slice %64 {offsets = [16, 0], sizes = [8, 128], strides = [1, 1]} : vector<64x128xf32> to vector<8x128xf32>
      %90 = vector.broadcast %88 : vector<1x128xf32> to vector<8x128xf32>
      %91 = arith.mulf %90, %89 : vector<8x128xf32>
      %92 = arith.addf %83, %91 : vector<8x128xf32>
      %c3_i32_29 = arith.constant 3 : i32
      %93 = vector.broadcast %c3_i32_29 : i32 to vector<1x128xi32>
      %94 = arith.cmpi eq, %57, %93 : vector<1x128xi32>
      %cst_30 = arith.constant 1.000000e+00 : f32
      %cst_31 = arith.constant 0.000000e+00 : f32
      %95 = vector.broadcast %cst_30 : f32 to vector<1x128xf32>
      %96 = vector.broadcast %cst_31 : f32 to vector<1x128xf32>
      %97 = arith.select %94, %95, %96 : vector<1x128xi1>, vector<1x128xf32>
      %98 = vector.extract_strided_slice %64 {offsets = [24, 0], sizes = [8, 128], strides = [1, 1]} : vector<64x128xf32> to vector<8x128xf32>
      %99 = vector.broadcast %97 : vector<1x128xf32> to vector<8x128xf32>
      %100 = arith.mulf %99, %98 : vector<8x128xf32>
      %101 = arith.addf %92, %100 : vector<8x128xf32>
      %c4_i32 = arith.constant 4 : i32
      %102 = vector.broadcast %c4_i32 : i32 to vector<1x128xi32>
      %103 = arith.cmpi eq, %57, %102 : vector<1x128xi32>
      %cst_32 = arith.constant 1.000000e+00 : f32
      %cst_33 = arith.constant 0.000000e+00 : f32
      %104 = vector.broadcast %cst_32 : f32 to vector<1x128xf32>
      %105 = vector.broadcast %cst_33 : f32 to vector<1x128xf32>
      %106 = arith.select %103, %104, %105 : vector<1x128xi1>, vector<1x128xf32>
      %107 = vector.extract_strided_slice %64 {offsets = [32, 0], sizes = [8, 128], strides = [1, 1]} : vector<64x128xf32> to vector<8x128xf32>
      %108 = vector.broadcast %106 : vector<1x128xf32> to vector<8x128xf32>
      %109 = arith.mulf %108, %107 : vector<8x128xf32>
      %110 = arith.addf %101, %109 : vector<8x128xf32>
      %c5_i32 = arith.constant 5 : i32
      %111 = vector.broadcast %c5_i32 : i32 to vector<1x128xi32>
      %112 = arith.cmpi eq, %57, %111 : vector<1x128xi32>
      %cst_34 = arith.constant 1.000000e+00 : f32
      %cst_35 = arith.constant 0.000000e+00 : f32
      %113 = vector.broadcast %cst_34 : f32 to vector<1x128xf32>
      %114 = vector.broadcast %cst_35 : f32 to vector<1x128xf32>
      %115 = arith.select %112, %113, %114 : vector<1x128xi1>, vector<1x128xf32>
      %116 = vector.extract_strided_slice %64 {offsets = [40, 0], sizes = [8, 128], strides = [1, 1]} : vector<64x128xf32> to vector<8x128xf32>
      %117 = vector.broadcast %115 : vector<1x128xf32> to vector<8x128xf32>
      %118 = arith.mulf %117, %116 : vector<8x128xf32>
      %119 = arith.addf %110, %118 : vector<8x128xf32>
      %c6_i32 = arith.constant 6 : i32
      %120 = vector.broadcast %c6_i32 : i32 to vector<1x128xi32>
      %121 = arith.cmpi eq, %57, %120 : vector<1x128xi32>
      %cst_36 = arith.constant 1.000000e+00 : f32
      %cst_37 = arith.constant 0.000000e+00 : f32
      %122 = vector.broadcast %cst_36 : f32 to vector<1x128xf32>
      %123 = vector.broadcast %cst_37 : f32 to vector<1x128xf32>
      %124 = arith.select %121, %122, %123 : vector<1x128xi1>, vector<1x128xf32>
      %125 = vector.extract_strided_slice %64 {offsets = [48, 0], sizes = [8, 128], strides = [1, 1]} : vector<64x128xf32> to vector<8x128xf32>
      %126 = vector.broadcast %124 : vector<1x128xf32> to vector<8x128xf32>
      %127 = arith.mulf %126, %125 : vector<8x128xf32>
      %128 = arith.addf %119, %127 : vector<8x128xf32>
      %c7_i32_38 = arith.constant 7 : i32
      %129 = vector.broadcast %c7_i32_38 : i32 to vector<1x128xi32>
      %130 = arith.cmpi eq, %57, %129 : vector<1x128xi32>
      %cst_39 = arith.constant 1.000000e+00 : f32
      %cst_40 = arith.constant 0.000000e+00 : f32
      %131 = vector.broadcast %cst_39 : f32 to vector<1x128xf32>
      %132 = vector.broadcast %cst_40 : f32 to vector<1x128xf32>
      %133 = arith.select %130, %131, %132 : vector<1x128xi1>, vector<1x128xf32>
      %134 = vector.extract_strided_slice %64 {offsets = [56, 0], sizes = [8, 128], strides = [1, 1]} : vector<64x128xf32> to vector<8x128xf32>
      %135 = vector.broadcast %133 : vector<1x128xf32> to vector<8x128xf32>
      %136 = arith.mulf %135, %134 : vector<8x128xf32>
      %137 = arith.addf %128, %136 : vector<8x128xf32>
      %138 = vector.broadcast %58 : vector<1x128xf32> to vector<8x128xf32>
      %139 = arith.mulf %138, %137 : vector<8x128xf32>
      %140 = arith.addf %49, %139 : vector<8x128xf32>
      %141 = arith.xori %26, %28 : vector<1x128xi32>
      %142 = arith.xori %141, %34 : vector<1x128xi32>
      %c1023_i32_41 = arith.constant 1023 : i32
      %143 = vector.broadcast %c1023_i32_41 : i32 to vector<1x128xi32>
      %144 = arith.andi %142, %143 : vector<1x128xi32>
      %c3_i32_42 = arith.constant 3 : i32
      %145 = vector.broadcast %c3_i32_42 : i32 to vector<1x128xi32>
      %146 = arith.shrsi %144, %145 : vector<1x128xi32>
      %c7_i32_43 = arith.constant 7 : i32
      %147 = vector.broadcast %c7_i32_43 : i32 to vector<1x128xi32>
      %148 = arith.andi %144, %147 : vector<1x128xi32>
      %149 = arith.mulf %14, %45 : vector<1x128xf32>
      %150 = vector.broadcast %146 : vector<1x128xi32> to vector<128x128xi32>
      %151 = arith.cmpi eq, %4, %150 : vector<128x128xi32>
      %cst_44 = arith.constant 1.000000e+00 : f32
      %cst_45 = arith.constant 0.000000e+00 : f32
      %152 = vector.broadcast %cst_44 : f32 to vector<128x128xf32>
      %153 = vector.broadcast %cst_45 : f32 to vector<128x128xf32>
      %154 = arith.select %151, %152, %153 : vector<128x128xi1>, vector<128x128xf32>
      %cst_46 = arith.constant dense<0.000000e+00> : vector<64x128xf32>
      %155 = tpu.matmul %9, %154, %cst_46 {dimension_numbers = #tpu.dot_dimension_numbers<[1], [0], [0], [1], [0, 0, 1, 1], [], []>} : vector<64x128xf32>, vector<128x128xf32>, vector<64x128xf32> -> vector<64x128xf32>
      %cst_47 = arith.constant 0.000000e+00 : f32
      %156 = vector.broadcast %cst_47 : f32 to vector<8x128xf32>
      %c0_i32_48 = arith.constant 0 : i32
      %157 = vector.broadcast %c0_i32_48 : i32 to vector<1x128xi32>
      %158 = arith.cmpi eq, %148, %157 : vector<1x128xi32>
      %cst_49 = arith.constant 1.000000e+00 : f32
      %cst_50 = arith.constant 0.000000e+00 : f32
      %159 = vector.broadcast %cst_49 : f32 to vector<1x128xf32>
      %160 = vector.broadcast %cst_50 : f32 to vector<1x128xf32>
      %161 = arith.select %158, %159, %160 : vector<1x128xi1>, vector<1x128xf32>
      %162 = vector.extract_strided_slice %155 {offsets = [0, 0], sizes = [8, 128], strides = [1, 1]} : vector<64x128xf32> to vector<8x128xf32>
      %163 = vector.broadcast %161 : vector<1x128xf32> to vector<8x128xf32>
      %164 = arith.mulf %163, %162 : vector<8x128xf32>
      %165 = arith.addf %156, %164 : vector<8x128xf32>
      %c1_i32_51 = arith.constant 1 : i32
      %166 = vector.broadcast %c1_i32_51 : i32 to vector<1x128xi32>
      %167 = arith.cmpi eq, %148, %166 : vector<1x128xi32>
      %cst_52 = arith.constant 1.000000e+00 : f32
      %cst_53 = arith.constant 0.000000e+00 : f32
      %168 = vector.broadcast %cst_52 : f32 to vector<1x128xf32>
      %169 = vector.broadcast %cst_53 : f32 to vector<1x128xf32>
      %170 = arith.select %167, %168, %169 : vector<1x128xi1>, vector<1x128xf32>
      %171 = vector.extract_strided_slice %155 {offsets = [8, 0], sizes = [8, 128], strides = [1, 1]} : vector<64x128xf32> to vector<8x128xf32>
      %172 = vector.broadcast %170 : vector<1x128xf32> to vector<8x128xf32>
      %173 = arith.mulf %172, %171 : vector<8x128xf32>
      %174 = arith.addf %165, %173 : vector<8x128xf32>
      %c2_i32_54 = arith.constant 2 : i32
      %175 = vector.broadcast %c2_i32_54 : i32 to vector<1x128xi32>
      %176 = arith.cmpi eq, %148, %175 : vector<1x128xi32>
      %cst_55 = arith.constant 1.000000e+00 : f32
      %cst_56 = arith.constant 0.000000e+00 : f32
      %177 = vector.broadcast %cst_55 : f32 to vector<1x128xf32>
      %178 = vector.broadcast %cst_56 : f32 to vector<1x128xf32>
      %179 = arith.select %176, %177, %178 : vector<1x128xi1>, vector<1x128xf32>
      %180 = vector.extract_strided_slice %155 {offsets = [16, 0], sizes = [8, 128], strides = [1, 1]} : vector<64x128xf32> to vector<8x128xf32>
      %181 = vector.broadcast %179 : vector<1x128xf32> to vector<8x128xf32>
      %182 = arith.mulf %181, %180 : vector<8x128xf32>
      %183 = arith.addf %174, %182 : vector<8x128xf32>
      %c3_i32_57 = arith.constant 3 : i32
      %184 = vector.broadcast %c3_i32_57 : i32 to vector<1x128xi32>
      %185 = arith.cmpi eq, %148, %184 : vector<1x128xi32>
      %cst_58 = arith.constant 1.000000e+00 : f32
      %cst_59 = arith.constant 0.000000e+00 : f32
      %186 = vector.broadcast %cst_58 : f32 to vector<1x128xf32>
      %187 = vector.broadcast %cst_59 : f32 to vector<1x128xf32>
      %188 = arith.select %185, %186, %187 : vector<1x128xi1>, vector<1x128xf32>
      %189 = vector.extract_strided_slice %155 {offsets = [24, 0], sizes = [8, 128], strides = [1, 1]} : vector<64x128xf32> to vector<8x128xf32>
      %190 = vector.broadcast %188 : vector<1x128xf32> to vector<8x128xf32>
      %191 = arith.mulf %190, %189 : vector<8x128xf32>
      %192 = arith.addf %183, %191 : vector<8x128xf32>
      %c4_i32_60 = arith.constant 4 : i32
      %193 = vector.broadcast %c4_i32_60 : i32 to vector<1x128xi32>
      %194 = arith.cmpi eq, %148, %193 : vector<1x128xi32>
      %cst_61 = arith.constant 1.000000e+00 : f32
      %cst_62 = arith.constant 0.000000e+00 : f32
      %195 = vector.broadcast %cst_61 : f32 to vector<1x128xf32>
      %196 = vector.broadcast %cst_62 : f32 to vector<1x128xf32>
      %197 = arith.select %194, %195, %196 : vector<1x128xi1>, vector<1x128xf32>
      %198 = vector.extract_strided_slice %155 {offsets = [32, 0], sizes = [8, 128], strides = [1, 1]} : vector<64x128xf32> to vector<8x128xf32>
      %199 = vector.broadcast %197 : vector<1x128xf32> to vector<8x128xf32>
      %200 = arith.mulf %199, %198 : vector<8x128xf32>
      %201 = arith.addf %192, %200 : vector<8x128xf32>
      %c5_i32_63 = arith.constant 5 : i32
      %202 = vector.broadcast %c5_i32_63 : i32 to vector<1x128xi32>
      %203 = arith.cmpi eq, %148, %202 : vector<1x128xi32>
      %cst_64 = arith.constant 1.000000e+00 : f32
      %cst_65 = arith.constant 0.000000e+00 : f32
      %204 = vector.broadcast %cst_64 : f32 to vector<1x128xf32>
      %205 = vector.broadcast %cst_65 : f32 to vector<1x128xf32>
      %206 = arith.select %203, %204, %205 : vector<1x128xi1>, vector<1x128xf32>
      %207 = vector.extract_strided_slice %155 {offsets = [40, 0], sizes = [8, 128], strides = [1, 1]} : vector<64x128xf32> to vector<8x128xf32>
      %208 = vector.broadcast %206 : vector<1x128xf32> to vector<8x128xf32>
      %209 = arith.mulf %208, %207 : vector<8x128xf32>
      %210 = arith.addf %201, %209 : vector<8x128xf32>
      %c6_i32_66 = arith.constant 6 : i32
      %211 = vector.broadcast %c6_i32_66 : i32 to vector<1x128xi32>
      %212 = arith.cmpi eq, %148, %211 : vector<1x128xi32>
      %cst_67 = arith.constant 1.000000e+00 : f32
      %cst_68 = arith.constant 0.000000e+00 : f32
      %213 = vector.broadcast %cst_67 : f32 to vector<1x128xf32>
      %214 = vector.broadcast %cst_68 : f32 to vector<1x128xf32>
      %215 = arith.select %212, %213, %214 : vector<1x128xi1>, vector<1x128xf32>
      %216 = vector.extract_strided_slice %155 {offsets = [48, 0], sizes = [8, 128], strides = [1, 1]} : vector<64x128xf32> to vector<8x128xf32>
      %217 = vector.broadcast %215 : vector<1x128xf32> to vector<8x128xf32>
      %218 = arith.mulf %217, %216 : vector<8x128xf32>
      %219 = arith.addf %210, %218 : vector<8x128xf32>
      %c7_i32_69 = arith.constant 7 : i32
      %220 = vector.broadcast %c7_i32_69 : i32 to vector<1x128xi32>
      %221 = arith.cmpi eq, %148, %220 : vector<1x128xi32>
      %cst_70 = arith.constant 1.000000e+00 : f32
      %cst_71 = arith.constant 0.000000e+00 : f32
      %222 = vector.broadcast %cst_70 : f32 to vector<1x128xf32>
      %223 = vector.broadcast %cst_71 : f32 to vector<1x128xf32>
      %224 = arith.select %221, %222, %223 : vector<1x128xi1>, vector<1x128xf32>
      %225 = vector.extract_strided_slice %155 {offsets = [56, 0], sizes = [8, 128], strides = [1, 1]} : vector<64x128xf32> to vector<8x128xf32>
      %226 = vector.broadcast %224 : vector<1x128xf32> to vector<8x128xf32>
      %227 = arith.mulf %226, %225 : vector<8x128xf32>
      %228 = arith.addf %219, %227 : vector<8x128xf32>
      %229 = vector.broadcast %149 : vector<1x128xf32> to vector<8x128xf32>
      %230 = arith.mulf %229, %228 : vector<8x128xf32>
      %231 = arith.addf %140, %230 : vector<8x128xf32>
      %232 = arith.xori %13, %32 : vector<1x128xi32>
      %233 = arith.xori %232, %34 : vector<1x128xi32>
      %c1023_i32_72 = arith.constant 1023 : i32
      %234 = vector.broadcast %c1023_i32_72 : i32 to vector<1x128xi32>
      %235 = arith.andi %233, %234 : vector<1x128xi32>
      %c3_i32_73 = arith.constant 3 : i32
      %236 = vector.broadcast %c3_i32_73 : i32 to vector<1x128xi32>
      %237 = arith.shrsi %235, %236 : vector<1x128xi32>
      %c7_i32_74 = arith.constant 7 : i32
      %238 = vector.broadcast %c7_i32_74 : i32 to vector<1x128xi32>
      %239 = arith.andi %235, %238 : vector<1x128xi32>
      %240 = arith.mulf %40, %47 : vector<1x128xf32>
      %241 = vector.broadcast %237 : vector<1x128xi32> to vector<128x128xi32>
      %242 = arith.cmpi eq, %4, %241 : vector<128x128xi32>
      %cst_75 = arith.constant 1.000000e+00 : f32
      %cst_76 = arith.constant 0.000000e+00 : f32
      %243 = vector.broadcast %cst_75 : f32 to vector<128x128xf32>
      %244 = vector.broadcast %cst_76 : f32 to vector<128x128xf32>
      %245 = arith.select %242, %243, %244 : vector<128x128xi1>, vector<128x128xf32>
      %cst_77 = arith.constant dense<0.000000e+00> : vector<64x128xf32>
      %246 = tpu.matmul %9, %245, %cst_77 {dimension_numbers = #tpu.dot_dimension_numbers<[1], [0], [0], [1], [0, 0, 1, 1], [], []>} : vector<64x128xf32>, vector<128x128xf32>, vector<64x128xf32> -> vector<64x128xf32>
      %cst_78 = arith.constant 0.000000e+00 : f32
      %247 = vector.broadcast %cst_78 : f32 to vector<8x128xf32>
      %c0_i32_79 = arith.constant 0 : i32
      %248 = vector.broadcast %c0_i32_79 : i32 to vector<1x128xi32>
      %249 = arith.cmpi eq, %239, %248 : vector<1x128xi32>
      %cst_80 = arith.constant 1.000000e+00 : f32
      %cst_81 = arith.constant 0.000000e+00 : f32
      %250 = vector.broadcast %cst_80 : f32 to vector<1x128xf32>
      %251 = vector.broadcast %cst_81 : f32 to vector<1x128xf32>
      %252 = arith.select %249, %250, %251 : vector<1x128xi1>, vector<1x128xf32>
      %253 = vector.extract_strided_slice %246 {offsets = [0, 0], sizes = [8, 128], strides = [1, 1]} : vector<64x128xf32> to vector<8x128xf32>
      %254 = vector.broadcast %252 : vector<1x128xf32> to vector<8x128xf32>
      %255 = arith.mulf %254, %253 : vector<8x128xf32>
      %256 = arith.addf %247, %255 : vector<8x128xf32>
      %c1_i32_82 = arith.constant 1 : i32
      %257 = vector.broadcast %c1_i32_82 : i32 to vector<1x128xi32>
      %258 = arith.cmpi eq, %239, %257 : vector<1x128xi32>
      %cst_83 = arith.constant 1.000000e+00 : f32
      %cst_84 = arith.constant 0.000000e+00 : f32
      %259 = vector.broadcast %cst_83 : f32 to vector<1x128xf32>
      %260 = vector.broadcast %cst_84 : f32 to vector<1x128xf32>
      %261 = arith.select %258, %259, %260 : vector<1x128xi1>, vector<1x128xf32>
      %262 = vector.extract_strided_slice %246 {offsets = [8, 0], sizes = [8, 128], strides = [1, 1]} : vector<64x128xf32> to vector<8x128xf32>
      %263 = vector.broadcast %261 : vector<1x128xf32> to vector<8x128xf32>
      %264 = arith.mulf %263, %262 : vector<8x128xf32>
      %265 = arith.addf %256, %264 : vector<8x128xf32>
      %c2_i32_85 = arith.constant 2 : i32
      %266 = vector.broadcast %c2_i32_85 : i32 to vector<1x128xi32>
      %267 = arith.cmpi eq, %239, %266 : vector<1x128xi32>
      %cst_86 = arith.constant 1.000000e+00 : f32
      %cst_87 = arith.constant 0.000000e+00 : f32
      %268 = vector.broadcast %cst_86 : f32 to vector<1x128xf32>
      %269 = vector.broadcast %cst_87 : f32 to vector<1x128xf32>
      %270 = arith.select %267, %268, %269 : vector<1x128xi1>, vector<1x128xf32>
      %271 = vector.extract_strided_slice %246 {offsets = [16, 0], sizes = [8, 128], strides = [1, 1]} : vector<64x128xf32> to vector<8x128xf32>
      %272 = vector.broadcast %270 : vector<1x128xf32> to vector<8x128xf32>
      %273 = arith.mulf %272, %271 : vector<8x128xf32>
      %274 = arith.addf %265, %273 : vector<8x128xf32>
      %c3_i32_88 = arith.constant 3 : i32
      %275 = vector.broadcast %c3_i32_88 : i32 to vector<1x128xi32>
      %276 = arith.cmpi eq, %239, %275 : vector<1x128xi32>
      %cst_89 = arith.constant 1.000000e+00 : f32
      %cst_90 = arith.constant 0.000000e+00 : f32
      %277 = vector.broadcast %cst_89 : f32 to vector<1x128xf32>
      %278 = vector.broadcast %cst_90 : f32 to vector<1x128xf32>
      %279 = arith.select %276, %277, %278 : vector<1x128xi1>, vector<1x128xf32>
      %280 = vector.extract_strided_slice %246 {offsets = [24, 0], sizes = [8, 128], strides = [1, 1]} : vector<64x128xf32> to vector<8x128xf32>
      %281 = vector.broadcast %279 : vector<1x128xf32> to vector<8x128xf32>
      %282 = arith.mulf %281, %280 : vector<8x128xf32>
      %283 = arith.addf %274, %282 : vector<8x128xf32>
      %c4_i32_91 = arith.constant 4 : i32
      %284 = vector.broadcast %c4_i32_91 : i32 to vector<1x128xi32>
      %285 = arith.cmpi eq, %239, %284 : vector<1x128xi32>
      %cst_92 = arith.constant 1.000000e+00 : f32
      %cst_93 = arith.constant 0.000000e+00 : f32
      %286 = vector.broadcast %cst_92 : f32 to vector<1x128xf32>
      %287 = vector.broadcast %cst_93 : f32 to vector<1x128xf32>
      %288 = arith.select %285, %286, %287 : vector<1x128xi1>, vector<1x128xf32>
      %289 = vector.extract_strided_slice %246 {offsets = [32, 0], sizes = [8, 128], strides = [1, 1]} : vector<64x128xf32> to vector<8x128xf32>
      %290 = vector.broadcast %288 : vector<1x128xf32> to vector<8x128xf32>
      %291 = arith.mulf %290, %289 : vector<8x128xf32>
      %292 = arith.addf %283, %291 : vector<8x128xf32>
      %c5_i32_94 = arith.constant 5 : i32
      %293 = vector.broadcast %c5_i32_94 : i32 to vector<1x128xi32>
      %294 = arith.cmpi eq, %239, %293 : vector<1x128xi32>
      %cst_95 = arith.constant 1.000000e+00 : f32
      %cst_96 = arith.constant 0.000000e+00 : f32
      %295 = vector.broadcast %cst_95 : f32 to vector<1x128xf32>
      %296 = vector.broadcast %cst_96 : f32 to vector<1x128xf32>
      %297 = arith.select %294, %295, %296 : vector<1x128xi1>, vector<1x128xf32>
      %298 = vector.extract_strided_slice %246 {offsets = [40, 0], sizes = [8, 128], strides = [1, 1]} : vector<64x128xf32> to vector<8x128xf32>
      %299 = vector.broadcast %297 : vector<1x128xf32> to vector<8x128xf32>
      %300 = arith.mulf %299, %298 : vector<8x128xf32>
      %301 = arith.addf %292, %300 : vector<8x128xf32>
      %c6_i32_97 = arith.constant 6 : i32
      %302 = vector.broadcast %c6_i32_97 : i32 to vector<1x128xi32>
      %303 = arith.cmpi eq, %239, %302 : vector<1x128xi32>
      %cst_98 = arith.constant 1.000000e+00 : f32
      %cst_99 = arith.constant 0.000000e+00 : f32
      %304 = vector.broadcast %cst_98 : f32 to vector<1x128xf32>
      %305 = vector.broadcast %cst_99 : f32 to vector<1x128xf32>
      %306 = arith.select %303, %304, %305 : vector<1x128xi1>, vector<1x128xf32>
      %307 = vector.extract_strided_slice %246 {offsets = [48, 0], sizes = [8, 128], strides = [1, 1]} : vector<64x128xf32> to vector<8x128xf32>
      %308 = vector.broadcast %306 : vector<1x128xf32> to vector<8x128xf32>
      %309 = arith.mulf %308, %307 : vector<8x128xf32>
      %310 = arith.addf %301, %309 : vector<8x128xf32>
      %c7_i32_100 = arith.constant 7 : i32
      %311 = vector.broadcast %c7_i32_100 : i32 to vector<1x128xi32>
      %312 = arith.cmpi eq, %239, %311 : vector<1x128xi32>
      %cst_101 = arith.constant 1.000000e+00 : f32
      %cst_102 = arith.constant 0.000000e+00 : f32
      %313 = vector.broadcast %cst_101 : f32 to vector<1x128xf32>
      %314 = vector.broadcast %cst_102 : f32 to vector<1x128xf32>
      %315 = arith.select %312, %313, %314 : vector<1x128xi1>, vector<1x128xf32>
      %316 = vector.extract_strided_slice %246 {offsets = [56, 0], sizes = [8, 128], strides = [1, 1]} : vector<64x128xf32> to vector<8x128xf32>
      %317 = vector.broadcast %315 : vector<1x128xf32> to vector<8x128xf32>
      %318 = arith.mulf %317, %316 : vector<8x128xf32>
      %319 = arith.addf %310, %318 : vector<8x128xf32>
      %320 = vector.broadcast %240 : vector<1x128xf32> to vector<8x128xf32>
      %321 = arith.mulf %320, %319 : vector<8x128xf32>
      %322 = arith.addf %231, %321 : vector<8x128xf32>
      %323 = arith.xori %26, %32 : vector<1x128xi32>
      %324 = arith.xori %323, %34 : vector<1x128xi32>
      %c1023_i32_103 = arith.constant 1023 : i32
      %325 = vector.broadcast %c1023_i32_103 : i32 to vector<1x128xi32>
      %326 = arith.andi %324, %325 : vector<1x128xi32>
      %c3_i32_104 = arith.constant 3 : i32
      %327 = vector.broadcast %c3_i32_104 : i32 to vector<1x128xi32>
      %328 = arith.shrsi %326, %327 : vector<1x128xi32>
      %c7_i32_105 = arith.constant 7 : i32
      %329 = vector.broadcast %c7_i32_105 : i32 to vector<1x128xi32>
      %330 = arith.andi %326, %329 : vector<1x128xi32>
      %331 = arith.mulf %14, %47 : vector<1x128xf32>
      %332 = vector.broadcast %328 : vector<1x128xi32> to vector<128x128xi32>
      %333 = arith.cmpi eq, %4, %332 : vector<128x128xi32>
      %cst_106 = arith.constant 1.000000e+00 : f32
      %cst_107 = arith.constant 0.000000e+00 : f32
      %334 = vector.broadcast %cst_106 : f32 to vector<128x128xf32>
      %335 = vector.broadcast %cst_107 : f32 to vector<128x128xf32>
      %336 = arith.select %333, %334, %335 : vector<128x128xi1>, vector<128x128xf32>
      %cst_108 = arith.constant dense<0.000000e+00> : vector<64x128xf32>
      %337 = tpu.matmul %9, %336, %cst_108 {dimension_numbers = #tpu.dot_dimension_numbers<[1], [0], [0], [1], [0, 0, 1, 1], [], []>} : vector<64x128xf32>, vector<128x128xf32>, vector<64x128xf32> -> vector<64x128xf32>
      %cst_109 = arith.constant 0.000000e+00 : f32
      %338 = vector.broadcast %cst_109 : f32 to vector<8x128xf32>
      %c0_i32_110 = arith.constant 0 : i32
      %339 = vector.broadcast %c0_i32_110 : i32 to vector<1x128xi32>
      %340 = arith.cmpi eq, %330, %339 : vector<1x128xi32>
      %cst_111 = arith.constant 1.000000e+00 : f32
      %cst_112 = arith.constant 0.000000e+00 : f32
      %341 = vector.broadcast %cst_111 : f32 to vector<1x128xf32>
      %342 = vector.broadcast %cst_112 : f32 to vector<1x128xf32>
      %343 = arith.select %340, %341, %342 : vector<1x128xi1>, vector<1x128xf32>
      %344 = vector.extract_strided_slice %337 {offsets = [0, 0], sizes = [8, 128], strides = [1, 1]} : vector<64x128xf32> to vector<8x128xf32>
      %345 = vector.broadcast %343 : vector<1x128xf32> to vector<8x128xf32>
      %346 = arith.mulf %345, %344 : vector<8x128xf32>
      %347 = arith.addf %338, %346 : vector<8x128xf32>
      %c1_i32_113 = arith.constant 1 : i32
      %348 = vector.broadcast %c1_i32_113 : i32 to vector<1x128xi32>
      %349 = arith.cmpi eq, %330, %348 : vector<1x128xi32>
      %cst_114 = arith.constant 1.000000e+00 : f32
      %cst_115 = arith.constant 0.000000e+00 : f32
      %350 = vector.broadcast %cst_114 : f32 to vector<1x128xf32>
      %351 = vector.broadcast %cst_115 : f32 to vector<1x128xf32>
      %352 = arith.select %349, %350, %351 : vector<1x128xi1>, vector<1x128xf32>
      %353 = vector.extract_strided_slice %337 {offsets = [8, 0], sizes = [8, 128], strides = [1, 1]} : vector<64x128xf32> to vector<8x128xf32>
      %354 = vector.broadcast %352 : vector<1x128xf32> to vector<8x128xf32>
      %355 = arith.mulf %354, %353 : vector<8x128xf32>
      %356 = arith.addf %347, %355 : vector<8x128xf32>
      %c2_i32_116 = arith.constant 2 : i32
      %357 = vector.broadcast %c2_i32_116 : i32 to vector<1x128xi32>
      %358 = arith.cmpi eq, %330, %357 : vector<1x128xi32>
      %cst_117 = arith.constant 1.000000e+00 : f32
      %cst_118 = arith.constant 0.000000e+00 : f32
      %359 = vector.broadcast %cst_117 : f32 to vector<1x128xf32>
      %360 = vector.broadcast %cst_118 : f32 to vector<1x128xf32>
      %361 = arith.select %358, %359, %360 : vector<1x128xi1>, vector<1x128xf32>
      %362 = vector.extract_strided_slice %337 {offsets = [16, 0], sizes = [8, 128], strides = [1, 1]} : vector<64x128xf32> to vector<8x128xf32>
      %363 = vector.broadcast %361 : vector<1x128xf32> to vector<8x128xf32>
      %364 = arith.mulf %363, %362 : vector<8x128xf32>
      %365 = arith.addf %356, %364 : vector<8x128xf32>
      %c3_i32_119 = arith.constant 3 : i32
      %366 = vector.broadcast %c3_i32_119 : i32 to vector<1x128xi32>
      %367 = arith.cmpi eq, %330, %366 : vector<1x128xi32>
      %cst_120 = arith.constant 1.000000e+00 : f32
      %cst_121 = arith.constant 0.000000e+00 : f32
      %368 = vector.broadcast %cst_120 : f32 to vector<1x128xf32>
      %369 = vector.broadcast %cst_121 : f32 to vector<1x128xf32>
      %370 = arith.select %367, %368, %369 : vector<1x128xi1>, vector<1x128xf32>
      %371 = vector.extract_strided_slice %337 {offsets = [24, 0], sizes = [8, 128], strides = [1, 1]} : vector<64x128xf32> to vector<8x128xf32>
      %372 = vector.broadcast %370 : vector<1x128xf32> to vector<8x128xf32>
      %373 = arith.mulf %372, %371 : vector<8x128xf32>
      %374 = arith.addf %365, %373 : vector<8x128xf32>
      %c4_i32_122 = arith.constant 4 : i32
      %375 = vector.broadcast %c4_i32_122 : i32 to vector<1x128xi32>
      %376 = arith.cmpi eq, %330, %375 : vector<1x128xi32>
      %cst_123 = arith.constant 1.000000e+00 : f32
      %cst_124 = arith.constant 0.000000e+00 : f32
      %377 = vector.broadcast %cst_123 : f32 to vector<1x128xf32>
      %378 = vector.broadcast %cst_124 : f32 to vector<1x128xf32>
      %379 = arith.select %376, %377, %378 : vector<1x128xi1>, vector<1x128xf32>
      %380 = vector.extract_strided_slice %337 {offsets = [32, 0], sizes = [8, 128], strides = [1, 1]} : vector<64x128xf32> to vector<8x128xf32>
      %381 = vector.broadcast %379 : vector<1x128xf32> to vector<8x128xf32>
      %382 = arith.mulf %381, %380 : vector<8x128xf32>
      %383 = arith.addf %374, %382 : vector<8x128xf32>
      %c5_i32_125 = arith.constant 5 : i32
      %384 = vector.broadcast %c5_i32_125 : i32 to vector<1x128xi32>
      %385 = arith.cmpi eq, %330, %384 : vector<1x128xi32>
      %cst_126 = arith.constant 1.000000e+00 : f32
      %cst_127 = arith.constant 0.000000e+00 : f32
      %386 = vector.broadcast %cst_126 : f32 to vector<1x128xf32>
      %387 = vector.broadcast %cst_127 : f32 to vector<1x128xf32>
      %388 = arith.select %385, %386, %387 : vector<1x128xi1>, vector<1x128xf32>
      %389 = vector.extract_strided_slice %337 {offsets = [40, 0], sizes = [8, 128], strides = [1, 1]} : vector<64x128xf32> to vector<8x128xf32>
      %390 = vector.broadcast %388 : vector<1x128xf32> to vector<8x128xf32>
      %391 = arith.mulf %390, %389 : vector<8x128xf32>
      %392 = arith.addf %383, %391 : vector<8x128xf32>
      %c6_i32_128 = arith.constant 6 : i32
      %393 = vector.broadcast %c6_i32_128 : i32 to vector<1x128xi32>
      %394 = arith.cmpi eq, %330, %393 : vector<1x128xi32>
      %cst_129 = arith.constant 1.000000e+00 : f32
      %cst_130 = arith.constant 0.000000e+00 : f32
      %395 = vector.broadcast %cst_129 : f32 to vector<1x128xf32>
      %396 = vector.broadcast %cst_130 : f32 to vector<1x128xf32>
      %397 = arith.select %394, %395, %396 : vector<1x128xi1>, vector<1x128xf32>
      %398 = vector.extract_strided_slice %337 {offsets = [48, 0], sizes = [8, 128], strides = [1, 1]} : vector<64x128xf32> to vector<8x128xf32>
      %399 = vector.broadcast %397 : vector<1x128xf32> to vector<8x128xf32>
      %400 = arith.mulf %399, %398 : vector<8x128xf32>
      %401 = arith.addf %392, %400 : vector<8x128xf32>
      %c7_i32_131 = arith.constant 7 : i32
      %402 = vector.broadcast %c7_i32_131 : i32 to vector<1x128xi32>
      %403 = arith.cmpi eq, %330, %402 : vector<1x128xi32>
      %cst_132 = arith.constant 1.000000e+00 : f32
      %cst_133 = arith.constant 0.000000e+00 : f32
      %404 = vector.broadcast %cst_132 : f32 to vector<1x128xf32>
      %405 = vector.broadcast %cst_133 : f32 to vector<1x128xf32>
      %406 = arith.select %403, %404, %405 : vector<1x128xi1>, vector<1x128xf32>
      %407 = vector.extract_strided_slice %337 {offsets = [56, 0], sizes = [8, 128], strides = [1, 1]} : vector<64x128xf32> to vector<8x128xf32>
      %408 = vector.broadcast %406 : vector<1x128xf32> to vector<8x128xf32>
      %409 = arith.mulf %408, %407 : vector<8x128xf32>
      %410 = arith.addf %401, %409 : vector<8x128xf32>
      %411 = vector.broadcast %331 : vector<1x128xf32> to vector<8x128xf32>
      %412 = arith.mulf %411, %410 : vector<8x128xf32>
      %413 = arith.addf %322, %412 : vector<8x128xf32>
      %414 = arith.xori %13, %28 : vector<1x128xi32>
      %415 = arith.xori %414, %38 : vector<1x128xi32>
      %c1023_i32_134 = arith.constant 1023 : i32
      %416 = vector.broadcast %c1023_i32_134 : i32 to vector<1x128xi32>
      %417 = arith.andi %415, %416 : vector<1x128xi32>
      %c3_i32_135 = arith.constant 3 : i32
      %418 = vector.broadcast %c3_i32_135 : i32 to vector<1x128xi32>
      %419 = arith.shrsi %417, %418 : vector<1x128xi32>
      %c7_i32_136 = arith.constant 7 : i32
      %420 = vector.broadcast %c7_i32_136 : i32 to vector<1x128xi32>
      %421 = arith.andi %417, %420 : vector<1x128xi32>
      %422 = arith.mulf %40, %46 : vector<1x128xf32>
      %423 = vector.broadcast %419 : vector<1x128xi32> to vector<128x128xi32>
      %424 = arith.cmpi eq, %4, %423 : vector<128x128xi32>
      %cst_137 = arith.constant 1.000000e+00 : f32
      %cst_138 = arith.constant 0.000000e+00 : f32
      %425 = vector.broadcast %cst_137 : f32 to vector<128x128xf32>
      %426 = vector.broadcast %cst_138 : f32 to vector<128x128xf32>
      %427 = arith.select %424, %425, %426 : vector<128x128xi1>, vector<128x128xf32>
      %cst_139 = arith.constant dense<0.000000e+00> : vector<64x128xf32>
      %428 = tpu.matmul %9, %427, %cst_139 {dimension_numbers = #tpu.dot_dimension_numbers<[1], [0], [0], [1], [0, 0, 1, 1], [], []>} : vector<64x128xf32>, vector<128x128xf32>, vector<64x128xf32> -> vector<64x128xf32>
      %cst_140 = arith.constant 0.000000e+00 : f32
      %429 = vector.broadcast %cst_140 : f32 to vector<8x128xf32>
      %c0_i32_141 = arith.constant 0 : i32
      %430 = vector.broadcast %c0_i32_141 : i32 to vector<1x128xi32>
      %431 = arith.cmpi eq, %421, %430 : vector<1x128xi32>
      %cst_142 = arith.constant 1.000000e+00 : f32
      %cst_143 = arith.constant 0.000000e+00 : f32
      %432 = vector.broadcast %cst_142 : f32 to vector<1x128xf32>
      %433 = vector.broadcast %cst_143 : f32 to vector<1x128xf32>
      %434 = arith.select %431, %432, %433 : vector<1x128xi1>, vector<1x128xf32>
      %435 = vector.extract_strided_slice %428 {offsets = [0, 0], sizes = [8, 128], strides = [1, 1]} : vector<64x128xf32> to vector<8x128xf32>
      %436 = vector.broadcast %434 : vector<1x128xf32> to vector<8x128xf32>
      %437 = arith.mulf %436, %435 : vector<8x128xf32>
      %438 = arith.addf %429, %437 : vector<8x128xf32>
      %c1_i32_144 = arith.constant 1 : i32
      %439 = vector.broadcast %c1_i32_144 : i32 to vector<1x128xi32>
      %440 = arith.cmpi eq, %421, %439 : vector<1x128xi32>
      %cst_145 = arith.constant 1.000000e+00 : f32
      %cst_146 = arith.constant 0.000000e+00 : f32
      %441 = vector.broadcast %cst_145 : f32 to vector<1x128xf32>
      %442 = vector.broadcast %cst_146 : f32 to vector<1x128xf32>
      %443 = arith.select %440, %441, %442 : vector<1x128xi1>, vector<1x128xf32>
      %444 = vector.extract_strided_slice %428 {offsets = [8, 0], sizes = [8, 128], strides = [1, 1]} : vector<64x128xf32> to vector<8x128xf32>
      %445 = vector.broadcast %443 : vector<1x128xf32> to vector<8x128xf32>
      %446 = arith.mulf %445, %444 : vector<8x128xf32>
      %447 = arith.addf %438, %446 : vector<8x128xf32>
      %c2_i32_147 = arith.constant 2 : i32
      %448 = vector.broadcast %c2_i32_147 : i32 to vector<1x128xi32>
      %449 = arith.cmpi eq, %421, %448 : vector<1x128xi32>
      %cst_148 = arith.constant 1.000000e+00 : f32
      %cst_149 = arith.constant 0.000000e+00 : f32
      %450 = vector.broadcast %cst_148 : f32 to vector<1x128xf32>
      %451 = vector.broadcast %cst_149 : f32 to vector<1x128xf32>
      %452 = arith.select %449, %450, %451 : vector<1x128xi1>, vector<1x128xf32>
      %453 = vector.extract_strided_slice %428 {offsets = [16, 0], sizes = [8, 128], strides = [1, 1]} : vector<64x128xf32> to vector<8x128xf32>
      %454 = vector.broadcast %452 : vector<1x128xf32> to vector<8x128xf32>
      %455 = arith.mulf %454, %453 : vector<8x128xf32>
      %456 = arith.addf %447, %455 : vector<8x128xf32>
      %c3_i32_150 = arith.constant 3 : i32
      %457 = vector.broadcast %c3_i32_150 : i32 to vector<1x128xi32>
      %458 = arith.cmpi eq, %421, %457 : vector<1x128xi32>
      %cst_151 = arith.constant 1.000000e+00 : f32
      %cst_152 = arith.constant 0.000000e+00 : f32
      %459 = vector.broadcast %cst_151 : f32 to vector<1x128xf32>
      %460 = vector.broadcast %cst_152 : f32 to vector<1x128xf32>
      %461 = arith.select %458, %459, %460 : vector<1x128xi1>, vector<1x128xf32>
      %462 = vector.extract_strided_slice %428 {offsets = [24, 0], sizes = [8, 128], strides = [1, 1]} : vector<64x128xf32> to vector<8x128xf32>
      %463 = vector.broadcast %461 : vector<1x128xf32> to vector<8x128xf32>
      %464 = arith.mulf %463, %462 : vector<8x128xf32>
      %465 = arith.addf %456, %464 : vector<8x128xf32>
      %c4_i32_153 = arith.constant 4 : i32
      %466 = vector.broadcast %c4_i32_153 : i32 to vector<1x128xi32>
      %467 = arith.cmpi eq, %421, %466 : vector<1x128xi32>
      %cst_154 = arith.constant 1.000000e+00 : f32
      %cst_155 = arith.constant 0.000000e+00 : f32
      %468 = vector.broadcast %cst_154 : f32 to vector<1x128xf32>
      %469 = vector.broadcast %cst_155 : f32 to vector<1x128xf32>
      %470 = arith.select %467, %468, %469 : vector<1x128xi1>, vector<1x128xf32>
      %471 = vector.extract_strided_slice %428 {offsets = [32, 0], sizes = [8, 128], strides = [1, 1]} : vector<64x128xf32> to vector<8x128xf32>
      %472 = vector.broadcast %470 : vector<1x128xf32> to vector<8x128xf32>
      %473 = arith.mulf %472, %471 : vector<8x128xf32>
      %474 = arith.addf %465, %473 : vector<8x128xf32>
      %c5_i32_156 = arith.constant 5 : i32
      %475 = vector.broadcast %c5_i32_156 : i32 to vector<1x128xi32>
      %476 = arith.cmpi eq, %421, %475 : vector<1x128xi32>
      %cst_157 = arith.constant 1.000000e+00 : f32
      %cst_158 = arith.constant 0.000000e+00 : f32
      %477 = vector.broadcast %cst_157 : f32 to vector<1x128xf32>
      %478 = vector.broadcast %cst_158 : f32 to vector<1x128xf32>
      %479 = arith.select %476, %477, %478 : vector<1x128xi1>, vector<1x128xf32>
      %480 = vector.extract_strided_slice %428 {offsets = [40, 0], sizes = [8, 128], strides = [1, 1]} : vector<64x128xf32> to vector<8x128xf32>
      %481 = vector.broadcast %479 : vector<1x128xf32> to vector<8x128xf32>
      %482 = arith.mulf %481, %480 : vector<8x128xf32>
      %483 = arith.addf %474, %482 : vector<8x128xf32>
      %c6_i32_159 = arith.constant 6 : i32
      %484 = vector.broadcast %c6_i32_159 : i32 to vector<1x128xi32>
      %485 = arith.cmpi eq, %421, %484 : vector<1x128xi32>
      %cst_160 = arith.constant 1.000000e+00 : f32
      %cst_161 = arith.constant 0.000000e+00 : f32
      %486 = vector.broadcast %cst_160 : f32 to vector<1x128xf32>
      %487 = vector.broadcast %cst_161 : f32 to vector<1x128xf32>
      %488 = arith.select %485, %486, %487 : vector<1x128xi1>, vector<1x128xf32>
      %489 = vector.extract_strided_slice %428 {offsets = [48, 0], sizes = [8, 128], strides = [1, 1]} : vector<64x128xf32> to vector<8x128xf32>
      %490 = vector.broadcast %488 : vector<1x128xf32> to vector<8x128xf32>
      %491 = arith.mulf %490, %489 : vector<8x128xf32>
      %492 = arith.addf %483, %491 : vector<8x128xf32>
      %c7_i32_162 = arith.constant 7 : i32
      %493 = vector.broadcast %c7_i32_162 : i32 to vector<1x128xi32>
      %494 = arith.cmpi eq, %421, %493 : vector<1x128xi32>
      %cst_163 = arith.constant 1.000000e+00 : f32
      %cst_164 = arith.constant 0.000000e+00 : f32
      %495 = vector.broadcast %cst_163 : f32 to vector<1x128xf32>
      %496 = vector.broadcast %cst_164 : f32 to vector<1x128xf32>
      %497 = arith.select %494, %495, %496 : vector<1x128xi1>, vector<1x128xf32>
      %498 = vector.extract_strided_slice %428 {offsets = [56, 0], sizes = [8, 128], strides = [1, 1]} : vector<64x128xf32> to vector<8x128xf32>
      %499 = vector.broadcast %497 : vector<1x128xf32> to vector<8x128xf32>
      %500 = arith.mulf %499, %498 : vector<8x128xf32>
      %501 = arith.addf %492, %500 : vector<8x128xf32>
      %502 = vector.broadcast %422 : vector<1x128xf32> to vector<8x128xf32>
      %503 = arith.mulf %502, %501 : vector<8x128xf32>
      %504 = arith.addf %413, %503 : vector<8x128xf32>
      %505 = arith.xori %26, %28 : vector<1x128xi32>
      %506 = arith.xori %505, %38 : vector<1x128xi32>
      %c1023_i32_165 = arith.constant 1023 : i32
      %507 = vector.broadcast %c1023_i32_165 : i32 to vector<1x128xi32>
      %508 = arith.andi %506, %507 : vector<1x128xi32>
      %c3_i32_166 = arith.constant 3 : i32
      %509 = vector.broadcast %c3_i32_166 : i32 to vector<1x128xi32>
      %510 = arith.shrsi %508, %509 : vector<1x128xi32>
      %c7_i32_167 = arith.constant 7 : i32
      %511 = vector.broadcast %c7_i32_167 : i32 to vector<1x128xi32>
      %512 = arith.andi %508, %511 : vector<1x128xi32>
      %513 = arith.mulf %14, %46 : vector<1x128xf32>
      %514 = vector.broadcast %510 : vector<1x128xi32> to vector<128x128xi32>
      %515 = arith.cmpi eq, %4, %514 : vector<128x128xi32>
      %cst_168 = arith.constant 1.000000e+00 : f32
      %cst_169 = arith.constant 0.000000e+00 : f32
      %516 = vector.broadcast %cst_168 : f32 to vector<128x128xf32>
      %517 = vector.broadcast %cst_169 : f32 to vector<128x128xf32>
      %518 = arith.select %515, %516, %517 : vector<128x128xi1>, vector<128x128xf32>
      %cst_170 = arith.constant dense<0.000000e+00> : vector<64x128xf32>
      %519 = tpu.matmul %9, %518, %cst_170 {dimension_numbers = #tpu.dot_dimension_numbers<[1], [0], [0], [1], [0, 0, 1, 1], [], []>} : vector<64x128xf32>, vector<128x128xf32>, vector<64x128xf32> -> vector<64x128xf32>
      %cst_171 = arith.constant 0.000000e+00 : f32
      %520 = vector.broadcast %cst_171 : f32 to vector<8x128xf32>
      %c0_i32_172 = arith.constant 0 : i32
      %521 = vector.broadcast %c0_i32_172 : i32 to vector<1x128xi32>
      %522 = arith.cmpi eq, %512, %521 : vector<1x128xi32>
      %cst_173 = arith.constant 1.000000e+00 : f32
      %cst_174 = arith.constant 0.000000e+00 : f32
      %523 = vector.broadcast %cst_173 : f32 to vector<1x128xf32>
      %524 = vector.broadcast %cst_174 : f32 to vector<1x128xf32>
      %525 = arith.select %522, %523, %524 : vector<1x128xi1>, vector<1x128xf32>
      %526 = vector.extract_strided_slice %519 {offsets = [0, 0], sizes = [8, 128], strides = [1, 1]} : vector<64x128xf32> to vector<8x128xf32>
      %527 = vector.broadcast %525 : vector<1x128xf32> to vector<8x128xf32>
      %528 = arith.mulf %527, %526 : vector<8x128xf32>
      %529 = arith.addf %520, %528 : vector<8x128xf32>
      %c1_i32_175 = arith.constant 1 : i32
      %530 = vector.broadcast %c1_i32_175 : i32 to vector<1x128xi32>
      %531 = arith.cmpi eq, %512, %530 : vector<1x128xi32>
      %cst_176 = arith.constant 1.000000e+00 : f32
      %cst_177 = arith.constant 0.000000e+00 : f32
      %532 = vector.broadcast %cst_176 : f32 to vector<1x128xf32>
      %533 = vector.broadcast %cst_177 : f32 to vector<1x128xf32>
      %534 = arith.select %531, %532, %533 : vector<1x128xi1>, vector<1x128xf32>
      %535 = vector.extract_strided_slice %519 {offsets = [8, 0], sizes = [8, 128], strides = [1, 1]} : vector<64x128xf32> to vector<8x128xf32>
      %536 = vector.broadcast %534 : vector<1x128xf32> to vector<8x128xf32>
      %537 = arith.mulf %536, %535 : vector<8x128xf32>
      %538 = arith.addf %529, %537 : vector<8x128xf32>
      %c2_i32_178 = arith.constant 2 : i32
      %539 = vector.broadcast %c2_i32_178 : i32 to vector<1x128xi32>
      %540 = arith.cmpi eq, %512, %539 : vector<1x128xi32>
      %cst_179 = arith.constant 1.000000e+00 : f32
      %cst_180 = arith.constant 0.000000e+00 : f32
      %541 = vector.broadcast %cst_179 : f32 to vector<1x128xf32>
      %542 = vector.broadcast %cst_180 : f32 to vector<1x128xf32>
      %543 = arith.select %540, %541, %542 : vector<1x128xi1>, vector<1x128xf32>
      %544 = vector.extract_strided_slice %519 {offsets = [16, 0], sizes = [8, 128], strides = [1, 1]} : vector<64x128xf32> to vector<8x128xf32>
      %545 = vector.broadcast %543 : vector<1x128xf32> to vector<8x128xf32>
      %546 = arith.mulf %545, %544 : vector<8x128xf32>
      %547 = arith.addf %538, %546 : vector<8x128xf32>
      %c3_i32_181 = arith.constant 3 : i32
      %548 = vector.broadcast %c3_i32_181 : i32 to vector<1x128xi32>
      %549 = arith.cmpi eq, %512, %548 : vector<1x128xi32>
      %cst_182 = arith.constant 1.000000e+00 : f32
      %cst_183 = arith.constant 0.000000e+00 : f32
      %550 = vector.broadcast %cst_182 : f32 to vector<1x128xf32>
      %551 = vector.broadcast %cst_183 : f32 to vector<1x128xf32>
      %552 = arith.select %549, %550, %551 : vector<1x128xi1>, vector<1x128xf32>
      %553 = vector.extract_strided_slice %519 {offsets = [24, 0], sizes = [8, 128], strides = [1, 1]} : vector<64x128xf32> to vector<8x128xf32>
      %554 = vector.broadcast %552 : vector<1x128xf32> to vector<8x128xf32>
      %555 = arith.mulf %554, %553 : vector<8x128xf32>
      %556 = arith.addf %547, %555 : vector<8x128xf32>
      %c4_i32_184 = arith.constant 4 : i32
      %557 = vector.broadcast %c4_i32_184 : i32 to vector<1x128xi32>
      %558 = arith.cmpi eq, %512, %557 : vector<1x128xi32>
      %cst_185 = arith.constant 1.000000e+00 : f32
      %cst_186 = arith.constant 0.000000e+00 : f32
      %559 = vector.broadcast %cst_185 : f32 to vector<1x128xf32>
      %560 = vector.broadcast %cst_186 : f32 to vector<1x128xf32>
      %561 = arith.select %558, %559, %560 : vector<1x128xi1>, vector<1x128xf32>
      %562 = vector.extract_strided_slice %519 {offsets = [32, 0], sizes = [8, 128], strides = [1, 1]} : vector<64x128xf32> to vector<8x128xf32>
      %563 = vector.broadcast %561 : vector<1x128xf32> to vector<8x128xf32>
      %564 = arith.mulf %563, %562 : vector<8x128xf32>
      %565 = arith.addf %556, %564 : vector<8x128xf32>
      %c5_i32_187 = arith.constant 5 : i32
      %566 = vector.broadcast %c5_i32_187 : i32 to vector<1x128xi32>
      %567 = arith.cmpi eq, %512, %566 : vector<1x128xi32>
      %cst_188 = arith.constant 1.000000e+00 : f32
      %cst_189 = arith.constant 0.000000e+00 : f32
      %568 = vector.broadcast %cst_188 : f32 to vector<1x128xf32>
      %569 = vector.broadcast %cst_189 : f32 to vector<1x128xf32>
      %570 = arith.select %567, %568, %569 : vector<1x128xi1>, vector<1x128xf32>
      %571 = vector.extract_strided_slice %519 {offsets = [40, 0], sizes = [8, 128], strides = [1, 1]} : vector<64x128xf32> to vector<8x128xf32>
      %572 = vector.broadcast %570 : vector<1x128xf32> to vector<8x128xf32>
      %573 = arith.mulf %572, %571 : vector<8x128xf32>
      %574 = arith.addf %565, %573 : vector<8x128xf32>
      %c6_i32_190 = arith.constant 6 : i32
      %575 = vector.broadcast %c6_i32_190 : i32 to vector<1x128xi32>
      %576 = arith.cmpi eq, %512, %575 : vector<1x128xi32>
      %cst_191 = arith.constant 1.000000e+00 : f32
      %cst_192 = arith.constant 0.000000e+00 : f32
      %577 = vector.broadcast %cst_191 : f32 to vector<1x128xf32>
      %578 = vector.broadcast %cst_192 : f32 to vector<1x128xf32>
      %579 = arith.select %576, %577, %578 : vector<1x128xi1>, vector<1x128xf32>
      %580 = vector.extract_strided_slice %519 {offsets = [48, 0], sizes = [8, 128], strides = [1, 1]} : vector<64x128xf32> to vector<8x128xf32>
      %581 = vector.broadcast %579 : vector<1x128xf32> to vector<8x128xf32>
      %582 = arith.mulf %581, %580 : vector<8x128xf32>
      %583 = arith.addf %574, %582 : vector<8x128xf32>
      %c7_i32_193 = arith.constant 7 : i32
      %584 = vector.broadcast %c7_i32_193 : i32 to vector<1x128xi32>
      %585 = arith.cmpi eq, %512, %584 : vector<1x128xi32>
      %cst_194 = arith.constant 1.000000e+00 : f32
      %cst_195 = arith.constant 0.000000e+00 : f32
      %586 = vector.broadcast %cst_194 : f32 to vector<1x128xf32>
      %587 = vector.broadcast %cst_195 : f32 to vector<1x128xf32>
      %588 = arith.select %585, %586, %587 : vector<1x128xi1>, vector<1x128xf32>
      %589 = vector.extract_strided_slice %519 {offsets = [56, 0], sizes = [8, 128], strides = [1, 1]} : vector<64x128xf32> to vector<8x128xf32>
      %590 = vector.broadcast %588 : vector<1x128xf32> to vector<8x128xf32>
      %591 = arith.mulf %590, %589 : vector<8x128xf32>
      %592 = arith.addf %583, %591 : vector<8x128xf32>
      %593 = vector.broadcast %513 : vector<1x128xf32> to vector<8x128xf32>
      %594 = arith.mulf %593, %592 : vector<8x128xf32>
      %595 = arith.addf %504, %594 : vector<8x128xf32>
      %596 = arith.xori %13, %32 : vector<1x128xi32>
      %597 = arith.xori %596, %38 : vector<1x128xi32>
      %c1023_i32_196 = arith.constant 1023 : i32
      %598 = vector.broadcast %c1023_i32_196 : i32 to vector<1x128xi32>
      %599 = arith.andi %597, %598 : vector<1x128xi32>
      %c3_i32_197 = arith.constant 3 : i32
      %600 = vector.broadcast %c3_i32_197 : i32 to vector<1x128xi32>
      %601 = arith.shrsi %599, %600 : vector<1x128xi32>
      %c7_i32_198 = arith.constant 7 : i32
      %602 = vector.broadcast %c7_i32_198 : i32 to vector<1x128xi32>
      %603 = arith.andi %599, %602 : vector<1x128xi32>
      %604 = arith.mulf %40, %48 : vector<1x128xf32>
      %605 = vector.broadcast %601 : vector<1x128xi32> to vector<128x128xi32>
      %606 = arith.cmpi eq, %4, %605 : vector<128x128xi32>
      %cst_199 = arith.constant 1.000000e+00 : f32
      %cst_200 = arith.constant 0.000000e+00 : f32
      %607 = vector.broadcast %cst_199 : f32 to vector<128x128xf32>
      %608 = vector.broadcast %cst_200 : f32 to vector<128x128xf32>
      %609 = arith.select %606, %607, %608 : vector<128x128xi1>, vector<128x128xf32>
      %cst_201 = arith.constant dense<0.000000e+00> : vector<64x128xf32>
      %610 = tpu.matmul %9, %609, %cst_201 {dimension_numbers = #tpu.dot_dimension_numbers<[1], [0], [0], [1], [0, 0, 1, 1], [], []>} : vector<64x128xf32>, vector<128x128xf32>, vector<64x128xf32> -> vector<64x128xf32>
      %cst_202 = arith.constant 0.000000e+00 : f32
      %611 = vector.broadcast %cst_202 : f32 to vector<8x128xf32>
      %c0_i32_203 = arith.constant 0 : i32
      %612 = vector.broadcast %c0_i32_203 : i32 to vector<1x128xi32>
      %613 = arith.cmpi eq, %603, %612 : vector<1x128xi32>
      %cst_204 = arith.constant 1.000000e+00 : f32
      %cst_205 = arith.constant 0.000000e+00 : f32
      %614 = vector.broadcast %cst_204 : f32 to vector<1x128xf32>
      %615 = vector.broadcast %cst_205 : f32 to vector<1x128xf32>
      %616 = arith.select %613, %614, %615 : vector<1x128xi1>, vector<1x128xf32>
      %617 = vector.extract_strided_slice %610 {offsets = [0, 0], sizes = [8, 128], strides = [1, 1]} : vector<64x128xf32> to vector<8x128xf32>
      %618 = vector.broadcast %616 : vector<1x128xf32> to vector<8x128xf32>
      %619 = arith.mulf %618, %617 : vector<8x128xf32>
      %620 = arith.addf %611, %619 : vector<8x128xf32>
      %c1_i32_206 = arith.constant 1 : i32
      %621 = vector.broadcast %c1_i32_206 : i32 to vector<1x128xi32>
      %622 = arith.cmpi eq, %603, %621 : vector<1x128xi32>
      %cst_207 = arith.constant 1.000000e+00 : f32
      %cst_208 = arith.constant 0.000000e+00 : f32
      %623 = vector.broadcast %cst_207 : f32 to vector<1x128xf32>
      %624 = vector.broadcast %cst_208 : f32 to vector<1x128xf32>
      %625 = arith.select %622, %623, %624 : vector<1x128xi1>, vector<1x128xf32>
      %626 = vector.extract_strided_slice %610 {offsets = [8, 0], sizes = [8, 128], strides = [1, 1]} : vector<64x128xf32> to vector<8x128xf32>
      %627 = vector.broadcast %625 : vector<1x128xf32> to vector<8x128xf32>
      %628 = arith.mulf %627, %626 : vector<8x128xf32>
      %629 = arith.addf %620, %628 : vector<8x128xf32>
      %c2_i32_209 = arith.constant 2 : i32
      %630 = vector.broadcast %c2_i32_209 : i32 to vector<1x128xi32>
      %631 = arith.cmpi eq, %603, %630 : vector<1x128xi32>
      %cst_210 = arith.constant 1.000000e+00 : f32
      %cst_211 = arith.constant 0.000000e+00 : f32
      %632 = vector.broadcast %cst_210 : f32 to vector<1x128xf32>
      %633 = vector.broadcast %cst_211 : f32 to vector<1x128xf32>
      %634 = arith.select %631, %632, %633 : vector<1x128xi1>, vector<1x128xf32>
      %635 = vector.extract_strided_slice %610 {offsets = [16, 0], sizes = [8, 128], strides = [1, 1]} : vector<64x128xf32> to vector<8x128xf32>
      %636 = vector.broadcast %634 : vector<1x128xf32> to vector<8x128xf32>
      %637 = arith.mulf %636, %635 : vector<8x128xf32>
      %638 = arith.addf %629, %637 : vector<8x128xf32>
      %c3_i32_212 = arith.constant 3 : i32
      %639 = vector.broadcast %c3_i32_212 : i32 to vector<1x128xi32>
      %640 = arith.cmpi eq, %603, %639 : vector<1x128xi32>
      %cst_213 = arith.constant 1.000000e+00 : f32
      %cst_214 = arith.constant 0.000000e+00 : f32
      %641 = vector.broadcast %cst_213 : f32 to vector<1x128xf32>
      %642 = vector.broadcast %cst_214 : f32 to vector<1x128xf32>
      %643 = arith.select %640, %641, %642 : vector<1x128xi1>, vector<1x128xf32>
      %644 = vector.extract_strided_slice %610 {offsets = [24, 0], sizes = [8, 128], strides = [1, 1]} : vector<64x128xf32> to vector<8x128xf32>
      %645 = vector.broadcast %643 : vector<1x128xf32> to vector<8x128xf32>
      %646 = arith.mulf %645, %644 : vector<8x128xf32>
      %647 = arith.addf %638, %646 : vector<8x128xf32>
      %c4_i32_215 = arith.constant 4 : i32
      %648 = vector.broadcast %c4_i32_215 : i32 to vector<1x128xi32>
      %649 = arith.cmpi eq, %603, %648 : vector<1x128xi32>
      %cst_216 = arith.constant 1.000000e+00 : f32
      %cst_217 = arith.constant 0.000000e+00 : f32
      %650 = vector.broadcast %cst_216 : f32 to vector<1x128xf32>
      %651 = vector.broadcast %cst_217 : f32 to vector<1x128xf32>
      %652 = arith.select %649, %650, %651 : vector<1x128xi1>, vector<1x128xf32>
      %653 = vector.extract_strided_slice %610 {offsets = [32, 0], sizes = [8, 128], strides = [1, 1]} : vector<64x128xf32> to vector<8x128xf32>
      %654 = vector.broadcast %652 : vector<1x128xf32> to vector<8x128xf32>
      %655 = arith.mulf %654, %653 : vector<8x128xf32>
      %656 = arith.addf %647, %655 : vector<8x128xf32>
      %c5_i32_218 = arith.constant 5 : i32
      %657 = vector.broadcast %c5_i32_218 : i32 to vector<1x128xi32>
      %658 = arith.cmpi eq, %603, %657 : vector<1x128xi32>
      %cst_219 = arith.constant 1.000000e+00 : f32
      %cst_220 = arith.constant 0.000000e+00 : f32
      %659 = vector.broadcast %cst_219 : f32 to vector<1x128xf32>
      %660 = vector.broadcast %cst_220 : f32 to vector<1x128xf32>
      %661 = arith.select %658, %659, %660 : vector<1x128xi1>, vector<1x128xf32>
      %662 = vector.extract_strided_slice %610 {offsets = [40, 0], sizes = [8, 128], strides = [1, 1]} : vector<64x128xf32> to vector<8x128xf32>
      %663 = vector.broadcast %661 : vector<1x128xf32> to vector<8x128xf32>
      %664 = arith.mulf %663, %662 : vector<8x128xf32>
      %665 = arith.addf %656, %664 : vector<8x128xf32>
      %c6_i32_221 = arith.constant 6 : i32
      %666 = vector.broadcast %c6_i32_221 : i32 to vector<1x128xi32>
      %667 = arith.cmpi eq, %603, %666 : vector<1x128xi32>
      %cst_222 = arith.constant 1.000000e+00 : f32
      %cst_223 = arith.constant 0.000000e+00 : f32
      %668 = vector.broadcast %cst_222 : f32 to vector<1x128xf32>
      %669 = vector.broadcast %cst_223 : f32 to vector<1x128xf32>
      %670 = arith.select %667, %668, %669 : vector<1x128xi1>, vector<1x128xf32>
      %671 = vector.extract_strided_slice %610 {offsets = [48, 0], sizes = [8, 128], strides = [1, 1]} : vector<64x128xf32> to vector<8x128xf32>
      %672 = vector.broadcast %670 : vector<1x128xf32> to vector<8x128xf32>
      %673 = arith.mulf %672, %671 : vector<8x128xf32>
      %674 = arith.addf %665, %673 : vector<8x128xf32>
      %c7_i32_224 = arith.constant 7 : i32
      %675 = vector.broadcast %c7_i32_224 : i32 to vector<1x128xi32>
      %676 = arith.cmpi eq, %603, %675 : vector<1x128xi32>
      %cst_225 = arith.constant 1.000000e+00 : f32
      %cst_226 = arith.constant 0.000000e+00 : f32
      %677 = vector.broadcast %cst_225 : f32 to vector<1x128xf32>
      %678 = vector.broadcast %cst_226 : f32 to vector<1x128xf32>
      %679 = arith.select %676, %677, %678 : vector<1x128xi1>, vector<1x128xf32>
      %680 = vector.extract_strided_slice %610 {offsets = [56, 0], sizes = [8, 128], strides = [1, 1]} : vector<64x128xf32> to vector<8x128xf32>
      %681 = vector.broadcast %679 : vector<1x128xf32> to vector<8x128xf32>
      %682 = arith.mulf %681, %680 : vector<8x128xf32>
      %683 = arith.addf %674, %682 : vector<8x128xf32>
      %684 = vector.broadcast %604 : vector<1x128xf32> to vector<8x128xf32>
      %685 = arith.mulf %684, %683 : vector<8x128xf32>
      %686 = arith.addf %595, %685 : vector<8x128xf32>
      %687 = arith.xori %26, %32 : vector<1x128xi32>
      %688 = arith.xori %687, %38 : vector<1x128xi32>
      %c1023_i32_227 = arith.constant 1023 : i32
      %689 = vector.broadcast %c1023_i32_227 : i32 to vector<1x128xi32>
      %690 = arith.andi %688, %689 : vector<1x128xi32>
      %c3_i32_228 = arith.constant 3 : i32
      %691 = vector.broadcast %c3_i32_228 : i32 to vector<1x128xi32>
      %692 = arith.shrsi %690, %691 : vector<1x128xi32>
      %c7_i32_229 = arith.constant 7 : i32
      %693 = vector.broadcast %c7_i32_229 : i32 to vector<1x128xi32>
      %694 = arith.andi %690, %693 : vector<1x128xi32>
      %695 = arith.mulf %14, %48 : vector<1x128xf32>
      %696 = vector.broadcast %692 : vector<1x128xi32> to vector<128x128xi32>
      %697 = arith.cmpi eq, %4, %696 : vector<128x128xi32>
      %cst_230 = arith.constant 1.000000e+00 : f32
      %cst_231 = arith.constant 0.000000e+00 : f32
      %698 = vector.broadcast %cst_230 : f32 to vector<128x128xf32>
      %699 = vector.broadcast %cst_231 : f32 to vector<128x128xf32>
      %700 = arith.select %697, %698, %699 : vector<128x128xi1>, vector<128x128xf32>
      %cst_232 = arith.constant dense<0.000000e+00> : vector<64x128xf32>
      %701 = tpu.matmul %9, %700, %cst_232 {dimension_numbers = #tpu.dot_dimension_numbers<[1], [0], [0], [1], [0, 0, 1, 1], [], []>} : vector<64x128xf32>, vector<128x128xf32>, vector<64x128xf32> -> vector<64x128xf32>
      %cst_233 = arith.constant 0.000000e+00 : f32
      %702 = vector.broadcast %cst_233 : f32 to vector<8x128xf32>
      %c0_i32_234 = arith.constant 0 : i32
      %703 = vector.broadcast %c0_i32_234 : i32 to vector<1x128xi32>
      %704 = arith.cmpi eq, %694, %703 : vector<1x128xi32>
      %cst_235 = arith.constant 1.000000e+00 : f32
      %cst_236 = arith.constant 0.000000e+00 : f32
      %705 = vector.broadcast %cst_235 : f32 to vector<1x128xf32>
      %706 = vector.broadcast %cst_236 : f32 to vector<1x128xf32>
      %707 = arith.select %704, %705, %706 : vector<1x128xi1>, vector<1x128xf32>
      %708 = vector.extract_strided_slice %701 {offsets = [0, 0], sizes = [8, 128], strides = [1, 1]} : vector<64x128xf32> to vector<8x128xf32>
      %709 = vector.broadcast %707 : vector<1x128xf32> to vector<8x128xf32>
      %710 = arith.mulf %709, %708 : vector<8x128xf32>
      %711 = arith.addf %702, %710 : vector<8x128xf32>
      %c1_i32_237 = arith.constant 1 : i32
      %712 = vector.broadcast %c1_i32_237 : i32 to vector<1x128xi32>
      %713 = arith.cmpi eq, %694, %712 : vector<1x128xi32>
      %cst_238 = arith.constant 1.000000e+00 : f32
      %cst_239 = arith.constant 0.000000e+00 : f32
      %714 = vector.broadcast %cst_238 : f32 to vector<1x128xf32>
      %715 = vector.broadcast %cst_239 : f32 to vector<1x128xf32>
      %716 = arith.select %713, %714, %715 : vector<1x128xi1>, vector<1x128xf32>
      %717 = vector.extract_strided_slice %701 {offsets = [8, 0], sizes = [8, 128], strides = [1, 1]} : vector<64x128xf32> to vector<8x128xf32>
      %718 = vector.broadcast %716 : vector<1x128xf32> to vector<8x128xf32>
      %719 = arith.mulf %718, %717 : vector<8x128xf32>
      %720 = arith.addf %711, %719 : vector<8x128xf32>
      %c2_i32_240 = arith.constant 2 : i32
      %721 = vector.broadcast %c2_i32_240 : i32 to vector<1x128xi32>
      %722 = arith.cmpi eq, %694, %721 : vector<1x128xi32>
      %cst_241 = arith.constant 1.000000e+00 : f32
      %cst_242 = arith.constant 0.000000e+00 : f32
      %723 = vector.broadcast %cst_241 : f32 to vector<1x128xf32>
      %724 = vector.broadcast %cst_242 : f32 to vector<1x128xf32>
      %725 = arith.select %722, %723, %724 : vector<1x128xi1>, vector<1x128xf32>
      %726 = vector.extract_strided_slice %701 {offsets = [16, 0], sizes = [8, 128], strides = [1, 1]} : vector<64x128xf32> to vector<8x128xf32>
      %727 = vector.broadcast %725 : vector<1x128xf32> to vector<8x128xf32>
      %728 = arith.mulf %727, %726 : vector<8x128xf32>
      %729 = arith.addf %720, %728 : vector<8x128xf32>
      %c3_i32_243 = arith.constant 3 : i32
      %730 = vector.broadcast %c3_i32_243 : i32 to vector<1x128xi32>
      %731 = arith.cmpi eq, %694, %730 : vector<1x128xi32>
      %cst_244 = arith.constant 1.000000e+00 : f32
      %cst_245 = arith.constant 0.000000e+00 : f32
      %732 = vector.broadcast %cst_244 : f32 to vector<1x128xf32>
      %733 = vector.broadcast %cst_245 : f32 to vector<1x128xf32>
      %734 = arith.select %731, %732, %733 : vector<1x128xi1>, vector<1x128xf32>
      %735 = vector.extract_strided_slice %701 {offsets = [24, 0], sizes = [8, 128], strides = [1, 1]} : vector<64x128xf32> to vector<8x128xf32>
      %736 = vector.broadcast %734 : vector<1x128xf32> to vector<8x128xf32>
      %737 = arith.mulf %736, %735 : vector<8x128xf32>
      %738 = arith.addf %729, %737 : vector<8x128xf32>
      %c4_i32_246 = arith.constant 4 : i32
      %739 = vector.broadcast %c4_i32_246 : i32 to vector<1x128xi32>
      %740 = arith.cmpi eq, %694, %739 : vector<1x128xi32>
      %cst_247 = arith.constant 1.000000e+00 : f32
      %cst_248 = arith.constant 0.000000e+00 : f32
      %741 = vector.broadcast %cst_247 : f32 to vector<1x128xf32>
      %742 = vector.broadcast %cst_248 : f32 to vector<1x128xf32>
      %743 = arith.select %740, %741, %742 : vector<1x128xi1>, vector<1x128xf32>
      %744 = vector.extract_strided_slice %701 {offsets = [32, 0], sizes = [8, 128], strides = [1, 1]} : vector<64x128xf32> to vector<8x128xf32>
      %745 = vector.broadcast %743 : vector<1x128xf32> to vector<8x128xf32>
      %746 = arith.mulf %745, %744 : vector<8x128xf32>
      %747 = arith.addf %738, %746 : vector<8x128xf32>
      %c5_i32_249 = arith.constant 5 : i32
      %748 = vector.broadcast %c5_i32_249 : i32 to vector<1x128xi32>
      %749 = arith.cmpi eq, %694, %748 : vector<1x128xi32>
      %cst_250 = arith.constant 1.000000e+00 : f32
      %cst_251 = arith.constant 0.000000e+00 : f32
      %750 = vector.broadcast %cst_250 : f32 to vector<1x128xf32>
      %751 = vector.broadcast %cst_251 : f32 to vector<1x128xf32>
      %752 = arith.select %749, %750, %751 : vector<1x128xi1>, vector<1x128xf32>
      %753 = vector.extract_strided_slice %701 {offsets = [40, 0], sizes = [8, 128], strides = [1, 1]} : vector<64x128xf32> to vector<8x128xf32>
      %754 = vector.broadcast %752 : vector<1x128xf32> to vector<8x128xf32>
      %755 = arith.mulf %754, %753 : vector<8x128xf32>
      %756 = arith.addf %747, %755 : vector<8x128xf32>
      %c6_i32_252 = arith.constant 6 : i32
      %757 = vector.broadcast %c6_i32_252 : i32 to vector<1x128xi32>
      %758 = arith.cmpi eq, %694, %757 : vector<1x128xi32>
      %cst_253 = arith.constant 1.000000e+00 : f32
      %cst_254 = arith.constant 0.000000e+00 : f32
      %759 = vector.broadcast %cst_253 : f32 to vector<1x128xf32>
      %760 = vector.broadcast %cst_254 : f32 to vector<1x128xf32>
      %761 = arith.select %758, %759, %760 : vector<1x128xi1>, vector<1x128xf32>
      %762 = vector.extract_strided_slice %701 {offsets = [48, 0], sizes = [8, 128], strides = [1, 1]} : vector<64x128xf32> to vector<8x128xf32>
      %763 = vector.broadcast %761 : vector<1x128xf32> to vector<8x128xf32>
      %764 = arith.mulf %763, %762 : vector<8x128xf32>
      %765 = arith.addf %756, %764 : vector<8x128xf32>
      %c7_i32_255 = arith.constant 7 : i32
      %766 = vector.broadcast %c7_i32_255 : i32 to vector<1x128xi32>
      %767 = arith.cmpi eq, %694, %766 : vector<1x128xi32>
      %cst_256 = arith.constant 1.000000e+00 : f32
      %cst_257 = arith.constant 0.000000e+00 : f32
      %768 = vector.broadcast %cst_256 : f32 to vector<1x128xf32>
      %769 = vector.broadcast %cst_257 : f32 to vector<1x128xf32>
      %770 = arith.select %767, %768, %769 : vector<1x128xi1>, vector<1x128xf32>
      %771 = vector.extract_strided_slice %701 {offsets = [56, 0], sizes = [8, 128], strides = [1, 1]} : vector<64x128xf32> to vector<8x128xf32>
      %772 = vector.broadcast %770 : vector<1x128xf32> to vector<8x128xf32>
      %773 = arith.mulf %772, %771 : vector<8x128xf32>
      %774 = arith.addf %765, %773 : vector<8x128xf32>
      %775 = vector.broadcast %695 : vector<1x128xf32> to vector<8x128xf32>
      %776 = arith.mulf %775, %774 : vector<8x128xf32>
      %777 = arith.addf %686, %776 : vector<8x128xf32>
      %cst_258 = arith.constant 0.000000e+00 : f32
      %778 = vector.broadcast %cst_258 : f32 to vector<2x128xf32>
      %779 = vector.extract_strided_slice %3 {offsets = [0, 0], sizes = [1, 128], strides = [1, 1]} : vector<4x128xf32> to vector<1x128xf32>
      %780 = vector.extract_strided_slice %777 {offsets = [0, 0], sizes = [2, 128], strides = [1, 1]} : vector<8x128xf32> to vector<2x128xf32>
      %781 = vector.broadcast %779 : vector<1x128xf32> to vector<2x128xf32>
      %782 = arith.mulf %781, %780 : vector<2x128xf32>
      %783 = arith.addf %778, %782 : vector<2x128xf32>
      %784 = vector.extract_strided_slice %3 {offsets = [1, 0], sizes = [1, 128], strides = [1, 1]} : vector<4x128xf32> to vector<1x128xf32>
      %785 = vector.extract_strided_slice %777 {offsets = [2, 0], sizes = [2, 128], strides = [1, 1]} : vector<8x128xf32> to vector<2x128xf32>
      %786 = vector.broadcast %784 : vector<1x128xf32> to vector<2x128xf32>
      %787 = arith.mulf %786, %785 : vector<2x128xf32>
      %788 = arith.addf %783, %787 : vector<2x128xf32>
      %789 = vector.extract_strided_slice %3 {offsets = [2, 0], sizes = [1, 128], strides = [1, 1]} : vector<4x128xf32> to vector<1x128xf32>
      %790 = vector.extract_strided_slice %777 {offsets = [4, 0], sizes = [2, 128], strides = [1, 1]} : vector<8x128xf32> to vector<2x128xf32>
      %791 = vector.broadcast %789 : vector<1x128xf32> to vector<2x128xf32>
      %792 = arith.mulf %791, %790 : vector<2x128xf32>
      %793 = arith.addf %788, %792 : vector<2x128xf32>
      %794 = vector.extract_strided_slice %3 {offsets = [3, 0], sizes = [1, 128], strides = [1, 1]} : vector<4x128xf32> to vector<1x128xf32>
      %795 = vector.extract_strided_slice %777 {offsets = [6, 0], sizes = [2, 128], strides = [1, 1]} : vector<8x128xf32> to vector<2x128xf32>
      %796 = vector.broadcast %794 : vector<1x128xf32> to vector<2x128xf32>
      %797 = arith.mulf %796, %795 : vector<2x128xf32>
      %798 = arith.addf %793, %797 : vector<2x128xf32>
      %799 = arith.index_cast %arg5 : i32 to index
      %c0_259 = arith.constant 0 : index
      %c0_260 = arith.constant 0 : index
      %800 = vector.load %arg4[%799, %c0_259, %c0_260] : memref<16x2x128xf32, #tpu.memory_space<vmem>>, vector<1x2x128xf32>
      %801 = vector.shape_cast %800 : vector<1x2x128xf32> to vector<2x128xf32>
      %802 = vector.shape_cast %798 : vector<2x128xf32> to vector<1x2x128xf32>
      tpu.vector_store %arg4[%799, %c0_259, %c0_260], %802 {strides = array<i32>} : memref<16x2x128xf32, #tpu.memory_space<vmem>>, vector<1x2x128xf32>,
      %cst_261 = arith.constant 1.4472692 : f32
      %803 = arith.mulf %arg6, %cst_261 : f32
      scf.yield %803 : f32
    }
    %c16_i32_5 = arith.constant 16 : i32
    return
  }
  func.func @transform_0(%arg0: i32) -> (i32, i32) {
    %c0_i32 = arith.constant 0 : i32
    %c0_i32_0 = arith.constant 0 : i32
    return %c0_i32, %arg0 : i32, i32
  }
  func.func @transform_1(%arg0: i32) -> (i32, i32) {
    %c0_i32 = arith.constant 0 : i32
    %c0_i32_0 = arith.constant 0 : i32
    return %c0_i32, %arg0 : i32, i32
  }
  func.func @transform_2(%arg0: i32) -> (i32, i32, i32) {
    %c0_i32 = arith.constant 0 : i32
    %c0_i32_0 = arith.constant 0 : i32
    %c0_i32_1 = arith.constant 0 : i32
    %c0_i32_2 = arith.constant 0 : i32
    return %c0_i32, %c0_i32_0, %c0_i32_1 : i32, i32, i32
  }
  func.func @transform_3(%arg0: i32) -> (i32, i32, i32) {
    %c0_i32 = arith.constant 0 : i32
    %c0_i32_0 = arith.constant 0 : i32
    %c0_i32_1 = arith.constant 0 : i32
    return %c0_i32, %c0_i32_0, %arg0 : i32, i32, i32
  }
}

</mosaic_0001>

<llo_original>
// kernel: tpu_custom_call.1
$region0: #{tpu_custom_call.1}
  #allocation0 [shape = 'u32[]', space=smem, size = 0x4, offset = 0x4, fixed_abs, tag = 'smem constant byte address 0x4 - core index']
  #allocation1 [shape = 'u32[144,128]{1,0:T(1,128)}', space=vmem, size = 0x12000, scoped, tag = 'internal scratch']
  %s0 = inlined_call_operand.hbm [shape: f32[3,512], index: 0, kind: input, shape index: {}]
  %s1 = inlined_call_operand.hbm [shape: f32[4,512], index: 1, kind: input, shape index: {}]
  %s2 = inlined_call_operand.hbm [shape: f32[16,64,128], index: 2, kind: input, shape index: {}]
  %s3 = inlined_call_operand.hbm [shape: f32[16,2,512], index: 3, kind: output, shape index: {}]
  %s4 = sld [smem:[#allocation0]]
  $region64: #{tpu_custom_call.1} parent=0
    _
  %s6 = ssub.s32 1, %s4
  %s7 = scalar_select 0, %s6, %s4
  $region1: #{tpu_custom_call.1} parent=0
    #allocation2 [shape = 'u8[4096]{0}', space=vmem, size = 0x1000, scoped, tag = 'input window, operand 0']
    #allocation3 [shape = 's32[2]{0}', space=sflag, size = 0x8, scoped, tag = 'scoped memory for tpu_custom_call.1']
    #allocation4 [shape = 's32[2]{0}', space=sflag, size = 0x8, scoped, tag = 'scoped memory for tpu_custom_call.1']
    #allocation5 [shape = 'u8[4096]{0}', space=vmem, size = 0x1000, scoped, tag = 'input window, operand 1']
    #allocation6 [shape = 's32[2]{0}', space=sflag, size = 0x8, scoped, tag = 'scoped memory for tpu_custom_call.1']
    #allocation7 [shape = 'u8[524288]{0}', space=vmem, size = 0x80000, scoped, tag = 'input window, operand 2, single buffered']
    #allocation8 [shape = 'u8[32768]{0}', space=vmem, size = 0x8000, scoped, tag = 'output window, operand 0']
    %8 = vsyncpa [#allocation3], 0
    %s9 = scalar_lea.sflag [#allocation3], 1
    %10 = vsyncpa %s9, 0
    %11 = vsyncpa [#allocation6], 0
    %s12 = scalar_lea.sflag [#allocation6], 1
    %13 = vsyncpa %s12, 0
    %14 = vsyncpa [#allocation4], 0
    %s15 = scalar_lea.sflag [#allocation4], 1
    %16 = vsyncpa %s15, 0
    loop: start=0, step=1, limit=6
    $region2: #{tpu_custom_call.1} parent=1 // loop_pre_header
      _
    $region3: #{tpu_custom_call.1} parent=1 // loop_header
      %s18 = sphi 0, %s22
      %p19 = scmp.ge.s32.totalorder %s18, 6
      %s28 = sphi 0, %s30
      %s31 = sphi 0, %s28
      %s32 = sphi 0, %s31
      %s48 = sphi 0, %s32
      %s54 = sphi 0, %s56
      %s57 = sphi 0, %s54
      %s58 = sphi 0, %s57
      %s74 = sphi 0, %s58
      %s78 = sphi 0, %s78
      %s80 = sphi 0, %s78
      %s81 = sphi 0, %s80
      %s95 = sphi 0, %s81
      %s101 = sphi 0, %s103
      %s104 = sphi 0, %s101
      %s105 = sphi 0, %s104
      %s121 = sphi 0, %s105
    $region4: #{tpu_custom_call.1} parent=1 // loop_header_branch
      %21 = sbr.rel (%p19) target = $region8
    $region5: #{tpu_custom_call.1} parent=1 // loop_body
      %s23 = ssub.s32 %s18, 1
      %s24 = ssub.s32 %s18, 2
      %s25 = sadd.s32 %s18, 1
      %s26 = ssub.s32 %s18, %s25
      %p27 = scmp.eq.s32.totalorder %s26, 0
      %s29 = sadd.s32 %s28, 1
      %s30 = scalar_select %p27, %s28, %s29
      %p33 = pneg %p27
      %p34 = scmp.eq.s32.totalorder %s18, 3
      %p35 = por %p33, %p34
      %p36 = scmp.ne.s32.totalorder %s28, %s31
      %p37 = scmp.eq.s32.totalorder %s18, 0
      %p38 = por %p36, %p37
      %p39 = scmp.ne.s32.totalorder %s28, %s31
      %p40 = scmp.eq.s32.totalorder %s23, 3
      %p41 = por %p39, %p40
      %p42 = scmp.ne.s32.totalorder %s31, %s32
      %p43 = scmp.eq.s32.totalorder %s23, 0
      %p44 = por %p42, %p43
      %p45 = scmp.ne.s32.totalorder %s31, %s32
      %p46 = scmp.eq.s32.totalorder %s24, 3
      %p47 = por %p45, %p46
      %p49 = scmp.ne.s32.totalorder %s32, %s48
      %p50 = scmp.eq.s32.totalorder %s24, 0
      %p51 = por %p49, %p50
      %s52 = ssub.s32 %s18, %s25
      %p53 = scmp.eq.s32.totalorder %s52, 0
      %s55 = sadd.s32 %s54, 1
      %s56 = scalar_select %p53, %s54, %s55
      %p59 = pneg %p53
      %p60 = scmp.eq.s32.totalorder %s18, 3
      %p61 = por %p59, %p60
      %p62 = scmp.ne.s32.totalorder %s54, %s57
      %p63 = scmp.eq.s32.totalorder %s18, 0
      %p64 = por %p62, %p63
      %p65 = scmp.ne.s32.totalorder %s54, %s57
      %p66 = scmp.eq.s32.totalorder %s23, 3
      %p67 = por %p65, %p66
      %p68 = scmp.ne.s32.totalorder %s57, %s58
      %p69 = scmp.eq.s32.totalorder %s23, 0
      %p70 = por %p68, %p69
      %p71 = scmp.ne.s32.totalorder %s57, %s58
      %p72 = scmp.eq.s32.totalorder %s24, 3
      %p73 = por %p71, %p72
      %p75 = scmp.ne.s32.totalorder %s58, %s74
      %p76 = scmp.eq.s32.totalorder %s24, 0
      %p77 = por %p75, %p76
      %s79 = sadd.s32 %s78, 1
      %p82 = scmp.eq.s32.totalorder %s18, 3
      %p83 = scmp.ne.s32.totalorder %s78, %s80
      %p84 = scmp.eq.s32.totalorder %s18, 0
      %p85 = por %p83, %p84
      %p86 = scmp.ne.s32.totalorder %s78, %s80
      %p87 = scmp.eq.s32.totalorder %s23, 3
      %p88 = por %p86, %p87
      %p89 = scmp.ne.s32.totalorder %s80, %s81
      %p90 = scmp.eq.s32.totalorder %s23, 0
      %p91 = por %p89, %p90
      %p92 = scmp.ne.s32.totalorder %s80, %s81
      %p93 = scmp.eq.s32.totalorder %s24, 3
      %p94 = por %p92, %p93
      %p96 = scmp.ne.s32.totalorder %s81, %s95
      %p97 = scmp.eq.s32.totalorder %s24, 0
      %p98 = por %p96, %p97
      %s99 = ssub.s32 %s18, %s25
      %p100 = scmp.eq.s32.totalorder %s99, 0
      %s102 = sadd.s32 %s101, 1
      %s103 = scalar_select %p100, %s101, %s102
      %p106 = pneg %p100
      %p107 = scmp.eq.s32.totalorder %s18, 3
      %p108 = por %p106, %p107
      %p109 = scmp.ne.s32.totalorder %s101, %s104
      %p110 = scmp.eq.s32.totalorder %s18, 0
      %p111 = por %p109, %p110
      %p112 = scmp.ne.s32.totalorder %s101, %s104
      %p113 = scmp.eq.s32.totalorder %s23, 3
      %p114 = por %p112, %p113
      %p115 = scmp.ne.s32.totalorder %s104, %s105
      %p116 = scmp.eq.s32.totalorder %s23, 0
      %p117 = por %p115, %p116
      %p118 = scmp.ne.s32.totalorder %s104, %s105
      %p119 = scmp.eq.s32.totalorder %s24, 3
      %p120 = por %p118, %p119
      %p122 = scmp.ne.s32.totalorder %s105, %s121
      %p123 = scmp.eq.s32.totalorder %s24, 0
      %p124 = por %p122, %p123
      %p125 = scmp.le.s32.totalorder 1, %s18
      %p126 = scmp.lt.s32.totalorder %s18, 5
      %p127 = pnand %p125, %p126
      %p128 = pneg %p127
      // Predicated region
      $region9: #{tpu_custom_call.1} parent=5 // pred_check
        _
      $region10: #{tpu_custom_call.1} parent=5 // pred_check_branch
        %130 = sbr.rel (%p127) target = $region12
      $region11: #{tpu_custom_call.1} parent=5 // pred_region
        %s131 = ssub.s32 %s18, 1
        // Predicated region
        $region13: #{tpu_custom_call.1} parent=11 // pred_check
          %p132 = pneg %p91
        $region14: #{tpu_custom_call.1} parent=11 // pred_check_branch
          %134 = sbr.rel (%p132) target = $region16
        $region15: #{tpu_custom_call.1} parent=11 // pred_region
          %s136 = ssub.s32 16384, 16384
          %137 = vsyncadd [#allocation6], %s136
          %s138 = sshll.u32 [#allocation7], 4
          %s139 = int_to_ptr.vmem [resolvable:$true] %s138
          %144 = dma.hbm_to_vmem [thread:$0]  %s2, 16384, %s139, [#allocation6], 128, 128, 8
        $region16: #{tpu_custom_call.1} parent=11 // pred_fallthru
          _
      $region12: #{tpu_custom_call.1} parent=5 // pred_fallthru
        _
      %p145 = scmp.lt.s32.totalorder %s18, 4
      // Predicated region
      $region17: #{tpu_custom_call.1} parent=5 // pred_check
        %p146 = pneg %p145
      $region18: #{tpu_custom_call.1} parent=5 // pred_check_branch
        %148 = sbr.rel (%p146) target = $region20
      $region19: #{tpu_custom_call.1} parent=5 // pred_region
        // Predicated region
        $region21: #{tpu_custom_call.1} parent=19 // pred_check
          %p149 = pneg %p38
        $region22: #{tpu_custom_call.1} parent=19 // pred_check_branch
          %151 = sbr.rel (%p149) target = $region24
        $region23: #{tpu_custom_call.1} parent=19 // pred_region
          %s152 = sand.u32 %s28, 1
          %s153 = scalar_lea.sflag [#allocation3], %s152
          %s154 = sand.u32 %s28, 1
          %s155 = smul.addr %s154, 4
          %s156 = scalar_lea.vmem [#allocation2], %s155
          %s158 = ssub.s32 64, 64
          %159 = vsyncadd %s153, %s158
          %s160 = smul.addr %s18, 64
          %s161 = scalar_lea.hbm %s0, %s160
          %s163 = sshll.u32 %s156, 4
          %s164 = int_to_ptr.vmem [resolvable:$true] %s163
          %166 = dma.hbm_to_vmem [thread:$0]  %s161, 64, %s164, %s153
        $region24: #{tpu_custom_call.1} parent=19 // pred_fallthru
          _
        // Predicated region
        $region25: #{tpu_custom_call.1} parent=19 // pred_check
          %p167 = pneg %p64
        $region26: #{tpu_custom_call.1} parent=19 // pred_check_branch
          %169 = sbr.rel (%p167) target = $region28
        $region27: #{tpu_custom_call.1} parent=19 // pred_region
          %s170 = sand.u32 %s18, 1
          %s171 = scalar_lea.sflag [#allocation6], %s170
          %s172 = sand.u32 %s54, 1
          %s173 = smul.addr %s172, 4
          %s174 = scalar_lea.vmem [#allocation5], %s173
          %s176 = ssub.s32 64, 64
          %177 = vsyncadd %s171, %s176
          %s178 = smul.addr %s18, 64
          %s179 = scalar_lea.hbm %s1, %s178
          %s181 = sshll.u32 %s174, 4
          %s182 = int_to_ptr.vmem [resolvable:$true] %s181
          %184 = dma.hbm_to_vmem [thread:$0]  %s179, 64, %s182, %s171
        $region28: #{tpu_custom_call.1} parent=19 // pred_fallthru
          _
      $region20: #{tpu_custom_call.1} parent=5 // pred_fallthru
        _
      %p185 = scmp.le.s32.totalorder 1, %s18
      %p186 = scmp.lt.s32.totalorder %s18, 5
      %p187 = pnand %p185, %p186
      %p188 = pneg %p187
      // Predicated region
      $region29: #{tpu_custom_call.1} parent=5 // pred_check
        _
      $region30: #{tpu_custom_call.1} parent=5 // pred_check_branch
        %190 = sbr.rel (%p187) target = $region32
      $region31: #{tpu_custom_call.1} parent=5 // pred_region
        %s191 = ssub.s32 %s18, 1
        %s192 = sand.u32 %s31, 1
        %s193 = scalar_lea.sflag [#allocation3], %s192
        %s194 = sand.u32 %s31, 1
        %s195 = smul.addr %s194, 4
        %s196 = scalar_lea.vmem [#allocation2], %s195
        // Predicated region
        $region33: #{tpu_custom_call.1} parent=31 // pred_check
          %p197 = pneg %p44
        $region34: #{tpu_custom_call.1} parent=31 // pred_check_branch
          %199 = sbr.rel (%p197) target = $region36
        $region35: #{tpu_custom_call.1} parent=31 // pred_region
          %200 = dma.done %s193, 64
        $region36: #{tpu_custom_call.1} parent=31 // pred_fallthru
          _
        %s201 = sand.u32 %s23, 1
        %s202 = scalar_lea.sflag [#allocation6], %s201
        %s203 = sand.u32 %s57, 1
        %s204 = smul.addr %s203, 4
        %s205 = scalar_lea.vmem [#allocation5], %s204
        // Predicated region
        $region37: #{tpu_custom_call.1} parent=31 // pred_check
          %p206 = pneg %p70
        $region38: #{tpu_custom_call.1} parent=31 // pred_check_branch
          %208 = sbr.rel (%p206) target = $region40
        $region39: #{tpu_custom_call.1} parent=31 // pred_region
          %209 = dma.done %s202, 64
        $region40: #{tpu_custom_call.1} parent=31 // pred_fallthru
          _
        // Predicated region
        $region41: #{tpu_custom_call.1} parent=31 // pred_check
          %p210 = pneg %p91
        $region42: #{tpu_custom_call.1} parent=31 // pred_check_branch
          %212 = sbr.rel (%p210) target = $region44
        $region43: #{tpu_custom_call.1} parent=31 // pred_region
          %213 = dma.done [#allocation6], 16384
        $region44: #{tpu_custom_call.1} parent=31 // pred_fallthru
          _
        %s214 = sand.u32 %s31, 1
        %s215 = scalar_lea.sflag [#allocation3], %s214
        %s216 = sand.u32 %s31, 1
        %s217 = smul.addr %s216, 4
        %s218 = scalar_lea.vmem [#allocation2], %s217
        %p219 = pneg %p44
        %p220 = pneg %p41
        %s221 = sand.u32 %s23, 1
        %s222 = scalar_lea.sflag [#allocation6], %s221
        %s223 = sand.u32 %s57, 1
        %s224 = smul.addr %s223, 4
        %s225 = scalar_lea.vmem [#allocation5], %s224
        %p226 = pneg %p70
        %p227 = pneg %p67
        %p228 = pneg %p91
        %p229 = pneg %p88
        %p230 = pneg %p117
        %p231 = pneg %p114
        %s232 = sand.u32 %s104, 1
        %s233 = scalar_lea.sflag [#allocation4], %s232
        %s234 = sand.u32 %s104, 1
        %s235 = smul.addr %s234, 32
        %s236 = scalar_lea.vmem [#allocation8], %s235
        %v237 = vld [vmem:[%s196] sm:$0x1]
        %v238 = vld [vmem:[%s196 + $0x1] sm:$0x1]
        %v239 = vld [vmem:[%s196 + $0x2] sm:$0x1]
        %v240 = vld [vmem:[%s205] sm:$0xf]
        %v241 = vlaneseq
        %v242 = vshrl.u32 %v241, 7
        %v243 = vadd.s32 %v242, 8
        %v244 = vadd.s32 %v242, 16
        %v245 = vadd.s32 %v242, 24
        %v246 = vadd.s32 %v242, 32
        %v247 = vadd.s32 %v242, 40
        %v248 = vadd.s32 %v242, 48
        %v249 = vadd.s32 %v242, 56
        %v250 = vadd.s32 %v242, 64
        %v251 = vadd.s32 %v242, 72
        %v252 = vadd.s32 %v242, 80
        %v253 = vadd.s32 %v242, 88
        %v254 = vadd.s32 %v242, 96
        %v255 = vadd.s32 %v242, 104
        %v256 = vadd.s32 %v242, 112
        %v257 = vadd.s32 %v242, 120
        loop: start=0, step=1, limit=16
        $region45: #{tpu_custom_call.1} parent=31 // loop_pre_header
          _
        $region46: #{tpu_custom_call.1} parent=31 // loop_header
          %s259 = sphi 0, %s263
          %p260 = scmp.ge.s32.totalorder %s259, 16
          %s264 = sphi 16.0, %s2070
        $region47: #{tpu_custom_call.1} parent=31 // loop_header_branch
          %262 = sbr.rel (%p260) target = $region51
        $region48: #{tpu_custom_call.1} parent=31 // loop_body
          %s265 = smul.u32 %s259, 64
          %s266 = scalar_lea.vmem [#allocation7], %s265
          %v267 = vld [vmem:[%s266] sm:$0xff]
          %v268 = vld [vmem:[%s266 + $0x8] sm:$0xff]
          %v269 = vld [vmem:[%s266 + $0x10] sm:$0xff]
          %v270 = vld [vmem:[%s266 + $0x18] sm:$0xff]
          %v271 = vld [vmem:[%s266 + $0x20] sm:$0xff]
          %v272 = vld [vmem:[%s266 + $0x28] sm:$0xff]
          %v273 = vld [vmem:[%s266 + $0x30] sm:$0xff]
          %v274 = vld [vmem:[%s266 + $0x38] sm:$0xff]
          %v275 = vstv %s264
          %v276 = vmul.f32 %v237, %v275
          %v277 = vfloor.f32 %v276
          %v278 = vcvt.f32.s32.to.zero.pseudo %v277
          %v279 = vsub.f32 %v276, %v277
          %v280 = vmul.f32 %v238, %v275
          %v281 = vfloor.f32 %v280
          %v282 = vcvt.f32.s32.to.zero.pseudo %v281
          %v283 = vsub.f32 %v280, %v281
          %v284 = vmul.f32 %v239, %v275
          %v285 = vfloor.f32 %v284
          %v286 = vcvt.f32.s32.to.zero.pseudo %v285
          %v287 = vsub.f32 %v284, %v285
          %v288 = vadd.s32 %v278, 1
          %v289 = vmul.u32 %v282, 2654435761
          %v290 = vadd.s32 %v282, 1
          %v291 = vmul.u32 %v290, 2654435761
          %v292 = vmul.u32 %v286, 805459861
          %v293 = vadd.s32 %v286, 1
          %v294 = vmul.u32 %v293, 805459861
          %v295 = vsub.f32 1.0, %v279
          %v296 = vsub.f32 1.0, %v283
          %v297 = vsub.f32 1.0, %v287
          %v298 = vmul.f32 %v296, %v297
          %v299 = vmul.f32 %v296, %v287
          %v300 = vmul.f32 %v283, %v297
          %v301 = vmul.f32 %v283, %v287
          %v302 = vxor.u32 %v278, %v289
          %v303 = vxor.u32 %v302, %v292
          %v304 = vand.u32 %v303, 1023
          %v305 = vshra.s32 %v304, 3
          %v306 = vand.u32 %v304, 7
          %v307 = vmul.f32 %v295, %v298
          %v308 = vlaneseq
          %v309 = vshrl.u32 %v308, 7
          %v310 = vsub.s32 0, %v309
          %v311 = vrot.slane %v305, %v310
          %vm312 = vcmp.eq.s32.totalorder %v242, %v311
          %vm313 = vcmp.eq.s32.totalorder %v243, %v311
          %vm314 = vcmp.eq.s32.totalorder %v244, %v311
          %vm315 = vcmp.eq.s32.totalorder %v245, %v311
          %vm316 = vcmp.eq.s32.totalorder %v246, %v311
          %vm317 = vcmp.eq.s32.totalorder %v247, %v311
          %vm318 = vcmp.eq.s32.totalorder %v248, %v311
          %vm319 = vcmp.eq.s32.totalorder %v249, %v311
          %vm320 = vcmp.eq.s32.totalorder %v250, %v311
          %vm321 = vcmp.eq.s32.totalorder %v251, %v311
          %vm322 = vcmp.eq.s32.totalorder %v252, %v311
          %vm323 = vcmp.eq.s32.totalorder %v253, %v311
          %vm324 = vcmp.eq.s32.totalorder %v254, %v311
          %vm325 = vcmp.eq.s32.totalorder %v255, %v311
          %vm326 = vcmp.eq.s32.totalorder %v256, %v311
          %vm327 = vcmp.eq.s32.totalorder %v257, %v311
          %v328 = vsel %vm312, 1.0, 0.0
          %v329 = vsel %vm313, 1.0, 0.0
          %v330 = vsel %vm314, 1.0, 0.0
          %v331 = vsel %vm315, 1.0, 0.0
          %v332 = vsel %vm316, 1.0, 0.0
          %v333 = vsel %vm317, 1.0, 0.0
          %v334 = vsel %vm318, 1.0, 0.0
          %v335 = vsel %vm319, 1.0, 0.0
          %v336 = vsel %vm320, 1.0, 0.0
          %v337 = vsel %vm321, 1.0, 0.0
          %v338 = vsel %vm322, 1.0, 0.0
          %v339 = vsel %vm323, 1.0, 0.0
          %v340 = vsel %vm324, 1.0, 0.0
          %v341 = vsel %vm325, 1.0, 0.0
          %v342 = vsel %vm326, 1.0, 0.0
          %v343 = vsel %vm327, 1.0, 0.0
          %344 = vmatprep.subr.mxu0 0.0
          %345 = vmatpush1.msra.mxu0 %v328
          %346 = vmatprep.subr.mxu0 0.0
          %347 = vmatpush1.msra.mxu0 %v329
          %348 = vmatprep.subr.mxu0 0.0
          %349 = vmatpush1.msra.mxu0 %v330
          %350 = vmatprep.subr.mxu0 0.0
          %351 = vmatpush1.msra.mxu0 %v331
          %352 = vmatprep.subr.mxu0 0.0
          %353 = vmatpush1.msra.mxu0 %v332
          %354 = vmatprep.subr.mxu0 0.0
          %355 = vmatpush1.msra.mxu0 %v333
          %356 = vmatprep.subr.mxu0 0.0
          %357 = vmatpush1.msra.mxu0 %v334
          %358 = vmatprep.subr.mxu0 0.0
          %359 = vmatpush1.msra.mxu0 %v335
          %360 = vmatprep.subr.mxu0 0.0
          %361 = vmatpush1.msra.mxu0 %v336
          %362 = vmatprep.subr.mxu0 0.0
          %363 = vmatpush1.msra.mxu0 %v337
          %364 = vmatprep.subr.mxu0 0.0
          %365 = vmatpush1.msra.mxu0 %v338
          %366 = vmatprep.subr.mxu0 0.0
          %367 = vmatpush1.msra.mxu0 %v339
          %368 = vmatprep.subr.mxu0 0.0
          %369 = vmatpush1.msra.mxu0 %v340
          %370 = vmatprep.subr.mxu0 0.0
          %371 = vmatpush1.msra.mxu0 %v341
          %372 = vmatprep.subr.mxu0 0.0
          %373 = vmatpush1.msra.mxu0 %v342
          %374 = vmatprep.subr.mxu0 0.0
          %375 = vmatpush1.msra.mxu0 %v343
          %376 = vmatprep.subr.mxu0 0.0
          %377 = vmatpush1.msra.mxu0 0.0
          %378 = vmatprep.subr.mxu0 0.0
          %379 = vmatpush1.msra.mxu0 0.0
          %380 = vmatprep.subr.mxu0 0.0
          %381 = vmatpush1.msra.mxu0 0.0
          %382 = vmatprep.subr.mxu0 0.0
          %383 = vmatpush1.msra.mxu0 0.0
          %384 = vmatprep.subr.mxu0 0.0
          %385 = vmatpush1.msra.mxu0 0.0
          %386 = vmatprep.subr.mxu0 0.0
          %387 = vmatpush1.msra.mxu0 0.0
          %388 = vmatprep.subr.mxu0 0.0
          %389 = vmatpush1.msra.mxu0 0.0
          %390 = vmatprep.subr.mxu0 0.0
          %391 = vmatpush1.msra.mxu0 0.0
          %392 = vmatprep.subr.mxu0 0.0
          %393 = vmatpush1.msra.mxu0 0.0
          %394 = vmatprep.subr.mxu0 0.0
          %395 = vmatpush1.msra.mxu0 0.0
          %396 = vmatprep.subr.mxu0 0.0
          %397 = vmatpush1.msra.mxu0 0.0
          %398 = vmatprep.subr.mxu0 0.0
          %399 = vmatpush1.msra.mxu0 0.0
          %400 = vmatprep.subr.mxu0 0.0
          %401 = vmatpush1.msra.mxu0 0.0
          %402 = vmatprep.subr.mxu0 0.0
          %403 = vmatpush1.msra.mxu0 0.0
          %404 = vmatprep.subr.mxu0 0.0
          %405 = vmatpush1.msra.mxu0 0.0
          %406 = vmatprep.subr.mxu0 0.0
          %407 = vmatpush1.msra.mxu0 0.0
          %408 = vmatprep.mubr.f32.mxu0 0.0
          %409 = vmatmul.mubr.f32.gmra.mrb[0].mxu0 %v267
          %v410 = vpop.f32.mrb[0].mxu0
          %v411 = vadd.f32 0.0, %v410
          %v412 = vpop.f32.mrb[0].mxu0
          %413 = vmatprep.mubr.f32.mxu0 0.0
          %414 = vmatmul.mubr.f32.gmra.mrb[0].mxu0 %v268
          %v415 = vpop.f32.mrb[0].mxu0
          %v416 = vadd.f32 0.0, %v415
          %v417 = vpop.f32.mrb[0].mxu0
          %418 = vmatprep.mubr.f32.mxu0 0.0
          %419 = vmatmul.mubr.f32.gmra.mrb[0].mxu0 %v269
          %v420 = vpop.f32.mrb[0].mxu0
          %v421 = vadd.f32 0.0, %v420
          %v422 = vpop.f32.mrb[0].mxu0
          %423 = vmatprep.mubr.f32.mxu0 0.0
          %424 = vmatmul.mubr.f32.gmra.mrb[0].mxu0 %v270
          %v425 = vpop.f32.mrb[0].mxu0
          %v426 = vadd.f32 0.0, %v425
          %v427 = vpop.f32.mrb[0].mxu0
          %428 = vmatprep.mubr.f32.mxu0 0.0
          %429 = vmatmul.mubr.f32.gmra.mrb[0].mxu0 %v271
          %v430 = vpop.f32.mrb[0].mxu0
          %v431 = vadd.f32 0.0, %v430
          %v432 = vpop.f32.mrb[0].mxu0
          %433 = vmatprep.mubr.f32.mxu0 0.0
          %434 = vmatmul.mubr.f32.gmra.mrb[0].mxu0 %v272
          %v435 = vpop.f32.mrb[0].mxu0
          %v436 = vadd.f32 0.0, %v435
          %v437 = vpop.f32.mrb[0].mxu0
          %438 = vmatprep.mubr.f32.mxu0 0.0
          %439 = vmatmul.mubr.f32.gmra.mrb[0].mxu0 %v273
          %v440 = vpop.f32.mrb[0].mxu0
          %v441 = vadd.f32 0.0, %v440
          %v442 = vpop.f32.mrb[0].mxu0
          %443 = vmatprep.mubr.f32.mxu0 0.0
          %444 = vmatmul.mubr.f32.gmra.mrb[0].mxu0 %v274
          %v445 = vpop.f32.mrb[0].mxu0
          %v446 = vadd.f32 0.0, %v445
          %v447 = vpop.f32.mrb[0].mxu0
          %448 = vdwg.mxu0
          %vm449 = vcmp.eq.s32.totalorder %v306, 0
          %v450 = vsel %vm449, 1.0, 0.0
          %v451 = vlaneseq
          %v452 = vshrl.u32 %v451, 7
          %v453 = vsub.s32 0, %v452
          %v454 = vrot.slane %v450, %v453
          %v455 = vmul.f32 %v454, %v411
          %v456 = vadd.f32 %v455, 0.0
          %vm457 = vcmp.eq.s32.totalorder %v306, 1
          %v458 = vsel %vm457, 1.0, 0.0
          %v459 = vlaneseq
          %v460 = vshrl.u32 %v459, 7
          %v461 = vsub.s32 0, %v460
          %v462 = vrot.slane %v458, %v461
          %v463 = vmul.f32 %v462, %v416
          %v464 = vadd.f32 %v456, %v463
          %vm465 = vcmp.eq.s32.totalorder %v306, 2
          %v466 = vsel %vm465, 1.0, 0.0
          %v467 = vlaneseq
          %v468 = vshrl.u32 %v467, 7
          %v469 = vsub.s32 0, %v468
          %v470 = vrot.slane %v466, %v469
          %v471 = vmul.f32 %v470, %v421
          %v472 = vadd.f32 %v464, %v471
          %vm473 = vcmp.eq.s32.totalorder %v306, 3
          %v474 = vsel %vm473, 1.0, 0.0
          %v475 = vlaneseq
          %v476 = vshrl.u32 %v475, 7
          %v477 = vsub.s32 0, %v476
          %v478 = vrot.slane %v474, %v477
          %v479 = vmul.f32 %v478, %v426
          %v480 = vadd.f32 %v472, %v479
          %vm481 = vcmp.eq.s32.totalorder %v306, 4
          %v482 = vsel %vm481, 1.0, 0.0
          %v483 = vlaneseq
          %v484 = vshrl.u32 %v483, 7
          %v485 = vsub.s32 0, %v484
          %v486 = vrot.slane %v482, %v485
          %v487 = vmul.f32 %v486, %v431
          %v488 = vadd.f32 %v480, %v487
          %vm489 = vcmp.eq.s32.totalorder %v306, 5
          %v490 = vsel %vm489, 1.0, 0.0
          %v491 = vlaneseq
          %v492 = vshrl.u32 %v491, 7
          %v493 = vsub.s32 0, %v492
          %v494 = vrot.slane %v490, %v493
          %v495 = vmul.f32 %v494, %v436
          %v496 = vadd.f32 %v488, %v495
          %vm497 = vcmp.eq.s32.totalorder %v306, 6
          %v498 = vsel %vm497, 1.0, 0.0
          %v499 = vlaneseq
          %v500 = vshrl.u32 %v499, 7
          %v501 = vsub.s32 0, %v500
          %v502 = vrot.slane %v498, %v501
          %v503 = vmul.f32 %v502, %v441
          %v504 = vadd.f32 %v496, %v503
          %vm505 = vcmp.eq.s32.totalorder %v306, 7
          %v506 = vsel %vm505, 1.0, 0.0
          %v507 = vlaneseq
          %v508 = vshrl.u32 %v507, 7
          %v509 = vsub.s32 0, %v508
          %v510 = vrot.slane %v506, %v509
          %v511 = vmul.f32 %v510, %v446
          %v512 = vadd.f32 %v504, %v511
          %v513 = vlaneseq
          %v514 = vshrl.u32 %v513, 7
          %v515 = vsub.s32 0, %v514
          %v516 = vrot.slane %v307, %v515
          %v517 = vmul.f32 %v516, %v512
          %v518 = vadd.f32 %v517, 0.0
          %v519 = vxor.u32 %v288, %v289
          %v520 = vxor.u32 %v519, %v292
          %v521 = vand.u32 %v520, 1023
          %v522 = vshra.s32 %v521, 3
          %v523 = vand.u32 %v521, 7
          %v524 = vmul.f32 %v279, %v298
          %v525 = vlaneseq
          %v526 = vshrl.u32 %v525, 7
          %v527 = vsub.s32 0, %v526
          %v528 = vrot.slane %v522, %v527
          %vm529 = vcmp.eq.s32.totalorder %v242, %v528
          %vm530 = vcmp.eq.s32.totalorder %v243, %v528
          %vm531 = vcmp.eq.s32.totalorder %v244, %v528
          %vm532 = vcmp.eq.s32.totalorder %v245, %v528
          %vm533 = vcmp.eq.s32.totalorder %v246, %v528
          %vm534 = vcmp.eq.s32.totalorder %v247, %v528
          %vm535 = vcmp.eq.s32.totalorder %v248, %v528
          %vm536 = vcmp.eq.s32.totalorder %v249, %v528
          %vm537 = vcmp.eq.s32.totalorder %v250, %v528
          %vm538 = vcmp.eq.s32.totalorder %v251, %v528
          %vm539 = vcmp.eq.s32.totalorder %v252, %v528
          %vm540 = vcmp.eq.s32.totalorder %v253, %v528
          %vm541 = vcmp.eq.s32.totalorder %v254, %v528
          %vm542 = vcmp.eq.s32.totalorder %v255, %v528
          %vm543 = vcmp.eq.s32.totalorder %v256, %v528
          %vm544 = vcmp.eq.s32.totalorder %v257, %v528
          %v545 = vsel %vm529, 1.0, 0.0
          %v546 = vsel %vm530, 1.0, 0.0
          %v547 = vsel %vm531, 1.0, 0.0
          %v548 = vsel %vm532, 1.0, 0.0
          %v549 = vsel %vm533, 1.0, 0.0
          %v550 = vsel %vm534, 1.0, 0.0
          %v551 = vsel %vm535, 1.0, 0.0
          %v552 = vsel %vm536, 1.0, 0.0
          %v553 = vsel %vm537, 1.0, 0.0
          %v554 = vsel %vm538, 1.0, 0.0
          %v555 = vsel %vm539, 1.0, 0.0
          %v556 = vsel %vm540, 1.0, 0.0
          %v557 = vsel %vm541, 1.0, 0.0
          %v558 = vsel %vm542, 1.0, 0.0
          %v559 = vsel %vm543, 1.0, 0.0
          %v560 = vsel %vm544, 1.0, 0.0
          %561 = vmatprep.subr.mxu0 0.0
          %562 = vmatpush1.msra.mxu0 %v545
          %563 = vmatprep.subr.mxu0 0.0
          %564 = vmatpush1.msra.mxu0 %v546
          %565 = vmatprep.subr.mxu0 0.0
          %566 = vmatpush1.msra.mxu0 %v547
          %567 = vmatprep.subr.mxu0 0.0
          %568 = vmatpush1.msra.mxu0 %v548
          %569 = vmatprep.subr.mxu0 0.0
          %570 = vmatpush1.msra.mxu0 %v549
          %571 = vmatprep.subr.mxu0 0.0
          %572 = vmatpush1.msra.mxu0 %v550
          %573 = vmatprep.subr.mxu0 0.0
          %574 = vmatpush1.msra.mxu0 %v551
          %575 = vmatprep.subr.mxu0 0.0
          %576 = vmatpush1.msra.mxu0 %v552
          %577 = vmatprep.subr.mxu0 0.0
          %578 = vmatpush1.msra.mxu0 %v553
          %579 = vmatprep.subr.mxu0 0.0
          %580 = vmatpush1.msra.mxu0 %v554
          %581 = vmatprep.subr.mxu0 0.0
          %582 = vmatpush1.msra.mxu0 %v555
          %583 = vmatprep.subr.mxu0 0.0
          %584 = vmatpush1.msra.mxu0 %v556
          %585 = vmatprep.subr.mxu0 0.0
          %586 = vmatpush1.msra.mxu0 %v557
          %587 = vmatprep.subr.mxu0 0.0
          %588 = vmatpush1.msra.mxu0 %v558
          %589 = vmatprep.subr.mxu0 0.0
          %590 = vmatpush1.msra.mxu0 %v559
          %591 = vmatprep.subr.mxu0 0.0
          %592 = vmatpush1.msra.mxu0 %v560
          %593 = vmatprep.subr.mxu0 0.0
          %594 = vmatpush1.msra.mxu0 0.0
          %595 = vmatprep.subr.mxu0 0.0
          %596 = vmatpush1.msra.mxu0 0.0
          %597 = vmatprep.subr.mxu0 0.0
          %598 = vmatpush1.msra.mxu0 0.0
          %599 = vmatprep.subr.mxu0 0.0
          %600 = vmatpush1.msra.mxu0 0.0
          %601 = vmatprep.subr.mxu0 0.0
          %602 = vmatpush1.msra.mxu0 0.0
          %603 = vmatprep.subr.mxu0 0.0
          %604 = vmatpush1.msra.mxu0 0.0
          %605 = vmatprep.subr.mxu0 0.0
          %606 = vmatpush1.msra.mxu0 0.0
          %607 = vmatprep.subr.mxu0 0.0
          %608 = vmatpush1.msra.mxu0 0.0
          %609 = vmatprep.subr.mxu0 0.0
          %610 = vmatpush1.msra.mxu0 0.0
          %611 = vmatprep.subr.mxu0 0.0
          %612 = vmatpush1.msra.mxu0 0.0
          %613 = vmatprep.subr.mxu0 0.0
          %614 = vmatpush1.msra.mxu0 0.0
          %615 = vmatprep.subr.mxu0 0.0
          %616 = vmatpush1.msra.mxu0 0.0
          %617 = vmatprep.subr.mxu0 0.0
          %618 = vmatpush1.msra.mxu0 0.0
          %619 = vmatprep.subr.mxu0 0.0
          %620 = vmatpush1.msra.mxu0 0.0
          %621 = vmatprep.subr.mxu0 0.0
          %622 = vmatpush1.msra.mxu0 0.0
          %623 = vmatprep.subr.mxu0 0.0
          %624 = vmatpush1.msra.mxu0 0.0
          %625 = vmatprep.mubr.f32.mxu0 0.0
          %626 = vmatmul.mubr.f32.gmra.mrb[0].mxu0 %v267
          %v627 = vpop.f32.mrb[0].mxu0
          %v628 = vadd.f32 0.0, %v627
          %v629 = vpop.f32.mrb[0].mxu0
          %630 = vmatprep.mubr.f32.mxu0 0.0
          %631 = vmatmul.mubr.f32.gmra.mrb[0].mxu0 %v268
          %v632 = vpop.f32.mrb[0].mxu0
          %v633 = vadd.f32 0.0, %v632
          %v634 = vpop.f32.mrb[0].mxu0
          %635 = vmatprep.mubr.f32.mxu0 0.0
          %636 = vmatmul.mubr.f32.gmra.mrb[0].mxu0 %v269
          %v637 = vpop.f32.mrb[0].mxu0
          %v638 = vadd.f32 0.0, %v637
          %v639 = vpop.f32.mrb[0].mxu0
          %640 = vmatprep.mubr.f32.mxu0 0.0
          %641 = vmatmul.mubr.f32.gmra.mrb[0].mxu0 %v270
          %v642 = vpop.f32.mrb[0].mxu0
          %v643 = vadd.f32 0.0, %v642
          %v644 = vpop.f32.mrb[0].mxu0
          %645 = vmatprep.mubr.f32.mxu0 0.0
          %646 = vmatmul.mubr.f32.gmra.mrb[0].mxu0 %v271
          %v647 = vpop.f32.mrb[0].mxu0
          %v648 = vadd.f32 0.0, %v647
          %v649 = vpop.f32.mrb[0].mxu0
          %650 = vmatprep.mubr.f32.mxu0 0.0
          %651 = vmatmul.mubr.f32.gmra.mrb[0].mxu0 %v272
          %v652 = vpop.f32.mrb[0].mxu0
          %v653 = vadd.f32 0.0, %v652
          %v654 = vpop.f32.mrb[0].mxu0
          %655 = vmatprep.mubr.f32.mxu0 0.0
          %656 = vmatmul.mubr.f32.gmra.mrb[0].mxu0 %v273
          %v657 = vpop.f32.mrb[0].mxu0
          %v658 = vadd.f32 0.0, %v657
          %v659 = vpop.f32.mrb[0].mxu0
          %660 = vmatprep.mubr.f32.mxu0 0.0
          %661 = vmatmul.mubr.f32.gmra.mrb[0].mxu0 %v274
          %v662 = vpop.f32.mrb[0].mxu0
          %v663 = vadd.f32 0.0, %v662
          %v664 = vpop.f32.mrb[0].mxu0
          %665 = vdwg.mxu0
          %vm666 = vcmp.eq.s32.totalorder %v523, 0
          %v667 = vsel %vm666, 1.0, 0.0
          %v668 = vlaneseq
          %v669 = vshrl.u32 %v668, 7
          %v670 = vsub.s32 0, %v669
          %v671 = vrot.slane %v667, %v670
          %v672 = vmul.f32 %v671, %v628
          %v673 = vadd.f32 %v672, 0.0
          %vm674 = vcmp.eq.s32.totalorder %v523, 1
          %v675 = vsel %vm674, 1.0, 0.0
          %v676 = vlaneseq
          %v677 = vshrl.u32 %v676, 7
          %v678 = vsub.s32 0, %v677
          %v679 = vrot.slane %v675, %v678
          %v680 = vmul.f32 %v679, %v633
          %v681 = vadd.f32 %v673, %v680
          %vm682 = vcmp.eq.s32.totalorder %v523, 2
          %v683 = vsel %vm682, 1.0, 0.0
          %v684 = vlaneseq
          %v685 = vshrl.u32 %v684, 7
          %v686 = vsub.s32 0, %v685
          %v687 = vrot.slane %v683, %v686
          %v688 = vmul.f32 %v687, %v638
          %v689 = vadd.f32 %v681, %v688
          %vm690 = vcmp.eq.s32.totalorder %v523, 3
          %v691 = vsel %vm690, 1.0, 0.0
          %v692 = vlaneseq
          %v693 = vshrl.u32 %v692, 7
          %v694 = vsub.s32 0, %v693
          %v695 = vrot.slane %v691, %v694
          %v696 = vmul.f32 %v695, %v643
          %v697 = vadd.f32 %v689, %v696
          %vm698 = vcmp.eq.s32.totalorder %v523, 4
          %v699 = vsel %vm698, 1.0, 0.0
          %v700 = vlaneseq
          %v701 = vshrl.u32 %v700, 7
          %v702 = vsub.s32 0, %v701
          %v703 = vrot.slane %v699, %v702
          %v704 = vmul.f32 %v703, %v648
          %v705 = vadd.f32 %v697, %v704
          %vm706 = vcmp.eq.s32.totalorder %v523, 5
          %v707 = vsel %vm706, 1.0, 0.0
          %v708 = vlaneseq
          %v709 = vshrl.u32 %v708, 7
          %v710 = vsub.s32 0, %v709
          %v711 = vrot.slane %v707, %v710
          %v712 = vmul.f32 %v711, %v653
          %v713 = vadd.f32 %v705, %v712
          %vm714 = vcmp.eq.s32.totalorder %v523, 6
          %v715 = vsel %vm714, 1.0, 0.0
          %v716 = vlaneseq
          %v717 = vshrl.u32 %v716, 7
          %v718 = vsub.s32 0, %v717
          %v719 = vrot.slane %v715, %v718
          %v720 = vmul.f32 %v719, %v658
          %v721 = vadd.f32 %v713, %v720
          %vm722 = vcmp.eq.s32.totalorder %v523, 7
          %v723 = vsel %vm722, 1.0, 0.0
          %v724 = vlaneseq
          %v725 = vshrl.u32 %v724, 7
          %v726 = vsub.s32 0, %v725
          %v727 = vrot.slane %v723, %v726
          %v728 = vmul.f32 %v727, %v663
          %v729 = vadd.f32 %v721, %v728
          %v730 = vlaneseq
          %v731 = vshrl.u32 %v730, 7
          %v732 = vsub.s32 0, %v731
          %v733 = vrot.slane %v524, %v732
          %v734 = vmul.f32 %v733, %v729
          %v735 = vadd.f32 %v518, %v734
          %v736 = vxor.u32 %v278, %v291
          %v737 = vxor.u32 %v736, %v292
          %v738 = vand.u32 %v737, 1023
          %v739 = vshra.s32 %v738, 3
          %v740 = vand.u32 %v738, 7
          %v741 = vmul.f32 %v295, %v300
          %v742 = vlaneseq
          %v743 = vshrl.u32 %v742, 7
          %v744 = vsub.s32 0, %v743
          %v745 = vrot.slane %v739, %v744
          %vm746 = vcmp.eq.s32.totalorder %v242, %v745
          %vm747 = vcmp.eq.s32.totalorder %v243, %v745
          %vm748 = vcmp.eq.s32.totalorder %v244, %v745
          %vm749 = vcmp.eq.s32.totalorder %v245, %v745
          %vm750 = vcmp.eq.s32.totalorder %v246, %v745
          %vm751 = vcmp.eq.s32.totalorder %v247, %v745
          %vm752 = vcmp.eq.s32.totalorder %v248, %v745
          %vm753 = vcmp.eq.s32.totalorder %v249, %v745
          %vm754 = vcmp.eq.s32.totalorder %v250, %v745
          %vm755 = vcmp.eq.s32.totalorder %v251, %v745
          %vm756 = vcmp.eq.s32.totalorder %v252, %v745
          %vm757 = vcmp.eq.s32.totalorder %v253, %v745
          %vm758 = vcmp.eq.s32.totalorder %v254, %v745
          %vm759 = vcmp.eq.s32.totalorder %v255, %v745
          %vm760 = vcmp.eq.s32.totalorder %v256, %v745
          %vm761 = vcmp.eq.s32.totalorder %v257, %v745
          %v762 = vsel %vm746, 1.0, 0.0
          %v763 = vsel %vm747, 1.0, 0.0
          %v764 = vsel %vm748, 1.0, 0.0
          %v765 = vsel %vm749, 1.0, 0.0
          %v766 = vsel %vm750, 1.0, 0.0
          %v767 = vsel %vm751, 1.0, 0.0
          %v768 = vsel %vm752, 1.0, 0.0
          %v769 = vsel %vm753, 1.0, 0.0
          %v770 = vsel %vm754, 1.0, 0.0
          %v771 = vsel %vm755, 1.0, 0.0
          %v772 = vsel %vm756, 1.0, 0.0
          %v773 = vsel %vm757, 1.0, 0.0
          %v774 = vsel %vm758, 1.0, 0.0
          %v775 = vsel %vm759, 1.0, 0.0
          %v776 = vsel %vm760, 1.0, 0.0
          %v777 = vsel %vm761, 1.0, 0.0
          %778 = vmatprep.subr.mxu0 0.0
          %779 = vmatpush1.msra.mxu0 %v762
          %780 = vmatprep.subr.mxu0 0.0
          %781 = vmatpush1.msra.mxu0 %v763
          %782 = vmatprep.subr.mxu0 0.0
          %783 = vmatpush1.msra.mxu0 %v764
          %784 = vmatprep.subr.mxu0 0.0
          %785 = vmatpush1.msra.mxu0 %v765
          %786 = vmatprep.subr.mxu0 0.0
          %787 = vmatpush1.msra.mxu0 %v766
          %788 = vmatprep.subr.mxu0 0.0
          %789 = vmatpush1.msra.mxu0 %v767
          %790 = vmatprep.subr.mxu0 0.0
          %791 = vmatpush1.msra.mxu0 %v768
          %792 = vmatprep.subr.mxu0 0.0
          %793 = vmatpush1.msra.mxu0 %v769
          %794 = vmatprep.subr.mxu0 0.0
          %795 = vmatpush1.msra.mxu0 %v770
          %796 = vmatprep.subr.mxu0 0.0
          %797 = vmatpush1.msra.mxu0 %v771
          %798 = vmatprep.subr.mxu0 0.0
          %799 = vmatpush1.msra.mxu0 %v772
          %800 = vmatprep.subr.mxu0 0.0
          %801 = vmatpush1.msra.mxu0 %v773
          %802 = vmatprep.subr.mxu0 0.0
          %803 = vmatpush1.msra.mxu0 %v774
          %804 = vmatprep.subr.mxu0 0.0
          %805 = vmatpush1.msra.mxu0 %v775
          %806 = vmatprep.subr.mxu0 0.0
          %807 = vmatpush1.msra.mxu0 %v776
          %808 = vmatprep.subr.mxu0 0.0
          %809 = vmatpush1.msra.mxu0 %v777
          %810 = vmatprep.subr.mxu0 0.0
          %811 = vmatpush1.msra.mxu0 0.0
          %812 = vmatprep.subr.mxu0 0.0
          %813 = vmatpush1.msra.mxu0 0.0
          %814 = vmatprep.subr.mxu0 0.0
          %815 = vmatpush1.msra.mxu0 0.0
          %816 = vmatprep.subr.mxu0 0.0
          %817 = vmatpush1.msra.mxu0 0.0
          %818 = vmatprep.subr.mxu0 0.0
          %819 = vmatpush1.msra.mxu0 0.0
          %820 = vmatprep.subr.mxu0 0.0
          %821 = vmatpush1.msra.mxu0 0.0
          %822 = vmatprep.subr.mxu0 0.0
          %823 = vmatpush1.msra.mxu0 0.0
          %824 = vmatprep.subr.mxu0 0.0
          %825 = vmatpush1.msra.mxu0 0.0
          %826 = vmatprep.subr.mxu0 0.0
          %827 = vmatpush1.msra.mxu0 0.0
          %828 = vmatprep.subr.mxu0 0.0
          %829 = vmatpush1.msra.mxu0 0.0
          %830 = vmatprep.subr.mxu0 0.0
          %831 = vmatpush1.msra.mxu0 0.0
          %832 = vmatprep.subr.mxu0 0.0
          %833 = vmatpush1.msra.mxu0 0.0
          %834 = vmatprep.subr.mxu0 0.0
          %835 = vmatpush1.msra.mxu0 0.0
          %836 = vmatprep.subr.mxu0 0.0
          %837 = vmatpush1.msra.mxu0 0.0
          %838 = vmatprep.subr.mxu0 0.0
          %839 = vmatpush1.msra.mxu0 0.0
          %840 = vmatprep.subr.mxu0 0.0
          %841 = vmatpush1.msra.mxu0 0.0
          %842 = vmatprep.mubr.f32.mxu0 0.0
          %843 = vmatmul.mubr.f32.gmra.mrb[0].mxu0 %v267
          %v844 = vpop.f32.mrb[0].mxu0
          %v845 = vadd.f32 0.0, %v844
          %v846 = vpop.f32.mrb[0].mxu0
          %847 = vmatprep.mubr.f32.mxu0 0.0
          %848 = vmatmul.mubr.f32.gmra.mrb[0].mxu0 %v268
          %v849 = vpop.f32.mrb[0].mxu0
          %v850 = vadd.f32 0.0, %v849
          %v851 = vpop.f32.mrb[0].mxu0
          %852 = vmatprep.mubr.f32.mxu0 0.0
          %853 = vmatmul.mubr.f32.gmra.mrb[0].mxu0 %v269
          %v854 = vpop.f32.mrb[0].mxu0
          %v855 = vadd.f32 0.0, %v854
          %v856 = vpop.f32.mrb[0].mxu0
          %857 = vmatprep.mubr.f32.mxu0 0.0
          %858 = vmatmul.mubr.f32.gmra.mrb[0].mxu0 %v270
          %v859 = vpop.f32.mrb[0].mxu0
          %v860 = vadd.f32 0.0, %v859
          %v861 = vpop.f32.mrb[0].mxu0
          %862 = vmatprep.mubr.f32.mxu0 0.0
          %863 = vmatmul.mubr.f32.gmra.mrb[0].mxu0 %v271
          %v864 = vpop.f32.mrb[0].mxu0
          %v865 = vadd.f32 0.0, %v864
          %v866 = vpop.f32.mrb[0].mxu0
          %867 = vmatprep.mubr.f32.mxu0 0.0
          %868 = vmatmul.mubr.f32.gmra.mrb[0].mxu0 %v272
          %v869 = vpop.f32.mrb[0].mxu0
          %v870 = vadd.f32 0.0, %v869
          %v871 = vpop.f32.mrb[0].mxu0
          %872 = vmatprep.mubr.f32.mxu0 0.0
          %873 = vmatmul.mubr.f32.gmra.mrb[0].mxu0 %v273
          %v874 = vpop.f32.mrb[0].mxu0
          %v875 = vadd.f32 0.0, %v874
          %v876 = vpop.f32.mrb[0].mxu0
          %877 = vmatprep.mubr.f32.mxu0 0.0
          %878 = vmatmul.mubr.f32.gmra.mrb[0].mxu0 %v274
          %v879 = vpop.f32.mrb[0].mxu0
          %v880 = vadd.f32 0.0, %v879
          %v881 = vpop.f32.mrb[0].mxu0
          %882 = vdwg.mxu0
          %vm883 = vcmp.eq.s32.totalorder %v740, 0
          %v884 = vsel %vm883, 1.0, 0.0
          %v885 = vlaneseq
          %v886 = vshrl.u32 %v885, 7
          %v887 = vsub.s32 0, %v886
          %v888 = vrot.slane %v884, %v887
          %v889 = vmul.f32 %v888, %v845
          %v890 = vadd.f32 %v889, 0.0
          %vm891 = vcmp.eq.s32.totalorder %v740, 1
          %v892 = vsel %vm891, 1.0, 0.0
          %v893 = vlaneseq
          %v894 = vshrl.u32 %v893, 7
          %v895 = vsub.s32 0, %v894
          %v896 = vrot.slane %v892, %v895
          %v897 = vmul.f32 %v896, %v850
          %v898 = vadd.f32 %v890, %v897
          %vm899 = vcmp.eq.s32.totalorder %v740, 2
          %v900 = vsel %vm899, 1.0, 0.0
          %v901 = vlaneseq
          %v902 = vshrl.u32 %v901, 7
          %v903 = vsub.s32 0, %v902
          %v904 = vrot.slane %v900, %v903
          %v905 = vmul.f32 %v904, %v855
          %v906 = vadd.f32 %v898, %v905
          %vm907 = vcmp.eq.s32.totalorder %v740, 3
          %v908 = vsel %vm907, 1.0, 0.0
          %v909 = vlaneseq
          %v910 = vshrl.u32 %v909, 7
          %v911 = vsub.s32 0, %v910
          %v912 = vrot.slane %v908, %v911
          %v913 = vmul.f32 %v912, %v860
          %v914 = vadd.f32 %v906, %v913
          %vm915 = vcmp.eq.s32.totalorder %v740, 4
          %v916 = vsel %vm915, 1.0, 0.0
          %v917 = vlaneseq
          %v918 = vshrl.u32 %v917, 7
          %v919 = vsub.s32 0, %v918
          %v920 = vrot.slane %v916, %v919
          %v921 = vmul.f32 %v920, %v865
          %v922 = vadd.f32 %v914, %v921
          %vm923 = vcmp.eq.s32.totalorder %v740, 5
          %v924 = vsel %vm923, 1.0, 0.0
          %v925 = vlaneseq
          %v926 = vshrl.u32 %v925, 7
          %v927 = vsub.s32 0, %v926
          %v928 = vrot.slane %v924, %v927
          %v929 = vmul.f32 %v928, %v870
          %v930 = vadd.f32 %v922, %v929
          %vm931 = vcmp.eq.s32.totalorder %v740, 6
          %v932 = vsel %vm931, 1.0, 0.0
          %v933 = vlaneseq
          %v934 = vshrl.u32 %v933, 7
          %v935 = vsub.s32 0, %v934
          %v936 = vrot.slane %v932, %v935
          %v937 = vmul.f32 %v936, %v875
          %v938 = vadd.f32 %v930, %v937
          %vm939 = vcmp.eq.s32.totalorder %v740, 7
          %v940 = vsel %vm939, 1.0, 0.0
          %v941 = vlaneseq
          %v942 = vshrl.u32 %v941, 7
          %v943 = vsub.s32 0, %v942
          %v944 = vrot.slane %v940, %v943
          %v945 = vmul.f32 %v944, %v880
          %v946 = vadd.f32 %v938, %v945
          %v947 = vlaneseq
          %v948 = vshrl.u32 %v947, 7
          %v949 = vsub.s32 0, %v948
          %v950 = vrot.slane %v741, %v949
          %v951 = vmul.f32 %v950, %v946
          %v952 = vadd.f32 %v735, %v951
          %v953 = vxor.u32 %v288, %v291
          %v954 = vxor.u32 %v953, %v292
          %v955 = vand.u32 %v954, 1023
          %v956 = vshra.s32 %v955, 3
          %v957 = vand.u32 %v955, 7
          %v958 = vmul.f32 %v279, %v300
          %v959 = vlaneseq
          %v960 = vshrl.u32 %v959, 7
          %v961 = vsub.s32 0, %v960
          %v962 = vrot.slane %v956, %v961
          %vm963 = vcmp.eq.s32.totalorder %v242, %v962
          %vm964 = vcmp.eq.s32.totalorder %v243, %v962
          %vm965 = vcmp.eq.s32.totalorder %v244, %v962
          %vm966 = vcmp.eq.s32.totalorder %v245, %v962
          %vm967 = vcmp.eq.s32.totalorder %v246, %v962
          %vm968 = vcmp.eq.s32.totalorder %v247, %v962
          %vm969 = vcmp.eq.s32.totalorder %v248, %v962
          %vm970 = vcmp.eq.s32.totalorder %v249, %v962
          %vm971 = vcmp.eq.s32.totalorder %v250, %v962
          %vm972 = vcmp.eq.s32.totalorder %v251, %v962
          %vm973 = vcmp.eq.s32.totalorder %v252, %v962
          %vm974 = vcmp.eq.s32.totalorder %v253, %v962
          %vm975 = vcmp.eq.s32.totalorder %v254, %v962
          %vm976 = vcmp.eq.s32.totalorder %v255, %v962
          %vm977 = vcmp.eq.s32.totalorder %v256, %v962
          %vm978 = vcmp.eq.s32.totalorder %v257, %v962
          %v979 = vsel %vm963, 1.0, 0.0
          %v980 = vsel %vm964, 1.0, 0.0
          %v981 = vsel %vm965, 1.0, 0.0
          %v982 = vsel %vm966, 1.0, 0.0
          %v983 = vsel %vm967, 1.0, 0.0
          %v984 = vsel %vm968, 1.0, 0.0
          %v985 = vsel %vm969, 1.0, 0.0
          %v986 = vsel %vm970, 1.0, 0.0
          %v987 = vsel %vm971, 1.0, 0.0
          %v988 = vsel %vm972, 1.0, 0.0
          %v989 = vsel %vm973, 1.0, 0.0
          %v990 = vsel %vm974, 1.0, 0.0
          %v991 = vsel %vm975, 1.0, 0.0
          %v992 = vsel %vm976, 1.0, 0.0
          %v993 = vsel %vm977, 1.0, 0.0
          %v994 = vsel %vm978, 1.0, 0.0
          %995 = vmatprep.subr.mxu0 0.0
          %996 = vmatpush1.msra.mxu0 %v979
          %997 = vmatprep.subr.mxu0 0.0
          %998 = vmatpush1.msra.mxu0 %v980
          %999 = vmatprep.subr.mxu0 0.0
          %1000 = vmatpush1.msra.mxu0 %v981
          %1001 = vmatprep.subr.mxu0 0.0
          %1002 = vmatpush1.msra.mxu0 %v982
          %1003 = vmatprep.subr.mxu0 0.0
          %1004 = vmatpush1.msra.mxu0 %v983
          %1005 = vmatprep.subr.mxu0 0.0
          %1006 = vmatpush1.msra.mxu0 %v984
          %1007 = vmatprep.subr.mxu0 0.0
          %1008 = vmatpush1.msra.mxu0 %v985
          %1009 = vmatprep.subr.mxu0 0.0
          %1010 = vmatpush1.msra.mxu0 %v986
          %1011 = vmatprep.subr.mxu0 0.0
          %1012 = vmatpush1.msra.mxu0 %v987
          %1013 = vmatprep.subr.mxu0 0.0
          %1014 = vmatpush1.msra.mxu0 %v988
          %1015 = vmatprep.subr.mxu0 0.0
          %1016 = vmatpush1.msra.mxu0 %v989
          %1017 = vmatprep.subr.mxu0 0.0
          %1018 = vmatpush1.msra.mxu0 %v990
          %1019 = vmatprep.subr.mxu0 0.0
          %1020 = vmatpush1.msra.mxu0 %v991
          %1021 = vmatprep.subr.mxu0 0.0
          %1022 = vmatpush1.msra.mxu0 %v992
          %1023 = vmatprep.subr.mxu0 0.0
          %1024 = vmatpush1.msra.mxu0 %v993
          %1025 = vmatprep.subr.mxu0 0.0
          %1026 = vmatpush1.msra.mxu0 %v994
          %1027 = vmatprep.subr.mxu0 0.0
          %1028 = vmatpush1.msra.mxu0 0.0
          %1029 = vmatprep.subr.mxu0 0.0
          %1030 = vmatpush1.msra.mxu0 0.0
          %1031 = vmatprep.subr.mxu0 0.0
          %1032 = vmatpush1.msra.mxu0 0.0
          %1033 = vmatprep.subr.mxu0 0.0
          %1034 = vmatpush1.msra.mxu0 0.0
          %1035 = vmatprep.subr.mxu0 0.0
          %1036 = vmatpush1.msra.mxu0 0.0
          %1037 = vmatprep.subr.mxu0 0.0
          %1038 = vmatpush1.msra.mxu0 0.0
          %1039 = vmatprep.subr.mxu0 0.0
          %1040 = vmatpush1.msra.mxu0 0.0
          %1041 = vmatprep.subr.mxu0 0.0
          %1042 = vmatpush1.msra.mxu0 0.0
          %1043 = vmatprep.subr.mxu0 0.0
          %1044 = vmatpush1.msra.mxu0 0.0
          %1045 = vmatprep.subr.mxu0 0.0
          %1046 = vmatpush1.msra.mxu0 0.0
          %1047 = vmatprep.subr.mxu0 0.0
          %1048 = vmatpush1.msra.mxu0 0.0
          %1049 = vmatprep.subr.mxu0 0.0
          %1050 = vmatpush1.msra.mxu0 0.0
          %1051 = vmatprep.subr.mxu0 0.0
          %1052 = vmatpush1.msra.mxu0 0.0
          %1053 = vmatprep.subr.mxu0 0.0
          %1054 = vmatpush1.msra.mxu0 0.0
          %1055 = vmatprep.subr.mxu0 0.0
          %1056 = vmatpush1.msra.mxu0 0.0
          %1057 = vmatprep.subr.mxu0 0.0
          %1058 = vmatpush1.msra.mxu0 0.0
          %1059 = vmatprep.mubr.f32.mxu0 0.0
          %1060 = vmatmul.mubr.f32.gmra.mrb[0].mxu0 %v267
          %v1061 = vpop.f32.mrb[0].mxu0
          %v1062 = vadd.f32 0.0, %v1061
          %v1063 = vpop.f32.mrb[0].mxu0
          %1064 = vmatprep.mubr.f32.mxu0 0.0
          %1065 = vmatmul.mubr.f32.gmra.mrb[0].mxu0 %v268
          %v1066 = vpop.f32.mrb[0].mxu0
          %v1067 = vadd.f32 0.0, %v1066
          %v1068 = vpop.f32.mrb[0].mxu0
          %1069 = vmatprep.mubr.f32.mxu0 0.0
          %1070 = vmatmul.mubr.f32.gmra.mrb[0].mxu0 %v269
          %v1071 = vpop.f32.mrb[0].mxu0
          %v1072 = vadd.f32 0.0, %v1071
          %v1073 = vpop.f32.mrb[0].mxu0
          %1074 = vmatprep.mubr.f32.mxu0 0.0
          %1075 = vmatmul.mubr.f32.gmra.mrb[0].mxu0 %v270
          %v1076 = vpop.f32.mrb[0].mxu0
          %v1077 = vadd.f32 0.0, %v1076
          %v1078 = vpop.f32.mrb[0].mxu0
          %1079 = vmatprep.mubr.f32.mxu0 0.0
          %1080 = vmatmul.mubr.f32.gmra.mrb[0].mxu0 %v271
          %v1081 = vpop.f32.mrb[0].mxu0
          %v1082 = vadd.f32 0.0, %v1081
          %v1083 = vpop.f32.mrb[0].mxu0
          %1084 = vmatprep.mubr.f32.mxu0 0.0
          %1085 = vmatmul.mubr.f32.gmra.mrb[0].mxu0 %v272
          %v1086 = vpop.f32.mrb[0].mxu0
          %v1087 = vadd.f32 0.0, %v1086
          %v1088 = vpop.f32.mrb[0].mxu0
          %1089 = vmatprep.mubr.f32.mxu0 0.0
          %1090 = vmatmul.mubr.f32.gmra.mrb[0].mxu0 %v273
          %v1091 = vpop.f32.mrb[0].mxu0
          %v1092 = vadd.f32 0.0, %v1091
          %v1093 = vpop.f32.mrb[0].mxu0
          %1094 = vmatprep.mubr.f32.mxu0 0.0
          %1095 = vmatmul.mubr.f32.gmra.mrb[0].mxu0 %v274
          %v1096 = vpop.f32.mrb[0].mxu0
          %v1097 = vadd.f32 0.0, %v1096
          %v1098 = vpop.f32.mrb[0].mxu0
          %1099 = vdwg.mxu0
          %vm1100 = vcmp.eq.s32.totalorder %v957, 0
          %v1101 = vsel %vm1100, 1.0, 0.0
          %v1102 = vlaneseq
          %v1103 = vshrl.u32 %v1102, 7
          %v1104 = vsub.s32 0, %v1103
          %v1105 = vrot.slane %v1101, %v1104
          %v1106 = vmul.f32 %v1105, %v1062
          %v1107 = vadd.f32 %v1106, 0.0
          %vm1108 = vcmp.eq.s32.totalorder %v957, 1
          %v1109 = vsel %vm1108, 1.0, 0.0
          %v1110 = vlaneseq
          %v1111 = vshrl.u32 %v1110, 7
          %v1112 = vsub.s32 0, %v1111
          %v1113 = vrot.slane %v1109, %v1112
          %v1114 = vmul.f32 %v1113, %v1067
          %v1115 = vadd.f32 %v1107, %v1114
          %vm1116 = vcmp.eq.s32.totalorder %v957, 2
          %v1117 = vsel %vm1116, 1.0, 0.0
          %v1118 = vlaneseq
          %v1119 = vshrl.u32 %v1118, 7
          %v1120 = vsub.s32 0, %v1119
          %v1121 = vrot.slane %v1117, %v1120
          %v1122 = vmul.f32 %v1121, %v1072
          %v1123 = vadd.f32 %v1115, %v1122
          %vm1124 = vcmp.eq.s32.totalorder %v957, 3
          %v1125 = vsel %vm1124, 1.0, 0.0
          %v1126 = vlaneseq
          %v1127 = vshrl.u32 %v1126, 7
          %v1128 = vsub.s32 0, %v1127
          %v1129 = vrot.slane %v1125, %v1128
          %v1130 = vmul.f32 %v1129, %v1077
          %v1131 = vadd.f32 %v1123, %v1130
          %vm1132 = vcmp.eq.s32.totalorder %v957, 4
          %v1133 = vsel %vm1132, 1.0, 0.0
          %v1134 = vlaneseq
          %v1135 = vshrl.u32 %v1134, 7
          %v1136 = vsub.s32 0, %v1135
          %v1137 = vrot.slane %v1133, %v1136
          %v1138 = vmul.f32 %v1137, %v1082
          %v1139 = vadd.f32 %v1131, %v1138
          %vm1140 = vcmp.eq.s32.totalorder %v957, 5
          %v1141 = vsel %vm1140, 1.0, 0.0
          %v1142 = vlaneseq
          %v1143 = vshrl.u32 %v1142, 7
          %v1144 = vsub.s32 0, %v1143
          %v1145 = vrot.slane %v1141, %v1144
          %v1146 = vmul.f32 %v1145, %v1087
          %v1147 = vadd.f32 %v1139, %v1146
          %vm1148 = vcmp.eq.s32.totalorder %v957, 6
          %v1149 = vsel %vm1148, 1.0, 0.0
          %v1150 = vlaneseq
          %v1151 = vshrl.u32 %v1150, 7
          %v1152 = vsub.s32 0, %v1151
          %v1153 = vrot.slane %v1149, %v1152
          %v1154 = vmul.f32 %v1153, %v1092
          %v1155 = vadd.f32 %v1147, %v1154
          %vm1156 = vcmp.eq.s32.totalorder %v957, 7
          %v1157 = vsel %vm1156, 1.0, 0.0
          %v1158 = vlaneseq
          %v1159 = vshrl.u32 %v1158, 7
          %v1160 = vsub.s32 0, %v1159
          %v1161 = vrot.slane %v1157, %v1160
          %v1162 = vmul.f32 %v1161, %v1097
          %v1163 = vadd.f32 %v1155, %v1162
          %v1164 = vlaneseq
          %v1165 = vshrl.u32 %v1164, 7
          %v1166 = vsub.s32 0, %v1165
          %v1167 = vrot.slane %v958, %v1166
          %v1168 = vmul.f32 %v1167, %v1163
          %v1169 = vadd.f32 %v952, %v1168
          %v1170 = vxor.u32 %v302, %v294
          %v1171 = vand.u32 %v1170, 1023
          %v1172 = vshra.s32 %v1171, 3
          %v1173 = vand.u32 %v1171, 7
          %v1174 = vmul.f32 %v295, %v299
          %v1175 = vlaneseq
          %v1176 = vshrl.u32 %v1175, 7
          %v1177 = vsub.s32 0, %v1176
          %v1178 = vrot.slane %v1172, %v1177
          %vm1179 = vcmp.eq.s32.totalorder %v242, %v1178
          %vm1180 = vcmp.eq.s32.totalorder %v243, %v1178
          %vm1181 = vcmp.eq.s32.totalorder %v244, %v1178
          %vm1182 = vcmp.eq.s32.totalorder %v245, %v1178
          %vm1183 = vcmp.eq.s32.totalorder %v246, %v1178
          %vm1184 = vcmp.eq.s32.totalorder %v247, %v1178
          %vm1185 = vcmp.eq.s32.totalorder %v248, %v1178
          %vm1186 = vcmp.eq.s32.totalorder %v249, %v1178
          %vm1187 = vcmp.eq.s32.totalorder %v250, %v1178
          %vm1188 = vcmp.eq.s32.totalorder %v251, %v1178
          %vm1189 = vcmp.eq.s32.totalorder %v252, %v1178
          %vm1190 = vcmp.eq.s32.totalorder %v253, %v1178
          %vm1191 = vcmp.eq.s32.totalorder %v254, %v1178
          %vm1192 = vcmp.eq.s32.totalorder %v255, %v1178
          %vm1193 = vcmp.eq.s32.totalorder %v256, %v1178
          %vm1194 = vcmp.eq.s32.totalorder %v257, %v1178
          %v1195 = vsel %vm1179, 1.0, 0.0
          %v1196 = vsel %vm1180, 1.0, 0.0
          %v1197 = vsel %vm1181, 1.0, 0.0
          %v1198 = vsel %vm1182, 1.0, 0.0
          %v1199 = vsel %vm1183, 1.0, 0.0
          %v1200 = vsel %vm1184, 1.0, 0.0
          %v1201 = vsel %vm1185, 1.0, 0.0
          %v1202 = vsel %vm1186, 1.0, 0.0
          %v1203 = vsel %vm1187, 1.0, 0.0
          %v1204 = vsel %vm1188, 1.0, 0.0
          %v1205 = vsel %vm1189, 1.0, 0.0
          %v1206 = vsel %vm1190, 1.0, 0.0
          %v1207 = vsel %vm1191, 1.0, 0.0
          %v1208 = vsel %vm1192, 1.0, 0.0
          %v1209 = vsel %vm1193, 1.0, 0.0
          %v1210 = vsel %vm1194, 1.0, 0.0
          %1211 = vmatprep.subr.mxu0 0.0
          %1212 = vmatpush1.msra.mxu0 %v1195
          %1213 = vmatprep.subr.mxu0 0.0
          %1214 = vmatpush1.msra.mxu0 %v1196
          %1215 = vmatprep.subr.mxu0 0.0
          %1216 = vmatpush1.msra.mxu0 %v1197
          %1217 = vmatprep.subr.mxu0 0.0
          %1218 = vmatpush1.msra.mxu0 %v1198
          %1219 = vmatprep.subr.mxu0 0.0
          %1220 = vmatpush1.msra.mxu0 %v1199
          %1221 = vmatprep.subr.mxu0 0.0
          %1222 = vmatpush1.msra.mxu0 %v1200
          %1223 = vmatprep.subr.mxu0 0.0
          %1224 = vmatpush1.msra.mxu0 %v1201
          %1225 = vmatprep.subr.mxu0 0.0
          %1226 = vmatpush1.msra.mxu0 %v1202
          %1227 = vmatprep.subr.mxu0 0.0
          %1228 = vmatpush1.msra.mxu0 %v1203
          %1229 = vmatprep.subr.mxu0 0.0
          %1230 = vmatpush1.msra.mxu0 %v1204
          %1231 = vmatprep.subr.mxu0 0.0
          %1232 = vmatpush1.msra.mxu0 %v1205
          %1233 = vmatprep.subr.mxu0 0.0
          %1234 = vmatpush1.msra.mxu0 %v1206
          %1235 = vmatprep.subr.mxu0 0.0
          %1236 = vmatpush1.msra.mxu0 %v1207
          %1237 = vmatprep.subr.mxu0 0.0
          %1238 = vmatpush1.msra.mxu0 %v1208
          %1239 = vmatprep.subr.mxu0 0.0
          %1240 = vmatpush1.msra.mxu0 %v1209
          %1241 = vmatprep.subr.mxu0 0.0
          %1242 = vmatpush1.msra.mxu0 %v1210
          %1243 = vmatprep.subr.mxu0 0.0
          %1244 = vmatpush1.msra.mxu0 0.0
          %1245 = vmatprep.subr.mxu0 0.0
          %1246 = vmatpush1.msra.mxu0 0.0
          %1247 = vmatprep.subr.mxu0 0.0
          %1248 = vmatpush1.msra.mxu0 0.0
          %1249 = vmatprep.subr.mxu0 0.0
          %1250 = vmatpush1.msra.mxu0 0.0
          %1251 = vmatprep.subr.mxu0 0.0
          %1252 = vmatpush1.msra.mxu0 0.0
          %1253 = vmatprep.subr.mxu0 0.0
          %1254 = vmatpush1.msra.mxu0 0.0
          %1255 = vmatprep.subr.mxu0 0.0
          %1256 = vmatpush1.msra.mxu0 0.0
          %1257 = vmatprep.subr.mxu0 0.0
          %1258 = vmatpush1.msra.mxu0 0.0
          %1259 = vmatprep.subr.mxu0 0.0
          %1260 = vmatpush1.msra.mxu0 0.0
          %1261 = vmatprep.subr.mxu0 0.0
          %1262 = vmatpush1.msra.mxu0 0.0
          %1263 = vmatprep.subr.mxu0 0.0
          %1264 = vmatpush1.msra.mxu0 0.0
          %1265 = vmatprep.subr.mxu0 0.0
          %1266 = vmatpush1.msra.mxu0 0.0
          %1267 = vmatprep.subr.mxu0 0.0
          %1268 = vmatpush1.msra.mxu0 0.0
          %1269 = vmatprep.subr.mxu0 0.0
          %1270 = vmatpush1.msra.mxu0 0.0
          %1271 = vmatprep.subr.mxu0 0.0
          %1272 = vmatpush1.msra.mxu0 0.0
          %1273 = vmatprep.subr.mxu0 0.0
          %1274 = vmatpush1.msra.mxu0 0.0
          %1275 = vmatprep.mubr.f32.mxu0 0.0
          %1276 = vmatmul.mubr.f32.gmra.mrb[0].mxu0 %v267
          %v1277 = vpop.f32.mrb[0].mxu0
          %v1278 = vadd.f32 0.0, %v1277
          %v1279 = vpop.f32.mrb[0].mxu0
          %1280 = vmatprep.mubr.f32.mxu0 0.0
          %1281 = vmatmul.mubr.f32.gmra.mrb[0].mxu0 %v268
          %v1282 = vpop.f32.mrb[0].mxu0
          %v1283 = vadd.f32 0.0, %v1282
          %v1284 = vpop.f32.mrb[0].mxu0
          %1285 = vmatprep.mubr.f32.mxu0 0.0
          %1286 = vmatmul.mubr.f32.gmra.mrb[0].mxu0 %v269
          %v1287 = vpop.f32.mrb[0].mxu0
          %v1288 = vadd.f32 0.0, %v1287
          %v1289 = vpop.f32.mrb[0].mxu0
          %1290 = vmatprep.mubr.f32.mxu0 0.0
          %1291 = vmatmul.mubr.f32.gmra.mrb[0].mxu0 %v270
          %v1292 = vpop.f32.mrb[0].mxu0
          %v1293 = vadd.f32 0.0, %v1292
          %v1294 = vpop.f32.mrb[0].mxu0
          %1295 = vmatprep.mubr.f32.mxu0 0.0
          %1296 = vmatmul.mubr.f32.gmra.mrb[0].mxu0 %v271
          %v1297 = vpop.f32.mrb[0].mxu0
          %v1298 = vadd.f32 0.0, %v1297
          %v1299 = vpop.f32.mrb[0].mxu0
          %1300 = vmatprep.mubr.f32.mxu0 0.0
          %1301 = vmatmul.mubr.f32.gmra.mrb[0].mxu0 %v272
          %v1302 = vpop.f32.mrb[0].mxu0
          %v1303 = vadd.f32 0.0, %v1302
          %v1304 = vpop.f32.mrb[0].mxu0
          %1305 = vmatprep.mubr.f32.mxu0 0.0
          %1306 = vmatmul.mubr.f32.gmra.mrb[0].mxu0 %v273
          %v1307 = vpop.f32.mrb[0].mxu0
          %v1308 = vadd.f32 0.0, %v1307
          %v1309 = vpop.f32.mrb[0].mxu0
          %1310 = vmatprep.mubr.f32.mxu0 0.0
          %1311 = vmatmul.mubr.f32.gmra.mrb[0].mxu0 %v274
          %v1312 = vpop.f32.mrb[0].mxu0
          %v1313 = vadd.f32 0.0, %v1312
          %v1314 = vpop.f32.mrb[0].mxu0
          %1315 = vdwg.mxu0
          %vm1316 = vcmp.eq.s32.totalorder %v1173, 0
          %v1317 = vsel %vm1316, 1.0, 0.0
          %v1318 = vlaneseq
          %v1319 = vshrl.u32 %v1318, 7
          %v1320 = vsub.s32 0, %v1319
          %v1321 = vrot.slane %v1317, %v1320
          %v1322 = vmul.f32 %v1321, %v1278
          %v1323 = vadd.f32 %v1322, 0.0
          %vm1324 = vcmp.eq.s32.totalorder %v1173, 1
          %v1325 = vsel %vm1324, 1.0, 0.0
          %v1326 = vlaneseq
          %v1327 = vshrl.u32 %v1326, 7
          %v1328 = vsub.s32 0, %v1327
          %v1329 = vrot.slane %v1325, %v1328
          %v1330 = vmul.f32 %v1329, %v1283
          %v1331 = vadd.f32 %v1323, %v1330
          %vm1332 = vcmp.eq.s32.totalorder %v1173, 2
          %v1333 = vsel %vm1332, 1.0, 0.0
          %v1334 = vlaneseq
          %v1335 = vshrl.u32 %v1334, 7
          %v1336 = vsub.s32 0, %v1335
          %v1337 = vrot.slane %v1333, %v1336
          %v1338 = vmul.f32 %v1337, %v1288
          %v1339 = vadd.f32 %v1331, %v1338
          %vm1340 = vcmp.eq.s32.totalorder %v1173, 3
          %v1341 = vsel %vm1340, 1.0, 0.0
          %v1342 = vlaneseq
          %v1343 = vshrl.u32 %v1342, 7
          %v1344 = vsub.s32 0, %v1343
          %v1345 = vrot.slane %v1341, %v1344
          %v1346 = vmul.f32 %v1345, %v1293
          %v1347 = vadd.f32 %v1339, %v1346
          %vm1348 = vcmp.eq.s32.totalorder %v1173, 4
          %v1349 = vsel %vm1348, 1.0, 0.0
          %v1350 = vlaneseq
          %v1351 = vshrl.u32 %v1350, 7
          %v1352 = vsub.s32 0, %v1351
          %v1353 = vrot.slane %v1349, %v1352
          %v1354 = vmul.f32 %v1353, %v1298
          %v1355 = vadd.f32 %v1347, %v1354
          %vm1356 = vcmp.eq.s32.totalorder %v1173, 5
          %v1357 = vsel %vm1356, 1.0, 0.0
          %v1358 = vlaneseq
          %v1359 = vshrl.u32 %v1358, 7
          %v1360 = vsub.s32 0, %v1359
          %v1361 = vrot.slane %v1357, %v1360
          %v1362 = vmul.f32 %v1361, %v1303
          %v1363 = vadd.f32 %v1355, %v1362
          %vm1364 = vcmp.eq.s32.totalorder %v1173, 6
          %v1365 = vsel %vm1364, 1.0, 0.0
          %v1366 = vlaneseq
          %v1367 = vshrl.u32 %v1366, 7
          %v1368 = vsub.s32 0, %v1367
          %v1369 = vrot.slane %v1365, %v1368
          %v1370 = vmul.f32 %v1369, %v1308
          %v1371 = vadd.f32 %v1363, %v1370
          %vm1372 = vcmp.eq.s32.totalorder %v1173, 7
          %v1373 = vsel %vm1372, 1.0, 0.0
          %v1374 = vlaneseq
          %v1375 = vshrl.u32 %v1374, 7
          %v1376 = vsub.s32 0, %v1375
          %v1377 = vrot.slane %v1373, %v1376
          %v1378 = vmul.f32 %v1377, %v1313
          %v1379 = vadd.f32 %v1371, %v1378
          %v1380 = vlaneseq
          %v1381 = vshrl.u32 %v1380, 7
          %v1382 = vsub.s32 0, %v1381
          %v1383 = vrot.slane %v1174, %v1382
          %v1384 = vmul.f32 %v1383, %v1379
          %v1385 = vadd.f32 %v1169, %v1384
          %v1386 = vxor.u32 %v519, %v294
          %v1387 = vand.u32 %v1386, 1023
          %v1388 = vshra.s32 %v1387, 3
          %v1389 = vand.u32 %v1387, 7
          %v1390 = vmul.f32 %v279, %v299
          %v1391 = vlaneseq
          %v1392 = vshrl.u32 %v1391, 7
          %v1393 = vsub.s32 0, %v1392
          %v1394 = vrot.slane %v1388, %v1393
          %vm1395 = vcmp.eq.s32.totalorder %v242, %v1394
          %vm1396 = vcmp.eq.s32.totalorder %v243, %v1394
          %vm1397 = vcmp.eq.s32.totalorder %v244, %v1394
          %vm1398 = vcmp.eq.s32.totalorder %v245, %v1394
          %vm1399 = vcmp.eq.s32.totalorder %v246, %v1394
          %vm1400 = vcmp.eq.s32.totalorder %v247, %v1394
          %vm1401 = vcmp.eq.s32.totalorder %v248, %v1394
          %vm1402 = vcmp.eq.s32.totalorder %v249, %v1394
          %vm1403 = vcmp.eq.s32.totalorder %v250, %v1394
          %vm1404 = vcmp.eq.s32.totalorder %v251, %v1394
          %vm1405 = vcmp.eq.s32.totalorder %v252, %v1394
          %vm1406 = vcmp.eq.s32.totalorder %v253, %v1394
          %vm1407 = vcmp.eq.s32.totalorder %v254, %v1394
          %vm1408 = vcmp.eq.s32.totalorder %v255, %v1394
          %vm1409 = vcmp.eq.s32.totalorder %v256, %v1394
          %vm1410 = vcmp.eq.s32.totalorder %v257, %v1394
          %v1411 = vsel %vm1395, 1.0, 0.0
          %v1412 = vsel %vm1396, 1.0, 0.0
          %v1413 = vsel %vm1397, 1.0, 0.0
          %v1414 = vsel %vm1398, 1.0, 0.0
          %v1415 = vsel %vm1399, 1.0, 0.0
          %v1416 = vsel %vm1400, 1.0, 0.0
          %v1417 = vsel %vm1401, 1.0, 0.0
          %v1418 = vsel %vm1402, 1.0, 0.0
          %v1419 = vsel %vm1403, 1.0, 0.0
          %v1420 = vsel %vm1404, 1.0, 0.0
          %v1421 = vsel %vm1405, 1.0, 0.0
          %v1422 = vsel %vm1406, 1.0, 0.0
          %v1423 = vsel %vm1407, 1.0, 0.0
          %v1424 = vsel %vm1408, 1.0, 0.0
          %v1425 = vsel %vm1409, 1.0, 0.0
          %v1426 = vsel %vm1410, 1.0, 0.0
          %1427 = vmatprep.subr.mxu0 0.0
          %1428 = vmatpush1.msra.mxu0 %v1411
          %1429 = vmatprep.subr.mxu0 0.0
          %1430 = vmatpush1.msra.mxu0 %v1412
          %1431 = vmatprep.subr.mxu0 0.0
          %1432 = vmatpush1.msra.mxu0 %v1413
          %1433 = vmatprep.subr.mxu0 0.0
          %1434 = vmatpush1.msra.mxu0 %v1414
          %1435 = vmatprep.subr.mxu0 0.0
          %1436 = vmatpush1.msra.mxu0 %v1415
          %1437 = vmatprep.subr.mxu0 0.0
          %1438 = vmatpush1.msra.mxu0 %v1416
          %1439 = vmatprep.subr.mxu0 0.0
          %1440 = vmatpush1.msra.mxu0 %v1417
          %1441 = vmatprep.subr.mxu0 0.0
          %1442 = vmatpush1.msra.mxu0 %v1418
          %1443 = vmatprep.subr.mxu0 0.0
          %1444 = vmatpush1.msra.mxu0 %v1419
          %1445 = vmatprep.subr.mxu0 0.0
          %1446 = vmatpush1.msra.mxu0 %v1420
          %1447 = vmatprep.subr.mxu0 0.0
          %1448 = vmatpush1.msra.mxu0 %v1421
          %1449 = vmatprep.subr.mxu0 0.0
          %1450 = vmatpush1.msra.mxu0 %v1422
          %1451 = vmatprep.subr.mxu0 0.0
          %1452 = vmatpush1.msra.mxu0 %v1423
          %1453 = vmatprep.subr.mxu0 0.0
          %1454 = vmatpush1.msra.mxu0 %v1424
          %1455 = vmatprep.subr.mxu0 0.0
          %1456 = vmatpush1.msra.mxu0 %v1425
          %1457 = vmatprep.subr.mxu0 0.0
          %1458 = vmatpush1.msra.mxu0 %v1426
          %1459 = vmatprep.subr.mxu0 0.0
          %1460 = vmatpush1.msra.mxu0 0.0
          %1461 = vmatprep.subr.mxu0 0.0
          %1462 = vmatpush1.msra.mxu0 0.0
          %1463 = vmatprep.subr.mxu0 0.0
          %1464 = vmatpush1.msra.mxu0 0.0
          %1465 = vmatprep.subr.mxu0 0.0
          %1466 = vmatpush1.msra.mxu0 0.0
          %1467 = vmatprep.subr.mxu0 0.0
          %1468 = vmatpush1.msra.mxu0 0.0
          %1469 = vmatprep.subr.mxu0 0.0
          %1470 = vmatpush1.msra.mxu0 0.0
          %1471 = vmatprep.subr.mxu0 0.0
          %1472 = vmatpush1.msra.mxu0 0.0
          %1473 = vmatprep.subr.mxu0 0.0
          %1474 = vmatpush1.msra.mxu0 0.0
          %1475 = vmatprep.subr.mxu0 0.0
          %1476 = vmatpush1.msra.mxu0 0.0
          %1477 = vmatprep.subr.mxu0 0.0
          %1478 = vmatpush1.msra.mxu0 0.0
          %1479 = vmatprep.subr.mxu0 0.0
          %1480 = vmatpush1.msra.mxu0 0.0
          %1481 = vmatprep.subr.mxu0 0.0
          %1482 = vmatpush1.msra.mxu0 0.0
          %1483 = vmatprep.subr.mxu0 0.0
          %1484 = vmatpush1.msra.mxu0 0.0
          %1485 = vmatprep.subr.mxu0 0.0
          %1486 = vmatpush1.msra.mxu0 0.0
          %1487 = vmatprep.subr.mxu0 0.0
          %1488 = vmatpush1.msra.mxu0 0.0
          %1489 = vmatprep.subr.mxu0 0.0
          %1490 = vmatpush1.msra.mxu0 0.0
          %1491 = vmatprep.mubr.f32.mxu0 0.0
          %1492 = vmatmul.mubr.f32.gmra.mrb[0].mxu0 %v267
          %v1493 = vpop.f32.mrb[0].mxu0
          %v1494 = vadd.f32 0.0, %v1493
          %v1495 = vpop.f32.mrb[0].mxu0
          %1496 = vmatprep.mubr.f32.mxu0 0.0
          %1497 = vmatmul.mubr.f32.gmra.mrb[0].mxu0 %v268
          %v1498 = vpop.f32.mrb[0].mxu0
          %v1499 = vadd.f32 0.0, %v1498
          %v1500 = vpop.f32.mrb[0].mxu0
          %1501 = vmatprep.mubr.f32.mxu0 0.0
          %1502 = vmatmul.mubr.f32.gmra.mrb[0].mxu0 %v269
          %v1503 = vpop.f32.mrb[0].mxu0
          %v1504 = vadd.f32 0.0, %v1503
          %v1505 = vpop.f32.mrb[0].mxu0
          %1506 = vmatprep.mubr.f32.mxu0 0.0
          %1507 = vmatmul.mubr.f32.gmra.mrb[0].mxu0 %v270
          %v1508 = vpop.f32.mrb[0].mxu0
          %v1509 = vadd.f32 0.0, %v1508
          %v1510 = vpop.f32.mrb[0].mxu0
          %1511 = vmatprep.mubr.f32.mxu0 0.0
          %1512 = vmatmul.mubr.f32.gmra.mrb[0].mxu0 %v271
          %v1513 = vpop.f32.mrb[0].mxu0
          %v1514 = vadd.f32 0.0, %v1513
          %v1515 = vpop.f32.mrb[0].mxu0
          %1516 = vmatprep.mubr.f32.mxu0 0.0
          %1517 = vmatmul.mubr.f32.gmra.mrb[0].mxu0 %v272
          %v1518 = vpop.f32.mrb[0].mxu0
          %v1519 = vadd.f32 0.0, %v1518
          %v1520 = vpop.f32.mrb[0].mxu0
          %1521 = vmatprep.mubr.f32.mxu0 0.0
          %1522 = vmatmul.mubr.f32.gmra.mrb[0].mxu0 %v273
          %v1523 = vpop.f32.mrb[0].mxu0
          %v1524 = vadd.f32 0.0, %v1523
          %v1525 = vpop.f32.mrb[0].mxu0
          %1526 = vmatprep.mubr.f32.mxu0 0.0
          %1527 = vmatmul.mubr.f32.gmra.mrb[0].mxu0 %v274
          %v1528 = vpop.f32.mrb[0].mxu0
          %v1529 = vadd.f32 0.0, %v1528
          %v1530 = vpop.f32.mrb[0].mxu0
          %1531 = vdwg.mxu0
          %vm1532 = vcmp.eq.s32.totalorder %v1389, 0
          %v1533 = vsel %vm1532, 1.0, 0.0
          %v1534 = vlaneseq
          %v1535 = vshrl.u32 %v1534, 7
          %v1536 = vsub.s32 0, %v1535
          %v1537 = vrot.slane %v1533, %v1536
          %v1538 = vmul.f32 %v1537, %v1494
          %v1539 = vadd.f32 %v1538, 0.0
          %vm1540 = vcmp.eq.s32.totalorder %v1389, 1
          %v1541 = vsel %vm1540, 1.0, 0.0
          %v1542 = vlaneseq
          %v1543 = vshrl.u32 %v1542, 7
          %v1544 = vsub.s32 0, %v1543
          %v1545 = vrot.slane %v1541, %v1544
          %v1546 = vmul.f32 %v1545, %v1499
          %v1547 = vadd.f32 %v1539, %v1546
          %vm1548 = vcmp.eq.s32.totalorder %v1389, 2
          %v1549 = vsel %vm1548, 1.0, 0.0
          %v1550 = vlaneseq
          %v1551 = vshrl.u32 %v1550, 7
          %v1552 = vsub.s32 0, %v1551
          %v1553 = vrot.slane %v1549, %v1552
          %v1554 = vmul.f32 %v1553, %v1504
          %v1555 = vadd.f32 %v1547, %v1554
          %vm1556 = vcmp.eq.s32.totalorder %v1389, 3
          %v1557 = vsel %vm1556, 1.0, 0.0
          %v1558 = vlaneseq
          %v1559 = vshrl.u32 %v1558, 7
          %v1560 = vsub.s32 0, %v1559
          %v1561 = vrot.slane %v1557, %v1560
          %v1562 = vmul.f32 %v1561, %v1509
          %v1563 = vadd.f32 %v1555, %v1562
          %vm1564 = vcmp.eq.s32.totalorder %v1389, 4
          %v1565 = vsel %vm1564, 1.0, 0.0
          %v1566 = vlaneseq
          %v1567 = vshrl.u32 %v1566, 7
          %v1568 = vsub.s32 0, %v1567
          %v1569 = vrot.slane %v1565, %v1568
          %v1570 = vmul.f32 %v1569, %v1514
          %v1571 = vadd.f32 %v1563, %v1570
          %vm1572 = vcmp.eq.s32.totalorder %v1389, 5
          %v1573 = vsel %vm1572, 1.0, 0.0
          %v1574 = vlaneseq
          %v1575 = vshrl.u32 %v1574, 7
          %v1576 = vsub.s32 0, %v1575
          %v1577 = vrot.slane %v1573, %v1576
          %v1578 = vmul.f32 %v1577, %v1519
          %v1579 = vadd.f32 %v1571, %v1578
          %vm1580 = vcmp.eq.s32.totalorder %v1389, 6
          %v1581 = vsel %vm1580, 1.0, 0.0
          %v1582 = vlaneseq
          %v1583 = vshrl.u32 %v1582, 7
          %v1584 = vsub.s32 0, %v1583
          %v1585 = vrot.slane %v1581, %v1584
          %v1586 = vmul.f32 %v1585, %v1524
          %v1587 = vadd.f32 %v1579, %v1586
          %vm1588 = vcmp.eq.s32.totalorder %v1389, 7
          %v1589 = vsel %vm1588, 1.0, 0.0
          %v1590 = vlaneseq
          %v1591 = vshrl.u32 %v1590, 7
          %v1592 = vsub.s32 0, %v1591
          %v1593 = vrot.slane %v1589, %v1592
          %v1594 = vmul.f32 %v1593, %v1529
          %v1595 = vadd.f32 %v1587, %v1594
          %v1596 = vlaneseq
          %v1597 = vshrl.u32 %v1596, 7
          %v1598 = vsub.s32 0, %v1597
          %v1599 = vrot.slane %v1390, %v1598
          %v1600 = vmul.f32 %v1599, %v1595
          %v1601 = vadd.f32 %v1385, %v1600
          %v1602 = vxor.u32 %v736, %v294
          %v1603 = vand.u32 %v1602, 1023
          %v1604 = vshra.s32 %v1603, 3
          %v1605 = vand.u32 %v1603, 7
          %v1606 = vmul.f32 %v295, %v301
          %v1607 = vlaneseq
          %v1608 = vshrl.u32 %v1607, 7
          %v1609 = vsub.s32 0, %v1608
          %v1610 = vrot.slane %v1604, %v1609
          %vm1611 = vcmp.eq.s32.totalorder %v242, %v1610
          %vm1612 = vcmp.eq.s32.totalorder %v243, %v1610
          %vm1613 = vcmp.eq.s32.totalorder %v244, %v1610
          %vm1614 = vcmp.eq.s32.totalorder %v245, %v1610
          %vm1615 = vcmp.eq.s32.totalorder %v246, %v1610
          %vm1616 = vcmp.eq.s32.totalorder %v247, %v1610
          %vm1617 = vcmp.eq.s32.totalorder %v248, %v1610
          %vm1618 = vcmp.eq.s32.totalorder %v249, %v1610
          %vm1619 = vcmp.eq.s32.totalorder %v250, %v1610
          %vm1620 = vcmp.eq.s32.totalorder %v251, %v1610
          %vm1621 = vcmp.eq.s32.totalorder %v252, %v1610
          %vm1622 = vcmp.eq.s32.totalorder %v253, %v1610
          %vm1623 = vcmp.eq.s32.totalorder %v254, %v1610
          %vm1624 = vcmp.eq.s32.totalorder %v255, %v1610
          %vm1625 = vcmp.eq.s32.totalorder %v256, %v1610
          %vm1626 = vcmp.eq.s32.totalorder %v257, %v1610
          %v1627 = vsel %vm1611, 1.0, 0.0
          %v1628 = vsel %vm1612, 1.0, 0.0
          %v1629 = vsel %vm1613, 1.0, 0.0
          %v1630 = vsel %vm1614, 1.0, 0.0
          %v1631 = vsel %vm1615, 1.0, 0.0
          %v1632 = vsel %vm1616, 1.0, 0.0
          %v1633 = vsel %vm1617, 1.0, 0.0
          %v1634 = vsel %vm1618, 1.0, 0.0
          %v1635 = vsel %vm1619, 1.0, 0.0
          %v1636 = vsel %vm1620, 1.0, 0.0
          %v1637 = vsel %vm1621, 1.0, 0.0
          %v1638 = vsel %vm1622, 1.0, 0.0
          %v1639 = vsel %vm1623, 1.0, 0.0
          %v1640 = vsel %vm1624, 1.0, 0.0
          %v1641 = vsel %vm1625, 1.0, 0.0
          %v1642 = vsel %vm1626, 1.0, 0.0
          %1643 = vmatprep.subr.mxu0 0.0
          %1644 = vmatpush1.msra.mxu0 %v1627
          %1645 = vmatprep.subr.mxu0 0.0
          %1646 = vmatpush1.msra.mxu0 %v1628
          %1647 = vmatprep.subr.mxu0 0.0
          %1648 = vmatpush1.msra.mxu0 %v1629
          %1649 = vmatprep.subr.mxu0 0.0
          %1650 = vmatpush1.msra.mxu0 %v1630
          %1651 = vmatprep.subr.mxu0 0.0
          %1652 = vmatpush1.msra.mxu0 %v1631
          %1653 = vmatprep.subr.mxu0 0.0
          %1654 = vmatpush1.msra.mxu0 %v1632
          %1655 = vmatprep.subr.mxu0 0.0
          %1656 = vmatpush1.msra.mxu0 %v1633
          %1657 = vmatprep.subr.mxu0 0.0
          %1658 = vmatpush1.msra.mxu0 %v1634
          %1659 = vmatprep.subr.mxu0 0.0
          %1660 = vmatpush1.msra.mxu0 %v1635
          %1661 = vmatprep.subr.mxu0 0.0
          %1662 = vmatpush1.msra.mxu0 %v1636
          %1663 = vmatprep.subr.mxu0 0.0
          %1664 = vmatpush1.msra.mxu0 %v1637
          %1665 = vmatprep.subr.mxu0 0.0
          %1666 = vmatpush1.msra.mxu0 %v1638
          %1667 = vmatprep.subr.mxu0 0.0
          %1668 = vmatpush1.msra.mxu0 %v1639
          %1669 = vmatprep.subr.mxu0 0.0
          %1670 = vmatpush1.msra.mxu0 %v1640
          %1671 = vmatprep.subr.mxu0 0.0
          %1672 = vmatpush1.msra.mxu0 %v1641
          %1673 = vmatprep.subr.mxu0 0.0
          %1674 = vmatpush1.msra.mxu0 %v1642
          %1675 = vmatprep.subr.mxu0 0.0
          %1676 = vmatpush1.msra.mxu0 0.0
          %1677 = vmatprep.subr.mxu0 0.0
          %1678 = vmatpush1.msra.mxu0 0.0
          %1679 = vmatprep.subr.mxu0 0.0
          %1680 = vmatpush1.msra.mxu0 0.0
          %1681 = vmatprep.subr.mxu0 0.0
          %1682 = vmatpush1.msra.mxu0 0.0
          %1683 = vmatprep.subr.mxu0 0.0
          %1684 = vmatpush1.msra.mxu0 0.0
          %1685 = vmatprep.subr.mxu0 0.0
          %1686 = vmatpush1.msra.mxu0 0.0
          %1687 = vmatprep.subr.mxu0 0.0
          %1688 = vmatpush1.msra.mxu0 0.0
          %1689 = vmatprep.subr.mxu0 0.0
          %1690 = vmatpush1.msra.mxu0 0.0
          %1691 = vmatprep.subr.mxu0 0.0
          %1692 = vmatpush1.msra.mxu0 0.0
          %1693 = vmatprep.subr.mxu0 0.0
          %1694 = vmatpush1.msra.mxu0 0.0
          %1695 = vmatprep.subr.mxu0 0.0
          %1696 = vmatpush1.msra.mxu0 0.0
          %1697 = vmatprep.subr.mxu0 0.0
          %1698 = vmatpush1.msra.mxu0 0.0
          %1699 = vmatprep.subr.mxu0 0.0
          %1700 = vmatpush1.msra.mxu0 0.0
          %1701 = vmatprep.subr.mxu0 0.0
          %1702 = vmatpush1.msra.mxu0 0.0
          %1703 = vmatprep.subr.mxu0 0.0
          %1704 = vmatpush1.msra.mxu0 0.0
          %1705 = vmatprep.subr.mxu0 0.0
          %1706 = vmatpush1.msra.mxu0 0.0
          %1707 = vmatprep.mubr.f32.mxu0 0.0
          %1708 = vmatmul.mubr.f32.gmra.mrb[0].mxu0 %v267
          %v1709 = vpop.f32.mrb[0].mxu0
          %v1710 = vadd.f32 0.0, %v1709
          %v1711 = vpop.f32.mrb[0].mxu0
          %1712 = vmatprep.mubr.f32.mxu0 0.0
          %1713 = vmatmul.mubr.f32.gmra.mrb[0].mxu0 %v268
          %v1714 = vpop.f32.mrb[0].mxu0
          %v1715 = vadd.f32 0.0, %v1714
          %v1716 = vpop.f32.mrb[0].mxu0
          %1717 = vmatprep.mubr.f32.mxu0 0.0
          %1718 = vmatmul.mubr.f32.gmra.mrb[0].mxu0 %v269
          %v1719 = vpop.f32.mrb[0].mxu0
          %v1720 = vadd.f32 0.0, %v1719
          %v1721 = vpop.f32.mrb[0].mxu0
          %1722 = vmatprep.mubr.f32.mxu0 0.0
          %1723 = vmatmul.mubr.f32.gmra.mrb[0].mxu0 %v270
          %v1724 = vpop.f32.mrb[0].mxu0
          %v1725 = vadd.f32 0.0, %v1724
          %v1726 = vpop.f32.mrb[0].mxu0
          %1727 = vmatprep.mubr.f32.mxu0 0.0
          %1728 = vmatmul.mubr.f32.gmra.mrb[0].mxu0 %v271
          %v1729 = vpop.f32.mrb[0].mxu0
          %v1730 = vadd.f32 0.0, %v1729
          %v1731 = vpop.f32.mrb[0].mxu0
          %1732 = vmatprep.mubr.f32.mxu0 0.0
          %1733 = vmatmul.mubr.f32.gmra.mrb[0].mxu0 %v272
          %v1734 = vpop.f32.mrb[0].mxu0
          %v1735 = vadd.f32 0.0, %v1734
          %v1736 = vpop.f32.mrb[0].mxu0
          %1737 = vmatprep.mubr.f32.mxu0 0.0
          %1738 = vmatmul.mubr.f32.gmra.mrb[0].mxu0 %v273
          %v1739 = vpop.f32.mrb[0].mxu0
          %v1740 = vadd.f32 0.0, %v1739
          %v1741 = vpop.f32.mrb[0].mxu0
          %1742 = vmatprep.mubr.f32.mxu0 0.0
          %1743 = vmatmul.mubr.f32.gmra.mrb[0].mxu0 %v274
          %v1744 = vpop.f32.mrb[0].mxu0
          %v1745 = vadd.f32 0.0, %v1744
          %v1746 = vpop.f32.mrb[0].mxu0
          %1747 = vdwg.mxu0
          %vm1748 = vcmp.eq.s32.totalorder %v1605, 0
          %v1749 = vsel %vm1748, 1.0, 0.0
          %v1750 = vlaneseq
          %v1751 = vshrl.u32 %v1750, 7
          %v1752 = vsub.s32 0, %v1751
          %v1753 = vrot.slane %v1749, %v1752
          %v1754 = vmul.f32 %v1753, %v1710
          %v1755 = vadd.f32 %v1754, 0.0
          %vm1756 = vcmp.eq.s32.totalorder %v1605, 1
          %v1757 = vsel %vm1756, 1.0, 0.0
          %v1758 = vlaneseq
          %v1759 = vshrl.u32 %v1758, 7
          %v1760 = vsub.s32 0, %v1759
          %v1761 = vrot.slane %v1757, %v1760
          %v1762 = vmul.f32 %v1761, %v1715
          %v1763 = vadd.f32 %v1755, %v1762
          %vm1764 = vcmp.eq.s32.totalorder %v1605, 2
          %v1765 = vsel %vm1764, 1.0, 0.0
          %v1766 = vlaneseq
          %v1767 = vshrl.u32 %v1766, 7
          %v1768 = vsub.s32 0, %v1767
          %v1769 = vrot.slane %v1765, %v1768
          %v1770 = vmul.f32 %v1769, %v1720
          %v1771 = vadd.f32 %v1763, %v1770
          %vm1772 = vcmp.eq.s32.totalorder %v1605, 3
          %v1773 = vsel %vm1772, 1.0, 0.0
          %v1774 = vlaneseq
          %v1775 = vshrl.u32 %v1774, 7
          %v1776 = vsub.s32 0, %v1775
          %v1777 = vrot.slane %v1773, %v1776
          %v1778 = vmul.f32 %v1777, %v1725
          %v1779 = vadd.f32 %v1771, %v1778
          %vm1780 = vcmp.eq.s32.totalorder %v1605, 4
          %v1781 = vsel %vm1780, 1.0, 0.0
          %v1782 = vlaneseq
          %v1783 = vshrl.u32 %v1782, 7
          %v1784 = vsub.s32 0, %v1783
          %v1785 = vrot.slane %v1781, %v1784
          %v1786 = vmul.f32 %v1785, %v1730
          %v1787 = vadd.f32 %v1779, %v1786
          %vm1788 = vcmp.eq.s32.totalorder %v1605, 5
          %v1789 = vsel %vm1788, 1.0, 0.0
          %v1790 = vlaneseq
          %v1791 = vshrl.u32 %v1790, 7
          %v1792 = vsub.s32 0, %v1791
          %v1793 = vrot.slane %v1789, %v1792
          %v1794 = vmul.f32 %v1793, %v1735
          %v1795 = vadd.f32 %v1787, %v1794
          %vm1796 = vcmp.eq.s32.totalorder %v1605, 6
          %v1797 = vsel %vm1796, 1.0, 0.0
          %v1798 = vlaneseq
          %v1799 = vshrl.u32 %v1798, 7
          %v1800 = vsub.s32 0, %v1799
          %v1801 = vrot.slane %v1797, %v1800
          %v1802 = vmul.f32 %v1801, %v1740
          %v1803 = vadd.f32 %v1795, %v1802
          %vm1804 = vcmp.eq.s32.totalorder %v1605, 7
          %v1805 = vsel %vm1804, 1.0, 0.0
          %v1806 = vlaneseq
          %v1807 = vshrl.u32 %v1806, 7
          %v1808 = vsub.s32 0, %v1807
          %v1809 = vrot.slane %v1805, %v1808
          %v1810 = vmul.f32 %v1809, %v1745
          %v1811 = vadd.f32 %v1803, %v1810
          %v1812 = vlaneseq
          %v1813 = vshrl.u32 %v1812, 7
          %v1814 = vsub.s32 0, %v1813
          %v1815 = vrot.slane %v1606, %v1814
          %v1816 = vmul.f32 %v1815, %v1811
          %v1817 = vadd.f32 %v1601, %v1816
          %v1818 = vxor.u32 %v953, %v294
          %v1819 = vand.u32 %v1818, 1023
          %v1820 = vshra.s32 %v1819, 3
          %v1821 = vand.u32 %v1819, 7
          %v1822 = vmul.f32 %v279, %v301
          %v1823 = vlaneseq
          %v1824 = vshrl.u32 %v1823, 7
          %v1825 = vsub.s32 0, %v1824
          %v1826 = vrot.slane %v1820, %v1825
          %vm1827 = vcmp.eq.s32.totalorder %v242, %v1826
          %vm1828 = vcmp.eq.s32.totalorder %v243, %v1826
          %vm1829 = vcmp.eq.s32.totalorder %v244, %v1826
          %vm1830 = vcmp.eq.s32.totalorder %v245, %v1826
          %vm1831 = vcmp.eq.s32.totalorder %v246, %v1826
          %vm1832 = vcmp.eq.s32.totalorder %v247, %v1826
          %vm1833 = vcmp.eq.s32.totalorder %v248, %v1826
          %vm1834 = vcmp.eq.s32.totalorder %v249, %v1826
          %vm1835 = vcmp.eq.s32.totalorder %v250, %v1826
          %vm1836 = vcmp.eq.s32.totalorder %v251, %v1826
          %vm1837 = vcmp.eq.s32.totalorder %v252, %v1826
          %vm1838 = vcmp.eq.s32.totalorder %v253, %v1826
          %vm1839 = vcmp.eq.s32.totalorder %v254, %v1826
          %vm1840 = vcmp.eq.s32.totalorder %v255, %v1826
          %vm1841 = vcmp.eq.s32.totalorder %v256, %v1826
          %vm1842 = vcmp.eq.s32.totalorder %v257, %v1826
          %v1843 = vsel %vm1827, 1.0, 0.0
          %v1844 = vsel %vm1828, 1.0, 0.0
          %v1845 = vsel %vm1829, 1.0, 0.0
          %v1846 = vsel %vm1830, 1.0, 0.0
          %v1847 = vsel %vm1831, 1.0, 0.0
          %v1848 = vsel %vm1832, 1.0, 0.0
          %v1849 = vsel %vm1833, 1.0, 0.0
          %v1850 = vsel %vm1834, 1.0, 0.0
          %v1851 = vsel %vm1835, 1.0, 0.0
          %v1852 = vsel %vm1836, 1.0, 0.0
          %v1853 = vsel %vm1837, 1.0, 0.0
          %v1854 = vsel %vm1838, 1.0, 0.0
          %v1855 = vsel %vm1839, 1.0, 0.0
          %v1856 = vsel %vm1840, 1.0, 0.0
          %v1857 = vsel %vm1841, 1.0, 0.0
          %v1858 = vsel %vm1842, 1.0, 0.0
          %1859 = vmatprep.subr.mxu0 0.0
          %1860 = vmatpush1.msra.mxu0 %v1843
          %1861 = vmatprep.subr.mxu0 0.0
          %1862 = vmatpush1.msra.mxu0 %v1844
          %1863 = vmatprep.subr.mxu0 0.0
          %1864 = vmatpush1.msra.mxu0 %v1845
          %1865 = vmatprep.subr.mxu0 0.0
          %1866 = vmatpush1.msra.mxu0 %v1846
          %1867 = vmatprep.subr.mxu0 0.0
          %1868 = vmatpush1.msra.mxu0 %v1847
          %1869 = vmatprep.subr.mxu0 0.0
          %1870 = vmatpush1.msra.mxu0 %v1848
          %1871 = vmatprep.subr.mxu0 0.0
          %1872 = vmatpush1.msra.mxu0 %v1849
          %1873 = vmatprep.subr.mxu0 0.0
          %1874 = vmatpush1.msra.mxu0 %v1850
          %1875 = vmatprep.subr.mxu0 0.0
          %1876 = vmatpush1.msra.mxu0 %v1851
          %1877 = vmatprep.subr.mxu0 0.0
          %1878 = vmatpush1.msra.mxu0 %v1852
          %1879 = vmatprep.subr.mxu0 0.0
          %1880 = vmatpush1.msra.mxu0 %v1853
          %1881 = vmatprep.subr.mxu0 0.0
          %1882 = vmatpush1.msra.mxu0 %v1854
          %1883 = vmatprep.subr.mxu0 0.0
          %1884 = vmatpush1.msra.mxu0 %v1855
          %1885 = vmatprep.subr.mxu0 0.0
          %1886 = vmatpush1.msra.mxu0 %v1856
          %1887 = vmatprep.subr.mxu0 0.0
          %1888 = vmatpush1.msra.mxu0 %v1857
          %1889 = vmatprep.subr.mxu0 0.0
          %1890 = vmatpush1.msra.mxu0 %v1858
          %1891 = vmatprep.subr.mxu0 0.0
          %1892 = vmatpush1.msra.mxu0 0.0
          %1893 = vmatprep.subr.mxu0 0.0
          %1894 = vmatpush1.msra.mxu0 0.0
          %1895 = vmatprep.subr.mxu0 0.0
          %1896 = vmatpush1.msra.mxu0 0.0
          %1897 = vmatprep.subr.mxu0 0.0
          %1898 = vmatpush1.msra.mxu0 0.0
          %1899 = vmatprep.subr.mxu0 0.0
          %1900 = vmatpush1.msra.mxu0 0.0
          %1901 = vmatprep.subr.mxu0 0.0
          %1902 = vmatpush1.msra.mxu0 0.0
          %1903 = vmatprep.subr.mxu0 0.0
          %1904 = vmatpush1.msra.mxu0 0.0
          %1905 = vmatprep.subr.mxu0 0.0
          %1906 = vmatpush1.msra.mxu0 0.0
          %1907 = vmatprep.subr.mxu0 0.0
          %1908 = vmatpush1.msra.mxu0 0.0
          %1909 = vmatprep.subr.mxu0 0.0
          %1910 = vmatpush1.msra.mxu0 0.0
          %1911 = vmatprep.subr.mxu0 0.0
          %1912 = vmatpush1.msra.mxu0 0.0
          %1913 = vmatprep.subr.mxu0 0.0
          %1914 = vmatpush1.msra.mxu0 0.0
          %1915 = vmatprep.subr.mxu0 0.0
          %1916 = vmatpush1.msra.mxu0 0.0
          %1917 = vmatprep.subr.mxu0 0.0
          %1918 = vmatpush1.msra.mxu0 0.0
          %1919 = vmatprep.subr.mxu0 0.0
          %1920 = vmatpush1.msra.mxu0 0.0
          %1921 = vmatprep.subr.mxu0 0.0
          %1922 = vmatpush1.msra.mxu0 0.0
          %1923 = vmatprep.mubr.f32.mxu0 0.0
          %1924 = vmatmul.mubr.f32.gmra.mrb[0].mxu0 %v267
          %v1925 = vpop.f32.mrb[0].mxu0
          %v1926 = vadd.f32 0.0, %v1925
          %v1927 = vpop.f32.mrb[0].mxu0
          %1928 = vmatprep.mubr.f32.mxu0 0.0
          %1929 = vmatmul.mubr.f32.gmra.mrb[0].mxu0 %v268
          %v1930 = vpop.f32.mrb[0].mxu0
          %v1931 = vadd.f32 0.0, %v1930
          %v1932 = vpop.f32.mrb[0].mxu0
          %1933 = vmatprep.mubr.f32.mxu0 0.0
          %1934 = vmatmul.mubr.f32.gmra.mrb[0].mxu0 %v269
          %v1935 = vpop.f32.mrb[0].mxu0
          %v1936 = vadd.f32 0.0, %v1935
          %v1937 = vpop.f32.mrb[0].mxu0
          %1938 = vmatprep.mubr.f32.mxu0 0.0
          %1939 = vmatmul.mubr.f32.gmra.mrb[0].mxu0 %v270
          %v1940 = vpop.f32.mrb[0].mxu0
          %v1941 = vadd.f32 0.0, %v1940
          %v1942 = vpop.f32.mrb[0].mxu0
          %1943 = vmatprep.mubr.f32.mxu0 0.0
          %1944 = vmatmul.mubr.f32.gmra.mrb[0].mxu0 %v271
          %v1945 = vpop.f32.mrb[0].mxu0
          %v1946 = vadd.f32 0.0, %v1945
          %v1947 = vpop.f32.mrb[0].mxu0
          %1948 = vmatprep.mubr.f32.mxu0 0.0
          %1949 = vmatmul.mubr.f32.gmra.mrb[0].mxu0 %v272
          %v1950 = vpop.f32.mrb[0].mxu0
          %v1951 = vadd.f32 0.0, %v1950
          %v1952 = vpop.f32.mrb[0].mxu0
          %1953 = vmatprep.mubr.f32.mxu0 0.0
          %1954 = vmatmul.mubr.f32.gmra.mrb[0].mxu0 %v273
          %v1955 = vpop.f32.mrb[0].mxu0
          %v1956 = vadd.f32 0.0, %v1955
          %v1957 = vpop.f32.mrb[0].mxu0
          %1958 = vmatprep.mubr.f32.mxu0 0.0
          %1959 = vmatmul.mubr.f32.gmra.mrb[0].mxu0 %v274
          %v1960 = vpop.f32.mrb[0].mxu0
          %v1961 = vadd.f32 0.0, %v1960
          %v1962 = vpop.f32.mrb[0].mxu0
          %1963 = vdwg.mxu0
          %vm1964 = vcmp.eq.s32.totalorder %v1821, 0
          %v1965 = vsel %vm1964, 1.0, 0.0
          %v1966 = vlaneseq
          %v1967 = vshrl.u32 %v1966, 7
          %v1968 = vsub.s32 0, %v1967
          %v1969 = vrot.slane %v1965, %v1968
          %v1970 = vmul.f32 %v1969, %v1926
          %v1971 = vadd.f32 %v1970, 0.0
          %vm1972 = vcmp.eq.s32.totalorder %v1821, 1
          %v1973 = vsel %vm1972, 1.0, 0.0
          %v1974 = vlaneseq
          %v1975 = vshrl.u32 %v1974, 7
          %v1976 = vsub.s32 0, %v1975
          %v1977 = vrot.slane %v1973, %v1976
          %v1978 = vmul.f32 %v1977, %v1931
          %v1979 = vadd.f32 %v1971, %v1978
          %vm1980 = vcmp.eq.s32.totalorder %v1821, 2
          %v1981 = vsel %vm1980, 1.0, 0.0
          %v1982 = vlaneseq
          %v1983 = vshrl.u32 %v1982, 7
          %v1984 = vsub.s32 0, %v1983
          %v1985 = vrot.slane %v1981, %v1984
          %v1986 = vmul.f32 %v1985, %v1936
          %v1987 = vadd.f32 %v1979, %v1986
          %vm1988 = vcmp.eq.s32.totalorder %v1821, 3
          %v1989 = vsel %vm1988, 1.0, 0.0
          %v1990 = vlaneseq
          %v1991 = vshrl.u32 %v1990, 7
          %v1992 = vsub.s32 0, %v1991
          %v1993 = vrot.slane %v1989, %v1992
          %v1994 = vmul.f32 %v1993, %v1941
          %v1995 = vadd.f32 %v1987, %v1994
          %vm1996 = vcmp.eq.s32.totalorder %v1821, 4
          %v1997 = vsel %vm1996, 1.0, 0.0
          %v1998 = vlaneseq
          %v1999 = vshrl.u32 %v1998, 7
          %v2000 = vsub.s32 0, %v1999
          %v2001 = vrot.slane %v1997, %v2000
          %v2002 = vmul.f32 %v2001, %v1946
          %v2003 = vadd.f32 %v1995, %v2002
          %vm2004 = vcmp.eq.s32.totalorder %v1821, 5
          %v2005 = vsel %vm2004, 1.0, 0.0
          %v2006 = vlaneseq
          %v2007 = vshrl.u32 %v2006, 7
          %v2008 = vsub.s32 0, %v2007
          %v2009 = vrot.slane %v2005, %v2008
          %v2010 = vmul.f32 %v2009, %v1951
          %v2011 = vadd.f32 %v2003, %v2010
          %vm2012 = vcmp.eq.s32.totalorder %v1821, 6
          %v2013 = vsel %vm2012, 1.0, 0.0
          %v2014 = vlaneseq
          %v2015 = vshrl.u32 %v2014, 7
          %v2016 = vsub.s32 0, %v2015
          %v2017 = vrot.slane %v2013, %v2016
          %v2018 = vmul.f32 %v2017, %v1956
          %v2019 = vadd.f32 %v2011, %v2018
          %vm2020 = vcmp.eq.s32.totalorder %v1821, 7
          %v2021 = vsel %vm2020, 1.0, 0.0
          %v2022 = vlaneseq
          %v2023 = vshrl.u32 %v2022, 7
          %v2024 = vsub.s32 0, %v2023
          %v2025 = vrot.slane %v2021, %v2024
          %v2026 = vmul.f32 %v2025, %v1961
          %v2027 = vadd.f32 %v2019, %v2026
          %v2028 = vlaneseq
          %v2029 = vshrl.u32 %v2028, 7
          %v2030 = vsub.s32 0, %v2029
          %v2031 = vrot.slane %v1822, %v2030
          %v2032 = vmul.f32 %v2031, %v2027
          %v2033 = vadd.f32 %v1817, %v2032
          %v2034 = vlaneseq
          %v2035 = vshrl.u32 %v2034, 7
          %v2036 = vsub.s32 0, %v2035
          %v2037 = vrot.slane %v240, %v2036
          %v2038 = vmul.f32 %v2037, %v2033
          %v2039 = vadd.f32 %v2038, 0.0
          %v2040 = vlaneseq
          %v2041 = vshrl.u32 %v2040, 7
          %v2042 = vsub.s32 1, %v2041
          %v2043 = vrot.slane %v240, %v2042
          %v2044 = vmul.f32 %v2043, %v2033
          %v2046 = vrot.slane %v2044, 2
          %v2048 = vadd.f32 %v2039, %v2046
          %v2049 = vlaneseq
          %v2050 = vshrl.u32 %v2049, 7
          %v2051 = vsub.s32 2, %v2050
          %v2052 = vrot.slane %v240, %v2051
          %v2053 = vmul.f32 %v2052, %v2033
          %v2055 = vrot.slane %v2053, 4
          %v2057 = vadd.f32 %v2048, %v2055
          %v2058 = vlaneseq
          %v2059 = vshrl.u32 %v2058, 7
          %v2060 = vsub.s32 3, %v2059
          %v2061 = vrot.slane %v240, %v2060
          %v2062 = vmul.f32 %v2061, %v2033
          %v2064 = vrot.slane %v2062, 6
          %v2066 = vadd.f32 %v2057, %v2064
          %s2067 = smul.u32 %s259, 2
          %s2068 = scalar_lea.vmem %s236, %s2067 [#allocation8]
          %2069 = vst [vmem:[%s2068] sm:$0x3] %v2066
          %s2070 = smul.f32 %s264, 1.4472692
        $region49: #{tpu_custom_call.1} parent=31 // loop_footer
          %s263 = sadd.s32 1, %s259
        $region50: #{tpu_custom_call.1} parent=31 // loop_footer_branch
          %258 = sbr.rel target = $region46
        $region51: #{tpu_custom_call.1} parent=31 // loop_exit
          _
        %s2071 = sand.u32 %s104, 1
        %s2072 = scalar_lea.sflag [#allocation4], %s2071
        %s2073 = sand.u32 %s104, 1
        %s2074 = smul.addr %s2073, 32
        %s2075 = scalar_lea.vmem [#allocation8], %s2074
        // Predicated region
        $region52: #{tpu_custom_call.1} parent=31 // pred_check
          %p2076 = pneg %p114
        $region53: #{tpu_custom_call.1} parent=31 // pred_check_branch
          %2078 = sbr.rel (%p2076) target = $region55
        $region54: #{tpu_custom_call.1} parent=31 // pred_region
          %s2080 = ssub.s32 512, 512
          %2081 = vsyncadd %s2072, %s2080
          %s2082 = smul.addr %s23, 32
          %s2083 = scalar_lea.hbm %s3, %s2082
          %s2084 = sshll.u32 %s2075, 4
          %s2085 = int_to_ptr.vmem [resolvable:$true] %s2084
          %2090 = dma.vmem_to_hbm [thread:$0]  %s2085, 512, %s2083, %s2072, 32, 128, 2
        $region55: #{tpu_custom_call.1} parent=31 // pred_fallthru
          _
      $region32: #{tpu_custom_call.1} parent=5 // pred_fallthru
        _
      %p2091 = scmp.le.s32.totalorder 2, %s18
      // Predicated region
      $region56: #{tpu_custom_call.1} parent=5 // pred_check
        %p2092 = pneg %p2091
      $region57: #{tpu_custom_call.1} parent=5 // pred_check_branch
        %2094 = sbr.rel (%p2092) target = $region59
      $region58: #{tpu_custom_call.1} parent=5 // pred_region
        %s2095 = ssub.s32 %s18, 2
        // Predicated region
        $region60: #{tpu_custom_call.1} parent=58 // pred_check
          %p2096 = pneg %p120
        $region61: #{tpu_custom_call.1} parent=58 // pred_check_branch
          %2098 = sbr.rel (%p2096) target = $region63
        $region62: #{tpu_custom_call.1} parent=58 // pred_region
          %s2099 = sand.u32 %s105, 1
          %s2100 = scalar_lea.sflag [#allocation4], %s2099
          %s2101 = sand.u32 %s105, 1
          %s2102 = smul.addr %s2101, 32
          %s2103 = scalar_lea.vmem [#allocation8], %s2102
          %2104 = dma.done %s2100, 512
        $region63: #{tpu_custom_call.1} parent=58 // pred_fallthru
          _
      $region59: #{tpu_custom_call.1} parent=5 // pred_fallthru
        _
    $region6: #{tpu_custom_call.1} parent=1 // loop_footer
      %s22 = sadd.s32 1, %s18
    $region7: #{tpu_custom_call.1} parent=1 // loop_footer_branch
      %17 = sbr.rel target = $region3
    $region8: #{tpu_custom_call.1} parent=1 // loop_exit
      _
    %2105 = vsyncpa [#allocation3], 1
    %s2106 = scalar_lea.sflag [#allocation3], 1
    %2107 = vsyncpa %s2106, 1
    %2108 = vsyncpa [#allocation6], 1
    %s2109 = scalar_lea.sflag [#allocation6], 1
    %2110 = vsyncpa %s2109, 1
    %2111 = vsyncpa [#allocation4], 1
    %s2112 = scalar_lea.sflag [#allocation4], 1
    %2113 = vsyncpa %s2112, 1

</llo_original>
